<compile_context>
chip_gen: v7x
topology: tpu7x:2x2x1
jax: 0.10.0
libtpu: 0.0.40
codegen_flags: <defaults>
</compile_context>

<pallas_src>
import functools

import jax
import jax.numpy as jnp
from jax.experimental import pallas as pl
from jax.experimental.pallas import tpu as pltpu


def _layer_norm(x, w, b, eps=1e-5):
    mean = jnp.mean(x, axis=-1, keepdims=True)
    var = jnp.mean((x - mean) ** 2, axis=-1, keepdims=True)
    return (x - mean) * jax.lax.rsqrt(var + eps) * w + b


def _transformer_block_kernel(x_ref,
                              ln1w_ref, ln1b_ref, wqkv_ref, wo_ref, bo_ref,
                              ln2w_ref, ln2b_ref, w1_ref, b1_ref, w2_ref, b2_ref,
                              o_ref, *, bb, seq_len, heads, dim_head):
    """One transformer block for a block of `bb` batch elements (tokens flattened)."""
    x = x_ref[...]                                   # (T, D) f32, T = bb * seq_len
    T = bb * seq_len
    inner = heads * dim_head
    bf16 = jnp.bfloat16

    # ---- PreNorm + multi-head attention ----------------------------------
    xn = _layer_norm(x, ln1w_ref[0], ln1b_ref[0])                      # f32
    # Fused QKV projection: one (T, D) @ (D, 3*inner) MXU matmul, f32 accumulate.
    # 1/sqrt(dim_head) is pre-folded into the Q columns of Wqkv on the host.
    qkv = jnp.dot(xn.astype(bf16), wqkv_ref[...],
                  preferred_element_type=jnp.float32).astype(bf16)     # (T, 3*inner)

    # Relayout to head-major batch (G = heads*bb, N, dh) using static lane
    # slices + leading-axis concat (avoids any in-kernel 4-D transpose).
    def split_heads(base):
        pieces = [
            qkv[:, base + h * dim_head: base + (h + 1) * dim_head]
               .reshape(bb, seq_len, dim_head)
            for h in range(heads)
        ]
        return jnp.concatenate(pieces, axis=0) if len(pieces) > 1 else pieces[0]

    q = split_heads(0)                               # (G, N, dh) bf16, g = h*bb + b
    k = split_heads(inner)
    v = split_heads(2 * inner)

    # Batched scores / softmax / attention @ V over the (heads*bb) batch dim.
    dots = jnp.einsum('gnd,gmd->gnm', q, k,
                      preferred_element_type=jnp.float32)              # (G, N, N) f32
    dots = dots - jnp.max(dots, axis=-1, keepdims=True)
    e = jnp.exp(dots)
    attn = e * pl.reciprocal(jnp.sum(e, axis=-1, keepdims=True), approx=True)
    out = jnp.einsum('gnm,gmd->gnd', attn.astype(bf16), v,
                     preferred_element_type=jnp.float32)               # (G, N, dh)

    # Merge heads back to (T, inner) and project with a single K=inner matmul
    # (mathematically identical to rearrange('b h n d -> b n (h d)') @ Wo).
    out_bf = out.astype(bf16)
    cols = [out_bf[h * bb:(h + 1) * bb].reshape(T, dim_head) for h in range(heads)]
    merged = jnp.concatenate(cols, axis=-1) if len(cols) > 1 else cols[0]
    attn_out = jnp.dot(merged, wo_ref[...], preferred_element_type=jnp.float32)

    x1 = x + attn_out + bo_ref[0]                                      # residual

    # ---- PreNorm + FeedForward (exact erf GELU == nn.GELU default) --------
    xn2 = _layer_norm(x1, ln2w_ref[0], ln2b_ref[0]).astype(bf16)
    h1 = jnp.dot(xn2, w1_ref[...], preferred_element_type=jnp.float32) + b1_ref[0]
    g = 0.5 * h1 * (1.0 + jax.lax.erf(h1 * (2.0 ** -0.5)))
    y = jnp.dot(g.astype(bf16), w2_ref[...],
                preferred_element_type=jnp.float32) + b2_ref[0]

    o_ref[...] = (x1 + y).astype(o_ref.dtype)                          # residual


_PARAM_ORDER = ("ln1_w", "ln1_b", "wqkv", "wo", "bo",
                "ln2_w", "ln2_b", "w1", "b1", "w2", "b2")

# Single-buffer grid-invariant weights; flipped off automatically if the
# running JAX does not accept pipeline_mode=pl.Buffered(1) on a BlockSpec.
_SINGLE_BUFFER_WEIGHTS = True


def _vmem_limit_bytes():
    """Generation-aware VMEM budget: ~75% of physical per-core VMEM, <= 100 MiB.

    v7x (64 MiB physical) -> ~48 MiB; v5e/v6e (128 MiB) -> ~96-100 MiB."""
    cap = 128 * 1024 * 1024
    try:
        cap = int(pltpu.get_tpu_info().vmem_capacity_bytes)
    except Exception:
        pass
    return int(min(cap * 3 // 4, 100 * 1024 * 1024))


def prepare_layer_params(p, *, heads, dim_head):
    """Convert PyTorch-layout f32 params into kernel layout/dtypes (host side, once)."""
    inner = heads * dim_head
    scale = dim_head ** (-0.5)
    wqkv = p["wqkv"].astype(jnp.float32)
    wqkv = wqkv.at[:, :inner].multiply(scale)        # fold softmax scale into Wq cols
    bf = jnp.bfloat16
    return dict(
        ln1_w=p["ln1_w"], ln1_b=p["ln1_b"],
        wqkv=wqkv.astype(bf),
        wo=p["wo"].astype(bf), bo=p["bo"],
        ln2_w=p["ln2_w"], ln2_b=p["ln2_b"],
        w1=p["w1"].astype(bf), b1=p["b1"],
        w2=p["w2"].astype(bf), b2=p["b2"],
    )


def prepare_params(params, *, heads, dim_head):
    """Hoisted once per model (NOT per forward call)."""
    return [prepare_layer_params(p, heads=heads, dim_head=dim_head) for p in params]


def _pick_batch_block(B, N, max_rows=512):
    """Pick bb | B so that the token block T = bb*N is (a) a legal BlockSpec size
    (multiple of 8 or the full array), (b) <= max_rows, and (c) if possible leaves
    >= 2 grid steps so the 'parallel' axis can shard across v7x's two TensorCores."""
    candidates = [c for c in range(1, B + 1) if B % c == 0]

    def ok(c, need_multi):
        rows = c * N
        if rows % 8 != 0 and rows != B * N:
            return False
        if need_multi and B // c < 2:
            return False
        return rows <= max(max_rows, N)

    for need_multi in (True, False):
        good = [c for c in candidates if ok(c, need_multi)]
        if good:
            return max(good)
    return B  # full array is always a legal single block


def transformer_block(x_flat, kparams, *, bb, seq_len, heads, dim_head,
                      single_buffer_weights=True):
    TB, D = x_flat.shape                 # TB = B * N tokens
    T = bb * seq_len                     # tokens per grid step
    grid = (TB // T,)
    weights = [kparams[k] for k in _PARAM_ORDER]

    in_specs = [pl.BlockSpec((T, D), lambda i: (i, 0))]
    for w in weights:
        kwargs = {}
        if single_buffer_weights:
            # Grid-invariant weights: one VMEM buffer suffices (never re-fetched),
            # halving resident weight VMEM vs. the default double-buffering.
            kwargs["pipeline_mode"] = pl.Buffered(1)
        in_specs.append(pl.BlockSpec(w.shape, lambda i, nd=w.ndim: (0,) * nd, **kwargs))

    kernel = functools.partial(_transformer_block_kernel, bb=bb, seq_len=seq_len,
                               heads=heads, dim_head=dim_head)
    return pl.pallas_call(
        kernel,
        out_shape=jax.ShapeDtypeStruct((TB, D), x_flat.dtype),
        grid_spec=pltpu.PrefetchScalarGridSpec(
            num_scalar_prefetch=0,
            grid=grid,
            in_specs=in_specs,
            out_specs=pl.BlockSpec((T, D), lambda i: (i, 0)),
        ),
        compiler_params=pltpu.CompilerParams(
            dimension_semantics=("parallel",),
            vmem_limit_bytes=_vmem_limit_bytes(),
        ),
    )(x_flat, *weights)


def transformer_forward(x, kernel_params, *, heads, dim_head, max_rows=512):
    """x: (B, N, D) f32; kernel_params: output of prepare_params (precomputed once)."""
    global _SINGLE_BUFFER_WEIGHTS
    B, N, D = x.shape
    bb = _pick_batch_block(B, N, max_rows=max_rows)
    x_flat = x.reshape(B * N, D)         # flatten tokens outside the kernel (free)
    for kp in kernel_params:
        try:
            x_flat = transformer_block(x_flat, kp, bb=bb, seq_len=N, heads=heads,
                                       dim_head=dim_head,
                                       single_buffer_weights=_SINGLE_BUFFER_WEIGHTS)
        except Exception:
            if not _SINGLE_BUFFER_WEIGHTS:
                raise
            # pl.Buffered(1) not supported on this JAX/backend: fall back to the
            # default (double-buffered) weight specs.
            _SINGLE_BUFFER_WEIGHTS = False
            x_flat = transformer_block(x_flat, kp, bb=bb, seq_len=N, heads=heads,
                                       dim_head=dim_head, single_buffer_weights=False)
    return x_flat.reshape(B, N, D)


def init_params(key, depth, dim, heads, dim_head, mlp_dim):
    inner = heads * dim_head
    params = []
    for i in range(depth):
        ks = jax.random.split(jax.random.fold_in(key, i), 11)
        p = dict(
            ln1_w=jnp.ones((1, dim), jnp.float32) + 0.01 * jax.random.normal(ks[0], (1, dim), jnp.float32),
            ln1_b=0.01 * jax.random.normal(ks[1], (1, dim), jnp.float32),
            wqkv=0.05 * jax.random.normal(ks[2], (dim, 3 * inner), jnp.float32),
            wo=0.05 * jax.random.normal(ks[3], (inner, dim), jnp.float32),
            bo=0.01 * jax.random.normal(ks[4], (1, dim), jnp.float32),
            ln2_w=jnp.ones((1, dim), jnp.float32) + 0.01 * jax.random.normal(ks[5], (1, dim), jnp.float32),
            ln2_b=0.01 * jax.random.normal(ks[6], (1, dim), jnp.float32),
            w1=0.05 * jax.random.normal(ks[7], (dim, mlp_dim), jnp.float32),
            b1=0.01 * jax.random.normal(ks[8], (1, mlp_dim), jnp.float32),
            w2=0.05 * jax.random.normal(ks[9], (mlp_dim, dim), jnp.float32),
            b2=0.01 * jax.random.normal(ks[10], (1, dim), jnp.float32),
        )
        params.append(p)
    return params


def reference_forward(x, params, *, heads, dim_head):
    """Pure-JAX f32 reference mirroring the PyTorch forward (mask=None, dropout=0)."""
    scale = dim_head ** (-0.5)
    inner = heads * dim_head
    B, N, D = x.shape

    def ln(t, w, b):
        m = t.mean(-1, keepdims=True)
        v = ((t - m) ** 2).mean(-1, keepdims=True)
        return (t - m) / jnp.sqrt(v + 1e-5) * w + b

    for p in params:
        xn = ln(x, p["ln1_w"][0], p["ln1_b"][0])
        qkv = xn @ p["wqkv"]
        q, k, v = jnp.split(qkv, 3, axis=-1)
        q = q.reshape(B, N, heads, dim_head).transpose(0, 2, 1, 3)
        k = k.reshape(B, N, heads, dim_head).transpose(0, 2, 1, 3)
        v = v.reshape(B, N, heads, dim_head).transpose(0, 2, 1, 3)
        dots = jnp.einsum("bhnd,bhmd->bhnm", q, k) * scale
        attn = jax.nn.softmax(dots, axis=-1)
        out = jnp.einsum("bhnm,bhmd->bhnd", attn, v).transpose(0, 2, 1, 3).reshape(B, N, inner)
        x = x + out @ p["wo"] + p["bo"][0]

        xn2 = ln(x, p["ln2_w"][0], p["ln2_b"][0])
        h1 = xn2 @ p["w1"] + p["b1"][0]
        g = 0.5 * h1 * (1.0 + jax.lax.erf(h1 * (2.0 ** -0.5)))
        x = x + g @ p["w2"] + p["b2"][0]
    return x


if __name__ == "__main__":
    # Small shapes consistent with the module: dim=32, depth=2, heads=4,
    # dim_head=8 (inner_dim=32), mlp_dim=64, batch=2, seq=8.
    B, N = 2, 8
    dim, depth, heads, dim_head, mlp_dim = 32, 2, 4, 8, 64

    key = jax.random.PRNGKey(0)
    kx, kp = jax.random.split(key)
    x = jax.random.normal(kx, (B, N, dim), jnp.float32)
    params = init_params(kp, depth, dim, heads, dim_head, mlp_dim)

    # Weight prep (bf16 casts + scale folding) hoisted out of the forward pass.
    kernel_params = prepare_params(params, heads=heads, dim_head=dim_head)

    out = transformer_forward(x, kernel_params, heads=heads, dim_head=dim_head)
    out = jax.block_until_ready(out)

    ref = jax.block_until_ready(reference_forward(x, params, heads=heads, dim_head=dim_head))
    assert out.shape == (B, N, dim)
    # Tolerance sized for bf16 MXU matmuls (f32 accumulation) + approx reciprocal
    # in the softmax denominator vs. the exact f32 reference.
    err = float(jnp.max(jnp.abs(out - ref)))
    assert err < 2e-2, f"max abs error {err}"
    print("KERNEL_OK")
</pallas_src>

<mosaic_0001>
module attributes {stable_mosaic.version = 11 : i64} {
  func.func @_transformer_block_kernel(%arg0: i32, %arg1: memref<8x32xf32, #tpu.memory_space<vmem>>, %arg2: memref<1x32xf32, #tpu.memory_space<vmem>>, %arg3: memref<1x32xf32, #tpu.memory_space<vmem>>, %arg4: memref<32x96xbf16, #tpu.memory_space<vmem>>, %arg5: memref<32x32xbf16, #tpu.memory_space<vmem>>, %arg6: memref<1x32xf32, #tpu.memory_space<vmem>>, %arg7: memref<1x32xf32, #tpu.memory_space<vmem>>, %arg8: memref<1x32xf32, #tpu.memory_space<vmem>>, %arg9: memref<32x64xbf16, #tpu.memory_space<vmem>>, %arg10: memref<1x64xf32, #tpu.memory_space<vmem>>, %arg11: memref<64x32xbf16, #tpu.memory_space<vmem>>, %arg12: memref<1x32xf32, #tpu.memory_space<vmem>>, %arg13: memref<8x32xf32, #tpu.memory_space<vmem>>) attributes {dimension_semantics = [#tpu.dimension_semantics<parallel>], iteration_bounds = array<i64: 2>, scalar_prefetch = 0 : i64, scratch_operands = 0 : i64, tpu.core_type = #tpu.core_type<tc>, window_params = [{transform_indices = @transform_0, window_bounds = array<i64: 8, 32>}, {pipeline_mode = #tpu.pipeline_mode<synchronous>, transform_indices = @transform_1, window_bounds = array<i64: 1, 32>}, {pipeline_mode = #tpu.pipeline_mode<synchronous>, transform_indices = @transform_2, window_bounds = array<i64: 1, 32>}, {pipeline_mode = #tpu.pipeline_mode<synchronous>, transform_indices = @transform_3, window_bounds = array<i64: 32, 96>}, {pipeline_mode = #tpu.pipeline_mode<synchronous>, transform_indices = @transform_4, window_bounds = array<i64: 32, 32>}, {pipeline_mode = #tpu.pipeline_mode<synchronous>, transform_indices = @transform_5, window_bounds = array<i64: 1, 32>}, {pipeline_mode = #tpu.pipeline_mode<synchronous>, transform_indices = @transform_6, window_bounds = array<i64: 1, 32>}, {pipeline_mode = #tpu.pipeline_mode<synchronous>, transform_indices = @transform_7, window_bounds = array<i64: 1, 32>}, {pipeline_mode = #tpu.pipeline_mode<synchronous>, transform_indices = @transform_8, window_bounds = array<i64: 32, 64>}, {pipeline_mode = #tpu.pipeline_mode<synchronous>, transform_indices = @transform_9, window_bounds = array<i64: 1, 64>}, {pipeline_mode = #tpu.pipeline_mode<synchronous>, transform_indices = @transform_10, window_bounds = array<i64: 64, 32>}, {pipeline_mode = #tpu.pipeline_mode<synchronous>, transform_indices = @transform_11, window_bounds = array<i64: 1, 32>}, {transform_indices = @transform_12, window_bounds = array<i64: 8, 32>}]} {
    %c0 = arith.constant 0 : index
    %c0_0 = arith.constant 0 : index
    %0 = vector.load %arg1[%c0, %c0_0] : memref<8x32xf32, #tpu.memory_space<vmem>>, vector<8x32xf32>
    %c0_1 = arith.constant 0 : index
    %c0_2 = arith.constant 0 : index
    %1 = vector.load %arg2[%c0_1, %c0_2] : memref<1x32xf32, #tpu.memory_space<vmem>>, vector<1x32xf32>
    %2 = vector.shape_cast %1 : vector<1x32xf32> to vector<32xf32>
    %c0_3 = arith.constant 0 : index
    %c0_4 = arith.constant 0 : index
    %3 = vector.load %arg3[%c0_3, %c0_4] : memref<1x32xf32, #tpu.memory_space<vmem>>, vector<1x32xf32>
    %4 = vector.shape_cast %3 : vector<1x32xf32> to vector<32xf32>
    %cst = arith.constant dense<0.000000e+00> : vector<8xf32>
    %5 = vector.multi_reduction <add>, %0, %cst [1] : vector<8x32xf32> to vector<8xf32>
    %6 = vector.shape_cast %5 : vector<8xf32> to vector<8x1xf32>
    %cst_5 = arith.constant 3.200000e+01 : f32
    %7 = vector.broadcast %cst_5 : f32 to vector<8x1xf32>
    %8 = arith.divf %6, %7 : vector<8x1xf32>
    %9 = vector.broadcast %8 : vector<8x1xf32> to vector<8x32xf32>
    %10 = arith.subf %0, %9 : vector<8x32xf32>
    %11 = arith.mulf %10, %10 : vector<8x32xf32>
    %cst_6 = arith.constant dense<0.000000e+00> : vector<8xf32>
    %12 = vector.multi_reduction <add>, %11, %cst_6 [1] : vector<8x32xf32> to vector<8xf32>
    %13 = vector.shape_cast %12 : vector<8xf32> to vector<8x1xf32>
    %cst_7 = arith.constant 3.200000e+01 : f32
    %14 = vector.broadcast %cst_7 : f32 to vector<8x1xf32>
    %15 = arith.divf %13, %14 : vector<8x1xf32>
    %16 = vector.broadcast %8 : vector<8x1xf32> to vector<8x32xf32>
    %17 = arith.subf %0, %16 : vector<8x32xf32>
    %cst_8 = arith.constant 9.99999974E-6 : f32
    %18 = vector.broadcast %cst_8 : f32 to vector<8x1xf32>
    %19 = arith.addf %15, %18 : vector<8x1xf32>
    %20 = math.rsqrt %19 : vector<8x1xf32>
    %21 = vector.broadcast %20 : vector<8x1xf32> to vector<8x32xf32>
    %22 = arith.mulf %17, %21 : vector<8x32xf32>
    %23 = vector.shape_cast %2 : vector<32xf32> to vector<1x32xf32>
    %24 = vector.broadcast %23 : vector<1x32xf32> to vector<8x32xf32>
    %25 = arith.mulf %22, %24 : vector<8x32xf32>
    %26 = vector.shape_cast %4 : vector<32xf32> to vector<1x32xf32>
    %27 = vector.broadcast %26 : vector<1x32xf32> to vector<8x32xf32>
    %28 = arith.addf %25, %27 : vector<8x32xf32>
    %29 = arith.truncf %28 : vector<8x32xf32> to vector<8x32xbf16>
    %c0_9 = arith.constant 0 : index
    %c0_10 = arith.constant 0 : index
    %30 = vector.load %arg4[%c0_9, %c0_10] : memref<32x96xbf16, #tpu.memory_space<vmem>>, vector<32x96xbf16>
    %cst_11 = arith.constant dense<0.000000e+00> : vector<8x96xf32>
    %31 = tpu.matmul %29, %30, %cst_11 {dimension_numbers = #tpu.dot_dimension_numbers<[1], [0], [0], [1], [0, 0, 1, 1], [], []>} : vector<8x32xbf16>, vector<32x96xbf16>, vector<8x96xf32> -> vector<8x96xf32>
    %32 = arith.truncf %31 : vector<8x96xf32> to vector<8x96xbf16>
    %33 = vector.extract_strided_slice %32 {offsets = [0, 0], sizes = [8, 8], strides = [1, 1]} : vector<8x96xbf16> to vector<8x8xbf16>
    %34 = vector.shape_cast %33 : vector<8x8xbf16> to vector<1x8x8xbf16>
    %35 = vector.extract_strided_slice %32 {offsets = [0, 8], sizes = [8, 8], strides = [1, 1]} : vector<8x96xbf16> to vector<8x8xbf16>
    %36 = vector.shape_cast %35 : vector<8x8xbf16> to vector<1x8x8xbf16>
    %37 = vector.extract_strided_slice %32 {offsets = [0, 16], sizes = [8, 8], strides = [1, 1]} : vector<8x96xbf16> to vector<8x8xbf16>
    %38 = vector.shape_cast %37 : vector<8x8xbf16> to vector<1x8x8xbf16>
    %39 = vector.extract_strided_slice %32 {offsets = [0, 24], sizes = [8, 8], strides = [1, 1]} : vector<8x96xbf16> to vector<8x8xbf16>
    %40 = vector.shape_cast %39 : vector<8x8xbf16> to vector<1x8x8xbf16>
    %41 = tpu.concatenate %34, %36, %38, %40 in 0 : vector<1x8x8xbf16>, vector<1x8x8xbf16>, vector<1x8x8xbf16>, vector<1x8x8xbf16> -> vector<4x8x8xbf16>
    %42 = vector.extract_strided_slice %32 {offsets = [0, 32], sizes = [8, 8], strides = [1, 1]} : vector<8x96xbf16> to vector<8x8xbf16>
    %43 = vector.shape_cast %42 : vector<8x8xbf16> to vector<1x8x8xbf16>
    %44 = vector.extract_strided_slice %32 {offsets = [0, 40], sizes = [8, 8], strides = [1, 1]} : vector<8x96xbf16> to vector<8x8xbf16>
    %45 = vector.shape_cast %44 : vector<8x8xbf16> to vector<1x8x8xbf16>
    %46 = vector.extract_strided_slice %32 {offsets = [0, 48], sizes = [8, 8], strides = [1, 1]} : vector<8x96xbf16> to vector<8x8xbf16>
    %47 = vector.shape_cast %46 : vector<8x8xbf16> to vector<1x8x8xbf16>
    %48 = vector.extract_strided_slice %32 {offsets = [0, 56], sizes = [8, 8], strides = [1, 1]} : vector<8x96xbf16> to vector<8x8xbf16>
    %49 = vector.shape_cast %48 : vector<8x8xbf16> to vector<1x8x8xbf16>
    %50 = tpu.concatenate %43, %45, %47, %49 in 0 : vector<1x8x8xbf16>, vector<1x8x8xbf16>, vector<1x8x8xbf16>, vector<1x8x8xbf16> -> vector<4x8x8xbf16>
    %51 = vector.extract_strided_slice %32 {offsets = [0, 64], sizes = [8, 8], strides = [1, 1]} : vector<8x96xbf16> to vector<8x8xbf16>
    %52 = vector.shape_cast %51 : vector<8x8xbf16> to vector<1x8x8xbf16>
    %53 = vector.extract_strided_slice %32 {offsets = [0, 72], sizes = [8, 8], strides = [1, 1]} : vector<8x96xbf16> to vector<8x8xbf16>
    %54 = vector.shape_cast %53 : vector<8x8xbf16> to vector<1x8x8xbf16>
    %55 = vector.extract_strided_slice %32 {offsets = [0, 80], sizes = [8, 8], strides = [1, 1]} : vector<8x96xbf16> to vector<8x8xbf16>
    %56 = vector.shape_cast %55 : vector<8x8xbf16> to vector<1x8x8xbf16>
    %57 = vector.extract_strided_slice %32 {offsets = [0, 88], sizes = [8, 8], strides = [1, 1]} : vector<8x96xbf16> to vector<8x8xbf16>
    %58 = vector.shape_cast %57 : vector<8x8xbf16> to vector<1x8x8xbf16>
    %59 = tpu.concatenate %52, %54, %56, %58 in 0 : vector<1x8x8xbf16>, vector<1x8x8xbf16>, vector<1x8x8xbf16>, vector<1x8x8xbf16> -> vector<4x8x8xbf16>
    "tpu.trace_start"() <{level = 10 : i32, message = "gnd,gmd->gnm"}> : () -> ()
    %cst_12 = arith.constant dense<0.000000e+00> : vector<4x8x8xf32>
    %60 = tpu.matmul %41, %50, %cst_12 {dimension_numbers = #tpu.dot_dimension_numbers<[2], [2], [1], [1], [0, 0, 0, 1, 1, 1], [0], [0]>} : vector<4x8x8xbf16>, vector<4x8x8xbf16>, vector<4x8x8xf32> -> vector<4x8x8xf32>
    "tpu.trace_stop"() : () -> ()
    %cst_13 = arith.constant dense<0xFF800000> : vector<4x8xf32>
    %61 = vector.multi_reduction <maximumf>, %60, %cst_13 [2] : vector<4x8x8xf32> to vector<4x8xf32>
    %62 = vector.shape_cast %61 : vector<4x8xf32> to vector<4x8x1xf32>
    %63 = vector.broadcast %62 : vector<4x8x1xf32> to vector<4x8x8xf32>
    %64 = arith.subf %60, %63 : vector<4x8x8xf32>
    %65 = math.exp %64 : vector<4x8x8xf32>
    %cst_14 = arith.constant dense<0.000000e+00> : vector<4x8xf32>
    %66 = vector.multi_reduction <add>, %65, %cst_14 [2] : vector<4x8x8xf32> to vector<4x8xf32>
    %67 = vector.shape_cast %66 : vector<4x8xf32> to vector<4x8x1xf32>
    %68 = tpu.reciprocal %67 {approx = true} : vector<4x8x1xf32> -> vector<4x8x1xf32>
    %69 = vector.broadcast %68 : vector<4x8x1xf32> to vector<4x8x8xf32>
    %70 = arith.mulf %65, %69 : vector<4x8x8xf32>
    %71 = arith.truncf %70 : vector<4x8x8xf32> to vector<4x8x8xbf16>
    "tpu.trace_start"() <{level = 10 : i32, message = "gnm,gmd->gnd"}> : () -> ()
    %cst_15 = arith.constant dense<0.000000e+00> : vector<4x8x8xf32>
    %72 = tpu.matmul %71, %59, %cst_15 {dimension_numbers = #tpu.dot_dimension_numbers<[2], [1], [1], [2], [0, 0, 0, 1, 1, 2], [0], [0]>} : vector<4x8x8xbf16>, vector<4x8x8xbf16>, vector<4x8x8xf32> -> vector<4x8x8xf32>
    "tpu.trace_stop"() : () -> ()
    %73 = arith.truncf %72 : vector<4x8x8xf32> to vector<4x8x8xbf16>
    %74 = vector.extract_strided_slice %73 {offsets = [0, 0, 0], sizes = [1, 8, 8], strides = [1, 1, 1]} : vector<4x8x8xbf16> to vector<1x8x8xbf16>
    %75 = vector.shape_cast %74 : vector<1x8x8xbf16> to vector<8x8xbf16>
    %76 = vector.extract_strided_slice %73 {offsets = [1, 0, 0], sizes = [1, 8, 8], strides = [1, 1, 1]} : vector<4x8x8xbf16> to vector<1x8x8xbf16>
    %77 = vector.shape_cast %76 : vector<1x8x8xbf16> to vector<8x8xbf16>
    %78 = vector.extract_strided_slice %73 {offsets = [2, 0, 0], sizes = [1, 8, 8], strides = [1, 1, 1]} : vector<4x8x8xbf16> to vector<1x8x8xbf16>
    %79 = vector.shape_cast %78 : vector<1x8x8xbf16> to vector<8x8xbf16>
    %80 = vector.extract_strided_slice %73 {offsets = [3, 0, 0], sizes = [1, 8, 8], strides = [1, 1, 1]} : vector<4x8x8xbf16> to vector<1x8x8xbf16>
    %81 = vector.shape_cast %80 : vector<1x8x8xbf16> to vector<8x8xbf16>
    %82 = tpu.concatenate %75, %77, %79, %81 in 1 : vector<8x8xbf16>, vector<8x8xbf16>, vector<8x8xbf16>, vector<8x8xbf16> -> vector<8x32xbf16>
    %c0_16 = arith.constant 0 : index
    %c0_17 = arith.constant 0 : index
    %83 = vector.load %arg5[%c0_16, %c0_17] : memref<32x32xbf16, #tpu.memory_space<vmem>>, vector<32x32xbf16>
    %cst_18 = arith.constant dense<0.000000e+00> : vector<8x32xf32>
    %84 = tpu.matmul %82, %83, %cst_18 {dimension_numbers = #tpu.dot_dimension_numbers<[1], [0], [0], [1], [0, 0, 1, 1], [], []>} : vector<8x32xbf16>, vector<32x32xbf16>, vector<8x32xf32> -> vector<8x32xf32>
    %85 = arith.addf %0, %84 : vector<8x32xf32>
    %c0_19 = arith.constant 0 : index
    %c0_20 = arith.constant 0 : index
    %86 = vector.load %arg6[%c0_19, %c0_20] : memref<1x32xf32, #tpu.memory_space<vmem>>, vector<1x32xf32>
    %87 = vector.shape_cast %86 : vector<1x32xf32> to vector<32xf32>
    %88 = vector.shape_cast %87 : vector<32xf32> to vector<1x32xf32>
    %89 = vector.broadcast %88 : vector<1x32xf32> to vector<8x32xf32>
    %90 = arith.addf %85, %89 : vector<8x32xf32>
    %c0_21 = arith.constant 0 : index
    %c0_22 = arith.constant 0 : index
    %91 = vector.load %arg7[%c0_21, %c0_22] : memref<1x32xf32, #tpu.memory_space<vmem>>, vector<1x32xf32>
    %92 = vector.shape_cast %91 : vector<1x32xf32> to vector<32xf32>
    %c0_23 = arith.constant 0 : index
    %c0_24 = arith.constant 0 : index
    %93 = vector.load %arg8[%c0_23, %c0_24] : memref<1x32xf32, #tpu.memory_space<vmem>>, vector<1x32xf32>
    %94 = vector.shape_cast %93 : vector<1x32xf32> to vector<32xf32>
    %cst_25 = arith.constant dense<0.000000e+00> : vector<8xf32>
    %95 = vector.multi_reduction <add>, %90, %cst_25 [1] : vector<8x32xf32> to vector<8xf32>
    %96 = vector.shape_cast %95 : vector<8xf32> to vector<8x1xf32>
    %cst_26 = arith.constant 3.200000e+01 : f32
    %97 = vector.broadcast %cst_26 : f32 to vector<8x1xf32>
    %98 = arith.divf %96, %97 : vector<8x1xf32>
    %99 = vector.broadcast %98 : vector<8x1xf32> to vector<8x32xf32>
    %100 = arith.subf %90, %99 : vector<8x32xf32>
    %101 = arith.mulf %100, %100 : vector<8x32xf32>
    %cst_27 = arith.constant dense<0.000000e+00> : vector<8xf32>
    %102 = vector.multi_reduction <add>, %101, %cst_27 [1] : vector<8x32xf32> to vector<8xf32>
    %103 = vector.shape_cast %102 : vector<8xf32> to vector<8x1xf32>
    %cst_28 = arith.constant 3.200000e+01 : f32
    %104 = vector.broadcast %cst_28 : f32 to vector<8x1xf32>
    %105 = arith.divf %103, %104 : vector<8x1xf32>
    %106 = vector.broadcast %98 : vector<8x1xf32> to vector<8x32xf32>
    %107 = arith.subf %90, %106 : vector<8x32xf32>
    %cst_29 = arith.constant 9.99999974E-6 : f32
    %108 = vector.broadcast %cst_29 : f32 to vector<8x1xf32>
    %109 = arith.addf %105, %108 : vector<8x1xf32>
    %110 = math.rsqrt %109 : vector<8x1xf32>
    %111 = vector.broadcast %110 : vector<8x1xf32> to vector<8x32xf32>
    %112 = arith.mulf %107, %111 : vector<8x32xf32>
    %113 = vector.shape_cast %92 : vector<32xf32> to vector<1x32xf32>
    %114 = vector.broadcast %113 : vector<1x32xf32> to vector<8x32xf32>
    %115 = arith.mulf %112, %114 : vector<8x32xf32>
    %116 = vector.shape_cast %94 : vector<32xf32> to vector<1x32xf32>
    %117 = vector.broadcast %116 : vector<1x32xf32> to vector<8x32xf32>
    %118 = arith.addf %115, %117 : vector<8x32xf32>
    %119 = arith.truncf %118 : vector<8x32xf32> to vector<8x32xbf16>
    %c0_30 = arith.constant 0 : index
    %c0_31 = arith.constant 0 : index
    %120 = vector.load %arg9[%c0_30, %c0_31] : memref<32x64xbf16, #tpu.memory_space<vmem>>, vector<32x64xbf16>
    %cst_32 = arith.constant dense<0.000000e+00> : vector<8x64xf32>
    %121 = tpu.matmul %119, %120, %cst_32 {dimension_numbers = #tpu.dot_dimension_numbers<[1], [0], [0], [1], [0, 0, 1, 1], [], []>} : vector<8x32xbf16>, vector<32x64xbf16>, vector<8x64xf32> -> vector<8x64xf32>
    %c0_33 = arith.constant 0 : index
    %c0_34 = arith.constant 0 : index
    %122 = vector.load %arg10[%c0_33, %c0_34] : memref<1x64xf32, #tpu.memory_space<vmem>>, vector<1x64xf32>
    %123 = vector.shape_cast %122 : vector<1x64xf32> to vector<64xf32>
    %124 = vector.shape_cast %123 : vector<64xf32> to vector<1x64xf32>
    %125 = vector.broadcast %124 : vector<1x64xf32> to vector<8x64xf32>
    %126 = arith.addf %121, %125 : vector<8x64xf32>
    %cst_35 = arith.constant 5.000000e-01 : f32
    %127 = vector.broadcast %cst_35 : f32 to vector<8x64xf32>
    %128 = arith.mulf %127, %126 : vector<8x64xf32>
    %cst_36 = arith.constant 0.707106769 : f32
    %129 = vector.broadcast %cst_36 : f32 to vector<8x64xf32>
    %130 = arith.mulf %126, %129 : vector<8x64xf32>
    %131 = math.erf %130 : vector<8x64xf32>
    %cst_37 = arith.constant 1.000000e+00 : f32
    %132 = vector.broadcast %cst_37 : f32 to vector<8x64xf32>
    %133 = arith.addf %132, %131 : vector<8x64xf32>
    %134 = arith.mulf %128, %133 : vector<8x64xf32>
    %135 = arith.truncf %134 : vector<8x64xf32> to vector<8x64xbf16>
    %c0_38 = arith.constant 0 : index
    %c0_39 = arith.constant 0 : index
    %136 = vector.load %arg11[%c0_38, %c0_39] : memref<64x32xbf16, #tpu.memory_space<vmem>>, vector<64x32xbf16>
    %cst_40 = arith.constant dense<0.000000e+00> : vector<8x32xf32>
    %137 = tpu.matmul %135, %136, %cst_40 {dimension_numbers = #tpu.dot_dimension_numbers<[1], [0], [0], [1], [0, 0, 1, 1], [], []>} : vector<8x64xbf16>, vector<64x32xbf16>, vector<8x32xf32> -> vector<8x32xf32>
    %c0_41 = arith.constant 0 : index
    %c0_42 = arith.constant 0 : index
    %138 = vector.load %arg12[%c0_41, %c0_42] : memref<1x32xf32, #tpu.memory_space<vmem>>, vector<1x32xf32>
    %139 = vector.shape_cast %138 : vector<1x32xf32> to vector<32xf32>
    %140 = vector.shape_cast %139 : vector<32xf32> to vector<1x32xf32>
    %141 = vector.broadcast %140 : vector<1x32xf32> to vector<8x32xf32>
    %142 = arith.addf %137, %141 : vector<8x32xf32>
    %143 = arith.addf %90, %142 : vector<8x32xf32>
    %c0_43 = arith.constant 0 : index
    %c0_44 = arith.constant 0 : index
    %144 = vector.load %arg13[%c0_43, %c0_44] : memref<8x32xf32, #tpu.memory_space<vmem>>, vector<8x32xf32>
    tpu.vector_store %arg13[%c0_43, %c0_44], %143 {strides = array<i32>} : memref<8x32xf32, #tpu.memory_space<vmem>>, vector<8x32xf32>,
    return
  }
  func.func @transform_0(%arg0: i32) -> (i32, i32) {
    %c0_i32 = arith.constant 0 : i32
    %c0_i32_0 = arith.constant 0 : i32
    return %arg0, %c0_i32 : i32, i32
  }
  func.func @transform_1(%arg0: i32) -> (i32, i32) {
    %c0_i32 = arith.constant 0 : i32
    %c0_i32_0 = arith.constant 0 : i32
    %c0_i32_1 = arith.constant 0 : i32
    return %c0_i32, %c0_i32_0 : i32, i32
  }
  func.func @transform_2(%arg0: i32) -> (i32, i32) {
    %c0_i32 = arith.constant 0 : i32
    %c0_i32_0 = arith.constant 0 : i32
    %c0_i32_1 = arith.constant 0 : i32
    return %c0_i32, %c0_i32_0 : i32, i32
  }
  func.func @transform_3(%arg0: i32) -> (i32, i32) {
    %c0_i32 = arith.constant 0 : i32
    %c0_i32_0 = arith.constant 0 : i32
    %c0_i32_1 = arith.constant 0 : i32
    return %c0_i32, %c0_i32_0 : i32, i32
  }
  func.func @transform_4(%arg0: i32) -> (i32, i32) {
    %c0_i32 = arith.constant 0 : i32
    %c0_i32_0 = arith.constant 0 : i32
    %c0_i32_1 = arith.constant 0 : i32
    return %c0_i32, %c0_i32_0 : i32, i32
  }
  func.func @transform_5(%arg0: i32) -> (i32, i32) {
    %c0_i32 = arith.constant 0 : i32
    %c0_i32_0 = arith.constant 0 : i32
    %c0_i32_1 = arith.constant 0 : i32
    return %c0_i32, %c0_i32_0 : i32, i32
  }
  func.func @transform_6(%arg0: i32) -> (i32, i32) {
    %c0_i32 = arith.constant 0 : i32
    %c0_i32_0 = arith.constant 0 : i32
    %c0_i32_1 = arith.constant 0 : i32
    return %c0_i32, %c0_i32_0 : i32, i32
  }
  func.func @transform_7(%arg0: i32) -> (i32, i32) {
    %c0_i32 = arith.constant 0 : i32
    %c0_i32_0 = arith.constant 0 : i32
    %c0_i32_1 = arith.constant 0 : i32
    return %c0_i32, %c0_i32_0 : i32, i32
  }
  func.func @transform_8(%arg0: i32) -> (i32, i32) {
    %c0_i32 = arith.constant 0 : i32
    %c0_i32_0 = arith.constant 0 : i32
    %c0_i32_1 = arith.constant 0 : i32
    return %c0_i32, %c0_i32_0 : i32, i32
  }
  func.func @transform_9(%arg0: i32) -> (i32, i32) {
    %c0_i32 = arith.constant 0 : i32
    %c0_i32_0 = arith.constant 0 : i32
    %c0_i32_1 = arith.constant 0 : i32
    return %c0_i32, %c0_i32_0 : i32, i32
  }
  func.func @transform_10(%arg0: i32) -> (i32, i32) {
    %c0_i32 = arith.constant 0 : i32
    %c0_i32_0 = arith.constant 0 : i32
    %c0_i32_1 = arith.constant 0 : i32
    return %c0_i32, %c0_i32_0 : i32, i32
  }
  func.func @transform_11(%arg0: i32) -> (i32, i32) {
    %c0_i32 = arith.constant 0 : i32
    %c0_i32_0 = arith.constant 0 : i32
    %c0_i32_1 = arith.constant 0 : i32
    return %c0_i32, %c0_i32_0 : i32, i32
  }
  func.func @transform_12(%arg0: i32) -> (i32, i32) {
    %c0_i32 = arith.constant 0 : i32
    %c0_i32_0 = arith.constant 0 : i32
    return %arg0, %c0_i32 : i32, i32
  }
}

module attributes {stable_mosaic.version = 11 : i64} {
  func.func @_transformer_block_kernel(%arg0: i32, %arg1: memref<8x32xf32, #tpu.memory_space<vmem>>, %arg2: memref<1x32xf32, #tpu.memory_space<vmem>>, %arg3: memref<1x32xf32, #tpu.memory_space<vmem>>, %arg4: memref<32x96xbf16, #tpu.memory_space<vmem>>, %arg5: memref<32x32xbf16, #tpu.memory_space<vmem>>, %arg6: memref<1x32xf32, #tpu.memory_space<vmem>>, %arg7: memref<1x32xf32, #tpu.memory_space<vmem>>, %arg8: memref<1x32xf32, #tpu.memory_space<vmem>>, %arg9: memref<32x64xbf16, #tpu.memory_space<vmem>>, %arg10: memref<1x64xf32, #tpu.memory_space<vmem>>, %arg11: memref<64x32xbf16, #tpu.memory_space<vmem>>, %arg12: memref<1x32xf32, #tpu.memory_space<vmem>>, %arg13: memref<8x32xf32, #tpu.memory_space<vmem>>) attributes {dimension_semantics = [#tpu.dimension_semantics<parallel>], iteration_bounds = array<i64: 2>, scalar_prefetch = 0 : i64, scratch_operands = 0 : i64, tpu.core_type = #tpu.core_type<tc>, window_params = [{transform_indices = @transform_0, window_bounds = array<i64: 8, 32>}, {pipeline_mode = #tpu.pipeline_mode<synchronous>, transform_indices = @transform_1, window_bounds = array<i64: 1, 32>}, {pipeline_mode = #tpu.pipeline_mode<synchronous>, transform_indices = @transform_2, window_bounds = array<i64: 1, 32>}, {pipeline_mode = #tpu.pipeline_mode<synchronous>, transform_indices = @transform_3, window_bounds = array<i64: 32, 96>}, {pipeline_mode = #tpu.pipeline_mode<synchronous>, transform_indices = @transform_4, window_bounds = array<i64: 32, 32>}, {pipeline_mode = #tpu.pipeline_mode<synchronous>, transform_indices = @transform_5, window_bounds = array<i64: 1, 32>}, {pipeline_mode = #tpu.pipeline_mode<synchronous>, transform_indices = @transform_6, window_bounds = array<i64: 1, 32>}, {pipeline_mode = #tpu.pipeline_mode<synchronous>, transform_indices = @transform_7, window_bounds = array<i64: 1, 32>}, {pipeline_mode = #tpu.pipeline_mode<synchronous>, transform_indices = @transform_8, window_bounds = array<i64: 32, 64>}, {pipeline_mode = #tpu.pipeline_mode<synchronous>, transform_indices = @transform_9, window_bounds = array<i64: 1, 64>}, {pipeline_mode = #tpu.pipeline_mode<synchronous>, transform_indices = @transform_10, window_bounds = array<i64: 64, 32>}, {pipeline_mode = #tpu.pipeline_mode<synchronous>, transform_indices = @transform_11, window_bounds = array<i64: 1, 32>}, {transform_indices = @transform_12, window_bounds = array<i64: 8, 32>}]} {
    %c0 = arith.constant 0 : index
    %c0_0 = arith.constant 0 : index
    %0 = vector.load %arg1[%c0, %c0_0] : memref<8x32xf32, #tpu.memory_space<vmem>>, vector<8x32xf32>
    %c0_1 = arith.constant 0 : index
    %c0_2 = arith.constant 0 : index
    %1 = vector.load %arg2[%c0_1, %c0_2] : memref<1x32xf32, #tpu.memory_space<vmem>>, vector<1x32xf32>
    %2 = vector.shape_cast %1 : vector<1x32xf32> to vector<32xf32>
    %c0_3 = arith.constant 0 : index
    %c0_4 = arith.constant 0 : index
    %3 = vector.load %arg3[%c0_3, %c0_4] : memref<1x32xf32, #tpu.memory_space<vmem>>, vector<1x32xf32>
    %4 = vector.shape_cast %3 : vector<1x32xf32> to vector<32xf32>
    %cst = arith.constant dense<0.000000e+00> : vector<8xf32>
    %5 = vector.multi_reduction <add>, %0, %cst [1] : vector<8x32xf32> to vector<8xf32>
    %6 = vector.shape_cast %5 : vector<8xf32> to vector<8x1xf32>
    %cst_5 = arith.constant 3.200000e+01 : f32
    %7 = vector.broadcast %cst_5 : f32 to vector<8x1xf32>
    %8 = arith.divf %6, %7 : vector<8x1xf32>
    %9 = vector.broadcast %8 : vector<8x1xf32> to vector<8x32xf32>
    %10 = arith.subf %0, %9 : vector<8x32xf32>
    %11 = arith.mulf %10, %10 : vector<8x32xf32>
    %cst_6 = arith.constant dense<0.000000e+00> : vector<8xf32>
    %12 = vector.multi_reduction <add>, %11, %cst_6 [1] : vector<8x32xf32> to vector<8xf32>
    %13 = vector.shape_cast %12 : vector<8xf32> to vector<8x1xf32>
    %cst_7 = arith.constant 3.200000e+01 : f32
    %14 = vector.broadcast %cst_7 : f32 to vector<8x1xf32>
    %15 = arith.divf %13, %14 : vector<8x1xf32>
    %16 = vector.broadcast %8 : vector<8x1xf32> to vector<8x32xf32>
    %17 = arith.subf %0, %16 : vector<8x32xf32>
    %cst_8 = arith.constant 9.99999974E-6 : f32
    %18 = vector.broadcast %cst_8 : f32 to vector<8x1xf32>
    %19 = arith.addf %15, %18 : vector<8x1xf32>
    %20 = math.rsqrt %19 : vector<8x1xf32>
    %21 = vector.broadcast %20 : vector<8x1xf32> to vector<8x32xf32>
    %22 = arith.mulf %17, %21 : vector<8x32xf32>
    %23 = vector.shape_cast %2 : vector<32xf32> to vector<1x32xf32>
    %24 = vector.broadcast %23 : vector<1x32xf32> to vector<8x32xf32>
    %25 = arith.mulf %22, %24 : vector<8x32xf32>
    %26 = vector.shape_cast %4 : vector<32xf32> to vector<1x32xf32>
    %27 = vector.broadcast %26 : vector<1x32xf32> to vector<8x32xf32>
    %28 = arith.addf %25, %27 : vector<8x32xf32>
    %29 = arith.truncf %28 : vector<8x32xf32> to vector<8x32xbf16>
    %c0_9 = arith.constant 0 : index
    %c0_10 = arith.constant 0 : index
    %30 = vector.load %arg4[%c0_9, %c0_10] : memref<32x96xbf16, #tpu.memory_space<vmem>>, vector<32x96xbf16>
    %cst_11 = arith.constant dense<0.000000e+00> : vector<8x96xf32>
    %31 = tpu.matmul %29, %30, %cst_11 {dimension_numbers = #tpu.dot_dimension_numbers<[1], [0], [0], [1], [0, 0, 1, 1], [], []>} : vector<8x32xbf16>, vector<32x96xbf16>, vector<8x96xf32> -> vector<8x96xf32>
    %32 = arith.truncf %31 : vector<8x96xf32> to vector<8x96xbf16>
    %33 = vector.extract_strided_slice %32 {offsets = [0, 0], sizes = [8, 8], strides = [1, 1]} : vector<8x96xbf16> to vector<8x8xbf16>
    %34 = vector.shape_cast %33 : vector<8x8xbf16> to vector<1x8x8xbf16>
    %35 = vector.extract_strided_slice %32 {offsets = [0, 8], sizes = [8, 8], strides = [1, 1]} : vector<8x96xbf16> to vector<8x8xbf16>
    %36 = vector.shape_cast %35 : vector<8x8xbf16> to vector<1x8x8xbf16>
    %37 = vector.extract_strided_slice %32 {offsets = [0, 16], sizes = [8, 8], strides = [1, 1]} : vector<8x96xbf16> to vector<8x8xbf16>
    %38 = vector.shape_cast %37 : vector<8x8xbf16> to vector<1x8x8xbf16>
    %39 = vector.extract_strided_slice %32 {offsets = [0, 24], sizes = [8, 8], strides = [1, 1]} : vector<8x96xbf16> to vector<8x8xbf16>
    %40 = vector.shape_cast %39 : vector<8x8xbf16> to vector<1x8x8xbf16>
    %41 = tpu.concatenate %34, %36, %38, %40 in 0 : vector<1x8x8xbf16>, vector<1x8x8xbf16>, vector<1x8x8xbf16>, vector<1x8x8xbf16> -> vector<4x8x8xbf16>
    %42 = vector.extract_strided_slice %32 {offsets = [0, 32], sizes = [8, 8], strides = [1, 1]} : vector<8x96xbf16> to vector<8x8xbf16>
    %43 = vector.shape_cast %42 : vector<8x8xbf16> to vector<1x8x8xbf16>
    %44 = vector.extract_strided_slice %32 {offsets = [0, 40], sizes = [8, 8], strides = [1, 1]} : vector<8x96xbf16> to vector<8x8xbf16>
    %45 = vector.shape_cast %44 : vector<8x8xbf16> to vector<1x8x8xbf16>
    %46 = vector.extract_strided_slice %32 {offsets = [0, 48], sizes = [8, 8], strides = [1, 1]} : vector<8x96xbf16> to vector<8x8xbf16>
    %47 = vector.shape_cast %46 : vector<8x8xbf16> to vector<1x8x8xbf16>
    %48 = vector.extract_strided_slice %32 {offsets = [0, 56], sizes = [8, 8], strides = [1, 1]} : vector<8x96xbf16> to vector<8x8xbf16>
    %49 = vector.shape_cast %48 : vector<8x8xbf16> to vector<1x8x8xbf16>
    %50 = tpu.concatenate %43, %45, %47, %49 in 0 : vector<1x8x8xbf16>, vector<1x8x8xbf16>, vector<1x8x8xbf16>, vector<1x8x8xbf16> -> vector<4x8x8xbf16>
    %51 = vector.extract_strided_slice %32 {offsets = [0, 64], sizes = [8, 8], strides = [1, 1]} : vector<8x96xbf16> to vector<8x8xbf16>
    %52 = vector.shape_cast %51 : vector<8x8xbf16> to vector<1x8x8xbf16>
    %53 = vector.extract_strided_slice %32 {offsets = [0, 72], sizes = [8, 8], strides = [1, 1]} : vector<8x96xbf16> to vector<8x8xbf16>
    %54 = vector.shape_cast %53 : vector<8x8xbf16> to vector<1x8x8xbf16>
    %55 = vector.extract_strided_slice %32 {offsets = [0, 80], sizes = [8, 8], strides = [1, 1]} : vector<8x96xbf16> to vector<8x8xbf16>
    %56 = vector.shape_cast %55 : vector<8x8xbf16> to vector<1x8x8xbf16>
    %57 = vector.extract_strided_slice %32 {offsets = [0, 88], sizes = [8, 8], strides = [1, 1]} : vector<8x96xbf16> to vector<8x8xbf16>
    %58 = vector.shape_cast %57 : vector<8x8xbf16> to vector<1x8x8xbf16>
    %59 = tpu.concatenate %52, %54, %56, %58 in 0 : vector<1x8x8xbf16>, vector<1x8x8xbf16>, vector<1x8x8xbf16>, vector<1x8x8xbf16> -> vector<4x8x8xbf16>
    "tpu.trace_start"() <{level = 10 : i32, message = "gnd,gmd->gnm"}> : () -> ()
    %cst_12 = arith.constant dense<0.000000e+00> : vector<4x8x8xf32>
    %60 = tpu.matmul %41, %50, %cst_12 {dimension_numbers = #tpu.dot_dimension_numbers<[2], [2], [1], [1], [0, 0, 0, 1, 1, 1], [0], [0]>} : vector<4x8x8xbf16>, vector<4x8x8xbf16>, vector<4x8x8xf32> -> vector<4x8x8xf32>
    "tpu.trace_stop"() : () -> ()
    %cst_13 = arith.constant dense<0xFF800000> : vector<4x8xf32>
    %61 = vector.multi_reduction <maximumf>, %60, %cst_13 [2] : vector<4x8x8xf32> to vector<4x8xf32>
    %62 = vector.shape_cast %61 : vector<4x8xf32> to vector<4x8x1xf32>
    %63 = vector.broadcast %62 : vector<4x8x1xf32> to vector<4x8x8xf32>
    %64 = arith.subf %60, %63 : vector<4x8x8xf32>
    %65 = math.exp %64 : vector<4x8x8xf32>
    %cst_14 = arith.constant dense<0.000000e+00> : vector<4x8xf32>
    %66 = vector.multi_reduction <add>, %65, %cst_14 [2] : vector<4x8x8xf32> to vector<4x8xf32>
    %67 = vector.shape_cast %66 : vector<4x8xf32> to vector<4x8x1xf32>
    %68 = tpu.reciprocal %67 {approx = true} : vector<4x8x1xf32> -> vector<4x8x1xf32>
    %69 = vector.broadcast %68 : vector<4x8x1xf32> to vector<4x8x8xf32>
    %70 = arith.mulf %65, %69 : vector<4x8x8xf32>
    %71 = arith.truncf %70 : vector<4x8x8xf32> to vector<4x8x8xbf16>
    "tpu.trace_start"() <{level = 10 : i32, message = "gnm,gmd->gnd"}> : () -> ()
    %cst_15 = arith.constant dense<0.000000e+00> : vector<4x8x8xf32>
    %72 = tpu.matmul %71, %59, %cst_15 {dimension_numbers = #tpu.dot_dimension_numbers<[2], [1], [1], [2], [0, 0, 0, 1, 1, 2], [0], [0]>} : vector<4x8x8xbf16>, vector<4x8x8xbf16>, vector<4x8x8xf32> -> vector<4x8x8xf32>
    "tpu.trace_stop"() : () -> ()
    %73 = arith.truncf %72 : vector<4x8x8xf32> to vector<4x8x8xbf16>
    %74 = vector.extract_strided_slice %73 {offsets = [0, 0, 0], sizes = [1, 8, 8], strides = [1, 1, 1]} : vector<4x8x8xbf16> to vector<1x8x8xbf16>
    %75 = vector.shape_cast %74 : vector<1x8x8xbf16> to vector<8x8xbf16>
    %76 = vector.extract_strided_slice %73 {offsets = [1, 0, 0], sizes = [1, 8, 8], strides = [1, 1, 1]} : vector<4x8x8xbf16> to vector<1x8x8xbf16>
    %77 = vector.shape_cast %76 : vector<1x8x8xbf16> to vector<8x8xbf16>
    %78 = vector.extract_strided_slice %73 {offsets = [2, 0, 0], sizes = [1, 8, 8], strides = [1, 1, 1]} : vector<4x8x8xbf16> to vector<1x8x8xbf16>
    %79 = vector.shape_cast %78 : vector<1x8x8xbf16> to vector<8x8xbf16>
    %80 = vector.extract_strided_slice %73 {offsets = [3, 0, 0], sizes = [1, 8, 8], strides = [1, 1, 1]} : vector<4x8x8xbf16> to vector<1x8x8xbf16>
    %81 = vector.shape_cast %80 : vector<1x8x8xbf16> to vector<8x8xbf16>
    %82 = tpu.concatenate %75, %77, %79, %81 in 1 : vector<8x8xbf16>, vector<8x8xbf16>, vector<8x8xbf16>, vector<8x8xbf16> -> vector<8x32xbf16>
    %c0_16 = arith.constant 0 : index
    %c0_17 = arith.constant 0 : index
    %83 = vector.load %arg5[%c0_16, %c0_17] : memref<32x32xbf16, #tpu.memory_space<vmem>>, vector<32x32xbf16>
    %cst_18 = arith.constant dense<0.000000e+00> : vector<8x32xf32>
    %84 = tpu.matmul %82, %83, %cst_18 {dimension_numbers = #tpu.dot_dimension_numbers<[1], [0], [0], [1], [0, 0, 1, 1], [], []>} : vector<8x32xbf16>, vector<32x32xbf16>, vector<8x32xf32> -> vector<8x32xf32>
    %85 = arith.addf %0, %84 : vector<8x32xf32>
    %c0_19 = arith.constant 0 : index
    %c0_20 = arith.constant 0 : index
    %86 = vector.load %arg6[%c0_19, %c0_20] : memref<1x32xf32, #tpu.memory_space<vmem>>, vector<1x32xf32>
    %87 = vector.shape_cast %86 : vector<1x32xf32> to vector<32xf32>
    %88 = vector.shape_cast %87 : vector<32xf32> to vector<1x32xf32>
    %89 = vector.broadcast %88 : vector<1x32xf32> to vector<8x32xf32>
    %90 = arith.addf %85, %89 : vector<8x32xf32>
    %c0_21 = arith.constant 0 : index
    %c0_22 = arith.constant 0 : index
    %91 = vector.load %arg7[%c0_21, %c0_22] : memref<1x32xf32, #tpu.memory_space<vmem>>, vector<1x32xf32>
    %92 = vector.shape_cast %91 : vector<1x32xf32> to vector<32xf32>
    %c0_23 = arith.constant 0 : index
    %c0_24 = arith.constant 0 : index
    %93 = vector.load %arg8[%c0_23, %c0_24] : memref<1x32xf32, #tpu.memory_space<vmem>>, vector<1x32xf32>
    %94 = vector.shape_cast %93 : vector<1x32xf32> to vector<32xf32>
    %cst_25 = arith.constant dense<0.000000e+00> : vector<8xf32>
    %95 = vector.multi_reduction <add>, %90, %cst_25 [1] : vector<8x32xf32> to vector<8xf32>
    %96 = vector.shape_cast %95 : vector<8xf32> to vector<8x1xf32>
    %cst_26 = arith.constant 3.200000e+01 : f32
    %97 = vector.broadcast %cst_26 : f32 to vector<8x1xf32>
    %98 = arith.divf %96, %97 : vector<8x1xf32>
    %99 = vector.broadcast %98 : vector<8x1xf32> to vector<8x32xf32>
    %100 = arith.subf %90, %99 : vector<8x32xf32>
    %101 = arith.mulf %100, %100 : vector<8x32xf32>
    %cst_27 = arith.constant dense<0.000000e+00> : vector<8xf32>
    %102 = vector.multi_reduction <add>, %101, %cst_27 [1] : vector<8x32xf32> to vector<8xf32>
    %103 = vector.shape_cast %102 : vector<8xf32> to vector<8x1xf32>
    %cst_28 = arith.constant 3.200000e+01 : f32
    %104 = vector.broadcast %cst_28 : f32 to vector<8x1xf32>
    %105 = arith.divf %103, %104 : vector<8x1xf32>
    %106 = vector.broadcast %98 : vector<8x1xf32> to vector<8x32xf32>
    %107 = arith.subf %90, %106 : vector<8x32xf32>
    %cst_29 = arith.constant 9.99999974E-6 : f32
    %108 = vector.broadcast %cst_29 : f32 to vector<8x1xf32>
    %109 = arith.addf %105, %108 : vector<8x1xf32>
    %110 = math.rsqrt %109 : vector<8x1xf32>
    %111 = vector.broadcast %110 : vector<8x1xf32> to vector<8x32xf32>
    %112 = arith.mulf %107, %111 : vector<8x32xf32>
    %113 = vector.shape_cast %92 : vector<32xf32> to vector<1x32xf32>
    %114 = vector.broadcast %113 : vector<1x32xf32> to vector<8x32xf32>
    %115 = arith.mulf %112, %114 : vector<8x32xf32>
    %116 = vector.shape_cast %94 : vector<32xf32> to vector<1x32xf32>
    %117 = vector.broadcast %116 : vector<1x32xf32> to vector<8x32xf32>
    %118 = arith.addf %115, %117 : vector<8x32xf32>
    %119 = arith.truncf %118 : vector<8x32xf32> to vector<8x32xbf16>
    %c0_30 = arith.constant 0 : index
    %c0_31 = arith.constant 0 : index
    %120 = vector.load %arg9[%c0_30, %c0_31] : memref<32x64xbf16, #tpu.memory_space<vmem>>, vector<32x64xbf16>
    %cst_32 = arith.constant dense<0.000000e+00> : vector<8x64xf32>
    %121 = tpu.matmul %119, %120, %cst_32 {dimension_numbers = #tpu.dot_dimension_numbers<[1], [0], [0], [1], [0, 0, 1, 1], [], []>} : vector<8x32xbf16>, vector<32x64xbf16>, vector<8x64xf32> -> vector<8x64xf32>
    %c0_33 = arith.constant 0 : index
    %c0_34 = arith.constant 0 : index
    %122 = vector.load %arg10[%c0_33, %c0_34] : memref<1x64xf32, #tpu.memory_space<vmem>>, vector<1x64xf32>
    %123 = vector.shape_cast %122 : vector<1x64xf32> to vector<64xf32>
    %124 = vector.shape_cast %123 : vector<64xf32> to vector<1x64xf32>
    %125 = vector.broadcast %124 : vector<1x64xf32> to vector<8x64xf32>
    %126 = arith.addf %121, %125 : vector<8x64xf32>
    %cst_35 = arith.constant 5.000000e-01 : f32
    %127 = vector.broadcast %cst_35 : f32 to vector<8x64xf32>
    %128 = arith.mulf %127, %126 : vector<8x64xf32>
    %cst_36 = arith.constant 0.707106769 : f32
    %129 = vector.broadcast %cst_36 : f32 to vector<8x64xf32>
    %130 = arith.mulf %126, %129 : vector<8x64xf32>
    %131 = math.erf %130 : vector<8x64xf32>
    %cst_37 = arith.constant 1.000000e+00 : f32
    %132 = vector.broadcast %cst_37 : f32 to vector<8x64xf32>
    %133 = arith.addf %132, %131 : vector<8x64xf32>
    %134 = arith.mulf %128, %133 : vector<8x64xf32>
    %135 = arith.truncf %134 : vector<8x64xf32> to vector<8x64xbf16>
    %c0_38 = arith.constant 0 : index
    %c0_39 = arith.constant 0 : index
    %136 = vector.load %arg11[%c0_38, %c0_39] : memref<64x32xbf16, #tpu.memory_space<vmem>>, vector<64x32xbf16>
    %cst_40 = arith.constant dense<0.000000e+00> : vector<8x32xf32>
    %137 = tpu.matmul %135, %136, %cst_40 {dimension_numbers = #tpu.dot_dimension_numbers<[1], [0], [0], [1], [0, 0, 1, 1], [], []>} : vector<8x64xbf16>, vector<64x32xbf16>, vector<8x32xf32> -> vector<8x32xf32>
    %c0_41 = arith.constant 0 : index
    %c0_42 = arith.constant 0 : index
    %138 = vector.load %arg12[%c0_41, %c0_42] : memref<1x32xf32, #tpu.memory_space<vmem>>, vector<1x32xf32>
    %139 = vector.shape_cast %138 : vector<1x32xf32> to vector<32xf32>
    %140 = vector.shape_cast %139 : vector<32xf32> to vector<1x32xf32>
    %141 = vector.broadcast %140 : vector<1x32xf32> to vector<8x32xf32>
    %142 = arith.addf %137, %141 : vector<8x32xf32>
    %143 = arith.addf %90, %142 : vector<8x32xf32>
    %c0_43 = arith.constant 0 : index
    %c0_44 = arith.constant 0 : index
    %144 = vector.load %arg13[%c0_43, %c0_44] : memref<8x32xf32, #tpu.memory_space<vmem>>, vector<8x32xf32>
    tpu.vector_store %arg13[%c0_43, %c0_44], %143 {strides = array<i32>} : memref<8x32xf32, #tpu.memory_space<vmem>>, vector<8x32xf32>,
    return
  }
  func.func @transform_0(%arg0: i32) -> (i32, i32) {
    %c0_i32 = arith.constant 0 : i32
    %c0_i32_0 = arith.constant 0 : i32
    return %arg0, %c0_i32 : i32, i32
  }
  func.func @transform_1(%arg0: i32) -> (i32, i32) {
    %c0_i32 = arith.constant 0 : i32
    %c0_i32_0 = arith.constant 0 : i32
    %c0_i32_1 = arith.constant 0 : i32
    return %c0_i32, %c0_i32_0 : i32, i32
  }
  func.func @transform_2(%arg0: i32) -> (i32, i32) {
    %c0_i32 = arith.constant 0 : i32
    %c0_i32_0 = arith.constant 0 : i32
    %c0_i32_1 = arith.constant 0 : i32
    return %c0_i32, %c0_i32_0 : i32, i32
  }
  func.func @transform_3(%arg0: i32) -> (i32, i32) {
    %c0_i32 = arith.constant 0 : i32
    %c0_i32_0 = arith.constant 0 : i32
    %c0_i32_1 = arith.constant 0 : i32
    return %c0_i32, %c0_i32_0 : i32, i32
  }
  func.func @transform_4(%arg0: i32) -> (i32, i32) {
    %c0_i32 = arith.constant 0 : i32
    %c0_i32_0 = arith.constant 0 : i32
    %c0_i32_1 = arith.constant 0 : i32
    return %c0_i32, %c0_i32_0 : i32, i32
  }
  func.func @transform_5(%arg0: i32) -> (i32, i32) {
    %c0_i32 = arith.constant 0 : i32
    %c0_i32_0 = arith.constant 0 : i32
    %c0_i32_1 = arith.constant 0 : i32
    return %c0_i32, %c0_i32_0 : i32, i32
  }
  func.func @transform_6(%arg0: i32) -> (i32, i32) {
    %c0_i32 = arith.constant 0 : i32
    %c0_i32_0 = arith.constant 0 : i32
    %c0_i32_1 = arith.constant 0 : i32
    return %c0_i32, %c0_i32_0 : i32, i32
  }
  func.func @transform_7(%arg0: i32) -> (i32, i32) {
    %c0_i32 = arith.constant 0 : i32
    %c0_i32_0 = arith.constant 0 : i32
    %c0_i32_1 = arith.constant 0 : i32
    return %c0_i32, %c0_i32_0 : i32, i32
  }
  func.func @transform_8(%arg0: i32) -> (i32, i32) {
    %c0_i32 = arith.constant 0 : i32
    %c0_i32_0 = arith.constant 0 : i32
    %c0_i32_1 = arith.constant 0 : i32
    return %c0_i32, %c0_i32_0 : i32, i32
  }
  func.func @transform_9(%arg0: i32) -> (i32, i32) {
    %c0_i32 = arith.constant 0 : i32
    %c0_i32_0 = arith.constant 0 : i32
    %c0_i32_1 = arith.constant 0 : i32
    return %c0_i32, %c0_i32_0 : i32, i32
  }
  func.func @transform_10(%arg0: i32) -> (i32, i32) {
    %c0_i32 = arith.constant 0 : i32
    %c0_i32_0 = arith.constant 0 : i32
    %c0_i32_1 = arith.constant 0 : i32
    return %c0_i32, %c0_i32_0 : i32, i32
  }
  func.func @transform_11(%arg0: i32) -> (i32, i32) {
    %c0_i32 = arith.constant 0 : i32
    %c0_i32_0 = arith.constant 0 : i32
    %c0_i32_1 = arith.constant 0 : i32
    return %c0_i32, %c0_i32_0 : i32, i32
  }
  func.func @transform_12(%arg0: i32) -> (i32, i32) {
    %c0_i32 = arith.constant 0 : i32
    %c0_i32_0 = arith.constant 0 : i32
    return %arg0, %c0_i32 : i32, i32
  }
}

</mosaic_0001>

<llo_original>
// kernel: tpu_custom_call.1
$region0: #{tpu_custom_call.1}
  #allocation0 [shape = 'u32[]', space=smem, size = 0x4, offset = 0x4, fixed_abs, tag = 'smem constant byte address 0x4 - core index']
  #allocation1 [shape = 'u32[144,128]{1,0:T(1,128)}', space=vmem, size = 0x12000, scoped, tag = 'internal scratch']
  %s0 = inlined_call_operand.hbm [shape: f32[16,32], index: 0, kind: input, shape index: {}]
  %s1 = inlined_call_operand.hbm [shape: f32[1,32], index: 1, kind: input, shape index: {}]
  %s2 = inlined_call_operand.hbm [shape: f32[1,32], index: 2, kind: input, shape index: {}]
  %s3 = inlined_call_operand.hbm [shape: bf16[32,96], index: 3, kind: input, shape index: {}]
  %s4 = inlined_call_operand.hbm [shape: bf16[32,32], index: 4, kind: input, shape index: {}]
  %s5 = inlined_call_operand.hbm [shape: f32[1,32], index: 5, kind: input, shape index: {}]
  %s6 = inlined_call_operand.hbm [shape: f32[1,32], index: 6, kind: input, shape index: {}]
  %s7 = inlined_call_operand.hbm [shape: f32[1,32], index: 7, kind: input, shape index: {}]
  %s8 = inlined_call_operand.hbm [shape: bf16[32,64], index: 8, kind: input, shape index: {}]
  %s9 = inlined_call_operand.hbm [shape: f32[1,64], index: 9, kind: input, shape index: {}]
  %s10 = inlined_call_operand.hbm [shape: bf16[64,32], index: 10, kind: input, shape index: {}]
  %s11 = inlined_call_operand.hbm [shape: f32[1,32], index: 11, kind: input, shape index: {}]
  %s12 = inlined_call_operand.hbm [shape: f32[16,32], index: 12, kind: output, shape index: {}]
  %s13 = sld [smem:[#allocation0]]
  $region129: #{tpu_custom_call.1} parent=0
    _
  %s15 = ssub.s32 1, %s13
  %s16 = scalar_select 0, %s15, %s13
  $region1: #{tpu_custom_call.1} parent=0
    #allocation2 [shape = 'u8[8192]{0}', space=vmem, size = 0x2000, scoped, tag = 'input window, operand 0']
    #allocation3 [shape = 's32[2]{0}', space=sflag, size = 0x8, scoped, tag = 'scoped memory for tpu_custom_call.1']
    #allocation4 [shape = 's32[2]{0}', space=sflag, size = 0x8, scoped, tag = 'scoped memory for tpu_custom_call.1']
    #allocation5 [shape = 'u8[512]{0}', space=vmem, size = 0x400, scoped, tag = 'input window, operand 1, single buffered']
    #allocation6 [shape = 's32[1]{0}', space=sflag, size = 0x4, scoped, tag = 'scoped memory for tpu_custom_call.1']
    #allocation7 [shape = 'u8[512]{0}', space=vmem, size = 0x400, scoped, tag = 'input window, operand 2, single buffered']
    #allocation8 [shape = 'u8[8192]{0}', space=vmem, size = 0x2000, scoped, tag = 'input window, operand 3, single buffered']
    #allocation9 [shape = 's32[1]{0}', space=sflag, size = 0x4, scoped, tag = 'scoped memory for tpu_custom_call.1']
    #allocation10 [shape = 'u8[8192]{0}', space=vmem, size = 0x2000, scoped, tag = 'input window, operand 4, single buffered']
    #allocation11 [shape = 'u8[512]{0}', space=vmem, size = 0x400, scoped, tag = 'input window, operand 5, single buffered']
    #allocation12 [shape = 's32[1]{0}', space=sflag, size = 0x4, scoped, tag = 'scoped memory for tpu_custom_call.1']
    #allocation13 [shape = 'u8[512]{0}', space=vmem, size = 0x400, scoped, tag = 'input window, operand 6, single buffered']
    #allocation14 [shape = 'u8[512]{0}', space=vmem, size = 0x400, scoped, tag = 'input window, operand 7, single buffered']
    #allocation15 [shape = 's32[1]{0}', space=sflag, size = 0x4, scoped, tag = 'scoped memory for tpu_custom_call.1']
    #allocation16 [shape = 'u8[8192]{0}', space=vmem, size = 0x2000, scoped, tag = 'input window, operand 8, single buffered']
    #allocation17 [shape = 'u8[512]{0}', space=vmem, size = 0x400, scoped, tag = 'input window, operand 9, single buffered']
    #allocation18 [shape = 's32[1]{0}', space=sflag, size = 0x4, scoped, tag = 'scoped memory for tpu_custom_call.1']
    #allocation19 [shape = 'u8[16384]{0}', space=vmem, size = 0x4000, scoped, tag = 'input window, operand 10, single buffered']
    #allocation20 [shape = 'u8[512]{0}', space=vmem, size = 0x400, scoped, tag = 'input window, operand 11, single buffered']
    #allocation21 [shape = 's32[1]{0}', space=sflag, size = 0x4, scoped, tag = 'scoped memory for tpu_custom_call.1']
    #allocation22 [shape = 'u8[8192]{0}', space=vmem, size = 0x2000, scoped, tag = 'output window, operand 0']
    %17 = vsyncpa [#allocation3], 0
    %s18 = scalar_lea.sflag [#allocation3], 1
    %19 = vsyncpa %s18, 0
    %20 = vsyncpa [#allocation6], 0
    %21 = vsyncpa [#allocation9], 0
    %22 = vsyncpa [#allocation12], 0
    %23 = vsyncpa [#allocation15], 0
    %24 = vsyncpa [#allocation18], 0
    %25 = vsyncpa [#allocation21], 0
    %26 = vsyncpa [#allocation4], 0
    %s27 = scalar_lea.sflag [#allocation4], 1
    %28 = vsyncpa %s27, 0
    loop: start=0, step=1, limit=4
    $region2: #{tpu_custom_call.1} parent=1 // loop_pre_header
      _
    $region3: #{tpu_custom_call.1} parent=1 // loop_header
      %s30 = sphi 0, %s34
      %p31 = scmp.ge.s32.totalorder %s30, 4
      %s40 = sphi 0, %s42
      %s43 = sphi 0, %s40
      %s44 = sphi 0, %s43
      %s60 = sphi 0, %s44
      %s64 = sphi 0, %s64
      %s66 = sphi 0, %s64
      %s67 = sphi 0, %s66
      %s81 = sphi 0, %s67
      %s85 = sphi 0, %s85
      %s87 = sphi 0, %s85
      %s88 = sphi 0, %s87
      %s102 = sphi 0, %s88
      %s106 = sphi 0, %s106
      %s108 = sphi 0, %s106
      %s109 = sphi 0, %s108
      %s123 = sphi 0, %s109
      %s127 = sphi 0, %s127
      %s129 = sphi 0, %s127
      %s130 = sphi 0, %s129
      %s144 = sphi 0, %s130
      %s148 = sphi 0, %s148
      %s150 = sphi 0, %s148
      %s151 = sphi 0, %s150
      %s165 = sphi 0, %s151
      %s169 = sphi 0, %s169
      %s171 = sphi 0, %s169
      %s172 = sphi 0, %s171
      %s186 = sphi 0, %s172
      %s190 = sphi 0, %s190
      %s192 = sphi 0, %s190
      %s193 = sphi 0, %s192
      %s207 = sphi 0, %s193
      %s211 = sphi 0, %s211
      %s213 = sphi 0, %s211
      %s214 = sphi 0, %s213
      %s228 = sphi 0, %s214
      %s232 = sphi 0, %s232
      %s234 = sphi 0, %s232
      %s235 = sphi 0, %s234
      %s249 = sphi 0, %s235
      %s253 = sphi 0, %s253
      %s255 = sphi 0, %s253
      %s256 = sphi 0, %s255
      %s270 = sphi 0, %s256
      %s274 = sphi 0, %s274
      %s276 = sphi 0, %s274
      %s277 = sphi 0, %s276
      %s291 = sphi 0, %s277
      %s297 = sphi 0, %s299
      %s300 = sphi 0, %s297
      %s301 = sphi 0, %s300
      %s317 = sphi 0, %s301
    $region4: #{tpu_custom_call.1} parent=1 // loop_header_branch
      %33 = sbr.rel (%p31) target = $region8
    $region5: #{tpu_custom_call.1} parent=1 // loop_body
      %s35 = ssub.s32 %s30, 1
      %s36 = ssub.s32 %s30, 2
      %s37 = sadd.s32 %s30, 1
      %s38 = ssub.s32 %s30, %s37
      %p39 = scmp.eq.s32.totalorder %s38, 0
      %s41 = sadd.s32 %s40, 1
      %s42 = scalar_select %p39, %s40, %s41
      %p45 = pneg %p39
      %p46 = scmp.eq.s32.totalorder %s30, 1
      %p47 = por %p45, %p46
      %p48 = scmp.ne.s32.totalorder %s40, %s43
      %p49 = scmp.eq.s32.totalorder %s30, 0
      %p50 = por %p48, %p49
      %p51 = scmp.ne.s32.totalorder %s40, %s43
      %p52 = scmp.eq.s32.totalorder %s35, 1
      %p53 = por %p51, %p52
      %p54 = scmp.ne.s32.totalorder %s43, %s44
      %p55 = scmp.eq.s32.totalorder %s35, 0
      %p56 = por %p54, %p55
      %p57 = scmp.ne.s32.totalorder %s43, %s44
      %p58 = scmp.eq.s32.totalorder %s36, 1
      %p59 = por %p57, %p58
      %p61 = scmp.ne.s32.totalorder %s44, %s60
      %p62 = scmp.eq.s32.totalorder %s36, 0
      %p63 = por %p61, %p62
      %s65 = sadd.s32 %s64, 1
      %p68 = scmp.eq.s32.totalorder %s30, 1
      %p69 = scmp.ne.s32.totalorder %s64, %s66
      %p70 = scmp.eq.s32.totalorder %s30, 0
      %p71 = por %p69, %p70
      %p72 = scmp.ne.s32.totalorder %s64, %s66
      %p73 = scmp.eq.s32.totalorder %s35, 1
      %p74 = por %p72, %p73
      %p75 = scmp.ne.s32.totalorder %s66, %s67
      %p76 = scmp.eq.s32.totalorder %s35, 0
      %p77 = por %p75, %p76
      %p78 = scmp.ne.s32.totalorder %s66, %s67
      %p79 = scmp.eq.s32.totalorder %s36, 1
      %p80 = por %p78, %p79
      %p82 = scmp.ne.s32.totalorder %s67, %s81
      %p83 = scmp.eq.s32.totalorder %s36, 0
      %p84 = por %p82, %p83
      %s86 = sadd.s32 %s85, 1
      %p89 = scmp.eq.s32.totalorder %s30, 1
      %p90 = scmp.ne.s32.totalorder %s85, %s87
      %p91 = scmp.eq.s32.totalorder %s30, 0
      %p92 = por %p90, %p91
      %p93 = scmp.ne.s32.totalorder %s85, %s87
      %p94 = scmp.eq.s32.totalorder %s35, 1
      %p95 = por %p93, %p94
      %p96 = scmp.ne.s32.totalorder %s87, %s88
      %p97 = scmp.eq.s32.totalorder %s35, 0
      %p98 = por %p96, %p97
      %p99 = scmp.ne.s32.totalorder %s87, %s88
      %p100 = scmp.eq.s32.totalorder %s36, 1
      %p101 = por %p99, %p100
      %p103 = scmp.ne.s32.totalorder %s88, %s102
      %p104 = scmp.eq.s32.totalorder %s36, 0
      %p105 = por %p103, %p104
      %s107 = sadd.s32 %s106, 1
      %p110 = scmp.eq.s32.totalorder %s30, 1
      %p111 = scmp.ne.s32.totalorder %s106, %s108
      %p112 = scmp.eq.s32.totalorder %s30, 0
      %p113 = por %p111, %p112
      %p114 = scmp.ne.s32.totalorder %s106, %s108
      %p115 = scmp.eq.s32.totalorder %s35, 1
      %p116 = por %p114, %p115
      %p117 = scmp.ne.s32.totalorder %s108, %s109
      %p118 = scmp.eq.s32.totalorder %s35, 0
      %p119 = por %p117, %p118
      %p120 = scmp.ne.s32.totalorder %s108, %s109
      %p121 = scmp.eq.s32.totalorder %s36, 1
      %p122 = por %p120, %p121
      %p124 = scmp.ne.s32.totalorder %s109, %s123
      %p125 = scmp.eq.s32.totalorder %s36, 0
      %p126 = por %p124, %p125
      %s128 = sadd.s32 %s127, 1
      %p131 = scmp.eq.s32.totalorder %s30, 1
      %p132 = scmp.ne.s32.totalorder %s127, %s129
      %p133 = scmp.eq.s32.totalorder %s30, 0
      %p134 = por %p132, %p133
      %p135 = scmp.ne.s32.totalorder %s127, %s129
      %p136 = scmp.eq.s32.totalorder %s35, 1
      %p137 = por %p135, %p136
      %p138 = scmp.ne.s32.totalorder %s129, %s130
      %p139 = scmp.eq.s32.totalorder %s35, 0
      %p140 = por %p138, %p139
      %p141 = scmp.ne.s32.totalorder %s129, %s130
      %p142 = scmp.eq.s32.totalorder %s36, 1
      %p143 = por %p141, %p142
      %p145 = scmp.ne.s32.totalorder %s130, %s144
      %p146 = scmp.eq.s32.totalorder %s36, 0
      %p147 = por %p145, %p146
      %s149 = sadd.s32 %s148, 1
      %p152 = scmp.eq.s32.totalorder %s30, 1
      %p153 = scmp.ne.s32.totalorder %s148, %s150
      %p154 = scmp.eq.s32.totalorder %s30, 0
      %p155 = por %p153, %p154
      %p156 = scmp.ne.s32.totalorder %s148, %s150
      %p157 = scmp.eq.s32.totalorder %s35, 1
      %p158 = por %p156, %p157
      %p159 = scmp.ne.s32.totalorder %s150, %s151
      %p160 = scmp.eq.s32.totalorder %s35, 0
      %p161 = por %p159, %p160
      %p162 = scmp.ne.s32.totalorder %s150, %s151
      %p163 = scmp.eq.s32.totalorder %s36, 1
      %p164 = por %p162, %p163
      %p166 = scmp.ne.s32.totalorder %s151, %s165
      %p167 = scmp.eq.s32.totalorder %s36, 0
      %p168 = por %p166, %p167
      %s170 = sadd.s32 %s169, 1
      %p173 = scmp.eq.s32.totalorder %s30, 1
      %p174 = scmp.ne.s32.totalorder %s169, %s171
      %p175 = scmp.eq.s32.totalorder %s30, 0
      %p176 = por %p174, %p175
      %p177 = scmp.ne.s32.totalorder %s169, %s171
      %p178 = scmp.eq.s32.totalorder %s35, 1
      %p179 = por %p177, %p178
      %p180 = scmp.ne.s32.totalorder %s171, %s172
      %p181 = scmp.eq.s32.totalorder %s35, 0
      %p182 = por %p180, %p181
      %p183 = scmp.ne.s32.totalorder %s171, %s172
      %p184 = scmp.eq.s32.totalorder %s36, 1
      %p185 = por %p183, %p184
      %p187 = scmp.ne.s32.totalorder %s172, %s186
      %p188 = scmp.eq.s32.totalorder %s36, 0
      %p189 = por %p187, %p188
      %s191 = sadd.s32 %s190, 1
      %p194 = scmp.eq.s32.totalorder %s30, 1
      %p195 = scmp.ne.s32.totalorder %s190, %s192
      %p196 = scmp.eq.s32.totalorder %s30, 0
      %p197 = por %p195, %p196
      %p198 = scmp.ne.s32.totalorder %s190, %s192
      %p199 = scmp.eq.s32.totalorder %s35, 1
      %p200 = por %p198, %p199
      %p201 = scmp.ne.s32.totalorder %s192, %s193
      %p202 = scmp.eq.s32.totalorder %s35, 0
      %p203 = por %p201, %p202
      %p204 = scmp.ne.s32.totalorder %s192, %s193
      %p205 = scmp.eq.s32.totalorder %s36, 1
      %p206 = por %p204, %p205
      %p208 = scmp.ne.s32.totalorder %s193, %s207
      %p209 = scmp.eq.s32.totalorder %s36, 0
      %p210 = por %p208, %p209
      %s212 = sadd.s32 %s211, 1
      %p215 = scmp.eq.s32.totalorder %s30, 1
      %p216 = scmp.ne.s32.totalorder %s211, %s213
      %p217 = scmp.eq.s32.totalorder %s30, 0
      %p218 = por %p216, %p217
      %p219 = scmp.ne.s32.totalorder %s211, %s213
      %p220 = scmp.eq.s32.totalorder %s35, 1
      %p221 = por %p219, %p220
      %p222 = scmp.ne.s32.totalorder %s213, %s214
      %p223 = scmp.eq.s32.totalorder %s35, 0
      %p224 = por %p222, %p223
      %p225 = scmp.ne.s32.totalorder %s213, %s214
      %p226 = scmp.eq.s32.totalorder %s36, 1
      %p227 = por %p225, %p226
      %p229 = scmp.ne.s32.totalorder %s214, %s228
      %p230 = scmp.eq.s32.totalorder %s36, 0
      %p231 = por %p229, %p230
      %s233 = sadd.s32 %s232, 1
      %p236 = scmp.eq.s32.totalorder %s30, 1
      %p237 = scmp.ne.s32.totalorder %s232, %s234
      %p238 = scmp.eq.s32.totalorder %s30, 0
      %p239 = por %p237, %p238
      %p240 = scmp.ne.s32.totalorder %s232, %s234
      %p241 = scmp.eq.s32.totalorder %s35, 1
      %p242 = por %p240, %p241
      %p243 = scmp.ne.s32.totalorder %s234, %s235
      %p244 = scmp.eq.s32.totalorder %s35, 0
      %p245 = por %p243, %p244
      %p246 = scmp.ne.s32.totalorder %s234, %s235
      %p247 = scmp.eq.s32.totalorder %s36, 1
      %p248 = por %p246, %p247
      %p250 = scmp.ne.s32.totalorder %s235, %s249
      %p251 = scmp.eq.s32.totalorder %s36, 0
      %p252 = por %p250, %p251
      %s254 = sadd.s32 %s253, 1
      %p257 = scmp.eq.s32.totalorder %s30, 1
      %p258 = scmp.ne.s32.totalorder %s253, %s255
      %p259 = scmp.eq.s32.totalorder %s30, 0
      %p260 = por %p258, %p259
      %p261 = scmp.ne.s32.totalorder %s253, %s255
      %p262 = scmp.eq.s32.totalorder %s35, 1
      %p263 = por %p261, %p262
      %p264 = scmp.ne.s32.totalorder %s255, %s256
      %p265 = scmp.eq.s32.totalorder %s35, 0
      %p266 = por %p264, %p265
      %p267 = scmp.ne.s32.totalorder %s255, %s256
      %p268 = scmp.eq.s32.totalorder %s36, 1
      %p269 = por %p267, %p268
      %p271 = scmp.ne.s32.totalorder %s256, %s270
      %p272 = scmp.eq.s32.totalorder %s36, 0
      %p273 = por %p271, %p272
      %s275 = sadd.s32 %s274, 1
      %p278 = scmp.eq.s32.totalorder %s30, 1
      %p279 = scmp.ne.s32.totalorder %s274, %s276
      %p280 = scmp.eq.s32.totalorder %s30, 0
      %p281 = por %p279, %p280
      %p282 = scmp.ne.s32.totalorder %s274, %s276
      %p283 = scmp.eq.s32.totalorder %s35, 1
      %p284 = por %p282, %p283
      %p285 = scmp.ne.s32.totalorder %s276, %s277
      %p286 = scmp.eq.s32.totalorder %s35, 0
      %p287 = por %p285, %p286
      %p288 = scmp.ne.s32.totalorder %s276, %s277
      %p289 = scmp.eq.s32.totalorder %s36, 1
      %p290 = por %p288, %p289
      %p292 = scmp.ne.s32.totalorder %s277, %s291
      %p293 = scmp.eq.s32.totalorder %s36, 0
      %p294 = por %p292, %p293
      %s295 = ssub.s32 %s30, %s37
      %p296 = scmp.eq.s32.totalorder %s295, 0
      %s298 = sadd.s32 %s297, 1
      %s299 = scalar_select %p296, %s297, %s298
      %p302 = pneg %p296
      %p303 = scmp.eq.s32.totalorder %s30, 1
      %p304 = por %p302, %p303
      %p305 = scmp.ne.s32.totalorder %s297, %s300
      %p306 = scmp.eq.s32.totalorder %s30, 0
      %p307 = por %p305, %p306
      %p308 = scmp.ne.s32.totalorder %s297, %s300
      %p309 = scmp.eq.s32.totalorder %s35, 1
      %p310 = por %p308, %p309
      %p311 = scmp.ne.s32.totalorder %s300, %s301
      %p312 = scmp.eq.s32.totalorder %s35, 0
      %p313 = por %p311, %p312
      %p314 = scmp.ne.s32.totalorder %s300, %s301
      %p315 = scmp.eq.s32.totalorder %s36, 1
      %p316 = por %p314, %p315
      %p318 = scmp.ne.s32.totalorder %s301, %s317
      %p319 = scmp.eq.s32.totalorder %s36, 0
      %p320 = por %p318, %p319
      %p321 = scmp.le.s32.totalorder 1, %s30
      %p322 = scmp.lt.s32.totalorder %s30, 3
      %p323 = pnand %p321, %p322
      %p324 = pneg %p323
      // Predicated region
      $region9: #{tpu_custom_call.1} parent=5 // pred_check
        _
      $region10: #{tpu_custom_call.1} parent=5 // pred_check_branch
        %326 = sbr.rel (%p323) target = $region12
      $region11: #{tpu_custom_call.1} parent=5 // pred_region
        %s327 = ssub.s32 %s30, 1
        // Predicated region
        $region13: #{tpu_custom_call.1} parent=11 // pred_check
          %p328 = pneg %p77
        $region14: #{tpu_custom_call.1} parent=11 // pred_check_branch
          %330 = sbr.rel (%p328) target = $region16
        $region15: #{tpu_custom_call.1} parent=11 // pred_region
          %s332 = ssub.s32 16, 16
          %333 = vsyncadd [#allocation6], %s332
          %s335 = sshll.u32 [#allocation5], 4
          %s336 = int_to_ptr.vmem [resolvable:$true] %s335
          %338 = dma.hbm_to_vmem [thread:$0]  %s1, 16, %s336, [#allocation6]
        $region16: #{tpu_custom_call.1} parent=11 // pred_fallthru
          _
        // Predicated region
        $region17: #{tpu_custom_call.1} parent=11 // pred_check
          %p339 = pneg %p98
        $region18: #{tpu_custom_call.1} parent=11 // pred_check_branch
          %341 = sbr.rel (%p339) target = $region20
        $region19: #{tpu_custom_call.1} parent=11 // pred_region
          %s343 = ssub.s32 16, 16
          %344 = vsyncadd [#allocation6], %s343
          %s346 = sshll.u32 [#allocation7], 4
          %s347 = int_to_ptr.vmem [resolvable:$true] %s346
          %349 = dma.hbm_to_vmem [thread:$0]  %s2, 16, %s347, [#allocation6]
        $region20: #{tpu_custom_call.1} parent=11 // pred_fallthru
          _
        // Predicated region
        $region21: #{tpu_custom_call.1} parent=11 // pred_check
          %p350 = pneg %p119
        $region22: #{tpu_custom_call.1} parent=11 // pred_check_branch
          %352 = sbr.rel (%p350) target = $region24
        $region23: #{tpu_custom_call.1} parent=11 // pred_region
          %s354 = ssub.s32 256, 256
          %355 = vsyncadd [#allocation9], %s354
          %s356 = sshll.u32 [#allocation8], 4
          %s357 = int_to_ptr.vmem [resolvable:$true] %s356
          %362 = dma.hbm_to_vmem [thread:$0]  %s3, 256, %s357, [#allocation9], 64, 64, 4
        $region24: #{tpu_custom_call.1} parent=11 // pred_fallthru
          _
        // Predicated region
        $region25: #{tpu_custom_call.1} parent=11 // pred_check
          %p363 = pneg %p140
        $region26: #{tpu_custom_call.1} parent=11 // pred_check_branch
          %365 = sbr.rel (%p363) target = $region28
        $region27: #{tpu_custom_call.1} parent=11 // pred_region
          %s367 = ssub.s32 256, 256
          %368 = vsyncadd [#allocation9], %s367
          %s369 = sshll.u32 [#allocation10], 4
          %s370 = int_to_ptr.vmem [resolvable:$true] %s369
          %375 = dma.hbm_to_vmem [thread:$0]  %s4, 256, %s370, [#allocation9], 64, 64, 4
        $region28: #{tpu_custom_call.1} parent=11 // pred_fallthru
          _
        // Predicated region
        $region29: #{tpu_custom_call.1} parent=11 // pred_check
          %p376 = pneg %p161
        $region30: #{tpu_custom_call.1} parent=11 // pred_check_branch
          %378 = sbr.rel (%p376) target = $region32
        $region31: #{tpu_custom_call.1} parent=11 // pred_region
          %s380 = ssub.s32 16, 16
          %381 = vsyncadd [#allocation12], %s380
          %s383 = sshll.u32 [#allocation11], 4
          %s384 = int_to_ptr.vmem [resolvable:$true] %s383
          %386 = dma.hbm_to_vmem [thread:$0]  %s5, 16, %s384, [#allocation12]
        $region32: #{tpu_custom_call.1} parent=11 // pred_fallthru
          _
        // Predicated region
        $region33: #{tpu_custom_call.1} parent=11 // pred_check
          %p387 = pneg %p182
        $region34: #{tpu_custom_call.1} parent=11 // pred_check_branch
          %389 = sbr.rel (%p387) target = $region36
        $region35: #{tpu_custom_call.1} parent=11 // pred_region
          %s391 = ssub.s32 16, 16
          %392 = vsyncadd [#allocation12], %s391
          %s394 = sshll.u32 [#allocation13], 4
          %s395 = int_to_ptr.vmem [resolvable:$true] %s394
          %397 = dma.hbm_to_vmem [thread:$0]  %s6, 16, %s395, [#allocation12]
        $region36: #{tpu_custom_call.1} parent=11 // pred_fallthru
          _
        // Predicated region
        $region37: #{tpu_custom_call.1} parent=11 // pred_check
          %p398 = pneg %p203
        $region38: #{tpu_custom_call.1} parent=11 // pred_check_branch
          %400 = sbr.rel (%p398) target = $region40
        $region39: #{tpu_custom_call.1} parent=11 // pred_region
          %s402 = ssub.s32 16, 16
          %403 = vsyncadd [#allocation15], %s402
          %s405 = sshll.u32 [#allocation14], 4
          %s406 = int_to_ptr.vmem [resolvable:$true] %s405
          %408 = dma.hbm_to_vmem [thread:$0]  %s7, 16, %s406, [#allocation15]
        $region40: #{tpu_custom_call.1} parent=11 // pred_fallthru
          _
        // Predicated region
        $region41: #{tpu_custom_call.1} parent=11 // pred_check
          %p409 = pneg %p224
        $region42: #{tpu_custom_call.1} parent=11 // pred_check_branch
          %411 = sbr.rel (%p409) target = $region44
        $region43: #{tpu_custom_call.1} parent=11 // pred_region
          %s413 = ssub.s32 256, 256
          %414 = vsyncadd [#allocation15], %s413
          %s415 = sshll.u32 [#allocation16], 4
          %s416 = int_to_ptr.vmem [resolvable:$true] %s415
          %421 = dma.hbm_to_vmem [thread:$0]  %s8, 256, %s416, [#allocation15], 64, 64, 4
        $region44: #{tpu_custom_call.1} parent=11 // pred_fallthru
          _
        // Predicated region
        $region45: #{tpu_custom_call.1} parent=11 // pred_check
          %p422 = pneg %p245
        $region46: #{tpu_custom_call.1} parent=11 // pred_check_branch
          %424 = sbr.rel (%p422) target = $region48
        $region47: #{tpu_custom_call.1} parent=11 // pred_region
          %s426 = ssub.s32 16, 16
          %427 = vsyncadd [#allocation18], %s426
          %s429 = sshll.u32 [#allocation17], 4
          %s430 = int_to_ptr.vmem [resolvable:$true] %s429
          %432 = dma.hbm_to_vmem [thread:$0]  %s9, 16, %s430, [#allocation18]
        $region48: #{tpu_custom_call.1} parent=11 // pred_fallthru
          _
        // Predicated region
        $region49: #{tpu_custom_call.1} parent=11 // pred_check
          %p433 = pneg %p266
        $region50: #{tpu_custom_call.1} parent=11 // pred_check_branch
          %435 = sbr.rel (%p433) target = $region52
        $region51: #{tpu_custom_call.1} parent=11 // pred_region
          %s437 = ssub.s32 512, 512
          %438 = vsyncadd [#allocation18], %s437
          %s439 = sshll.u32 [#allocation19], 4
          %s440 = int_to_ptr.vmem [resolvable:$true] %s439
          %445 = dma.hbm_to_vmem [thread:$0]  %s10, 512, %s440, [#allocation18], 64, 64, 4
        $region52: #{tpu_custom_call.1} parent=11 // pred_fallthru
          _
        // Predicated region
        $region53: #{tpu_custom_call.1} parent=11 // pred_check
          %p446 = pneg %p287
        $region54: #{tpu_custom_call.1} parent=11 // pred_check_branch
          %448 = sbr.rel (%p446) target = $region56
        $region55: #{tpu_custom_call.1} parent=11 // pred_region
          %s450 = ssub.s32 16, 16
          %451 = vsyncadd [#allocation21], %s450
          %s453 = sshll.u32 [#allocation20], 4
          %s454 = int_to_ptr.vmem [resolvable:$true] %s453
          %456 = dma.hbm_to_vmem [thread:$0]  %s11, 16, %s454, [#allocation21]
        $region56: #{tpu_custom_call.1} parent=11 // pred_fallthru
          _
      $region12: #{tpu_custom_call.1} parent=5 // pred_fallthru
        _
      %p457 = scmp.lt.s32.totalorder %s30, 2
      // Predicated region
      $region57: #{tpu_custom_call.1} parent=5 // pred_check
        %p458 = pneg %p457
      $region58: #{tpu_custom_call.1} parent=5 // pred_check_branch
        %460 = sbr.rel (%p458) target = $region60
      $region59: #{tpu_custom_call.1} parent=5 // pred_region
        // Predicated region
        $region61: #{tpu_custom_call.1} parent=59 // pred_check
          %p461 = pneg %p50
        $region62: #{tpu_custom_call.1} parent=59 // pred_check_branch
          %463 = sbr.rel (%p461) target = $region64
        $region63: #{tpu_custom_call.1} parent=59 // pred_region
          %s464 = sand.u32 %s40, 1
          %s465 = scalar_lea.sflag [#allocation3], %s464
          %s466 = sand.u32 %s40, 1
          %s467 = smul.addr %s466, 8
          %s468 = scalar_lea.vmem [#allocation2], %s467
          %s470 = ssub.s32 128, 128
          %471 = vsyncadd %s465, %s470
          %s472 = smul.addr %s30, 128
          %s473 = scalar_lea.hbm %s0, %s472
          %s475 = sshll.u32 %s468, 4
          %s476 = int_to_ptr.vmem [resolvable:$true] %s475
          %478 = dma.hbm_to_vmem [thread:$0]  %s473, 128, %s476, %s465
        $region64: #{tpu_custom_call.1} parent=59 // pred_fallthru
          _
      $region60: #{tpu_custom_call.1} parent=5 // pred_fallthru
        _
      %p479 = scmp.le.s32.totalorder 1, %s30
      %p480 = scmp.lt.s32.totalorder %s30, 3
      %p481 = pnand %p479, %p480
      %p482 = pneg %p481
      // Predicated region
      $region65: #{tpu_custom_call.1} parent=5 // pred_check
        _
      $region66: #{tpu_custom_call.1} parent=5 // pred_check_branch
        %484 = sbr.rel (%p481) target = $region68
      $region67: #{tpu_custom_call.1} parent=5 // pred_region
        %s485 = ssub.s32 %s30, 1
        %s486 = sand.u32 %s43, 1
        %s487 = scalar_lea.sflag [#allocation3], %s486
        %s488 = sand.u32 %s43, 1
        %s489 = smul.addr %s488, 8
        %s490 = scalar_lea.vmem [#allocation2], %s489
        // Predicated region
        $region69: #{tpu_custom_call.1} parent=67 // pred_check
          %p491 = pneg %p56
        $region70: #{tpu_custom_call.1} parent=67 // pred_check_branch
          %493 = sbr.rel (%p491) target = $region72
        $region71: #{tpu_custom_call.1} parent=67 // pred_region
          %494 = dma.done %s487, 128
        $region72: #{tpu_custom_call.1} parent=67 // pred_fallthru
          _
        // Predicated region
        $region73: #{tpu_custom_call.1} parent=67 // pred_check
          %p495 = pneg %p77
        $region74: #{tpu_custom_call.1} parent=67 // pred_check_branch
          %497 = sbr.rel (%p495) target = $region76
        $region75: #{tpu_custom_call.1} parent=67 // pred_region
          %498 = dma.done [#allocation6], 16
        $region76: #{tpu_custom_call.1} parent=67 // pred_fallthru
          _
        // Predicated region
        $region77: #{tpu_custom_call.1} parent=67 // pred_check
          %p499 = pneg %p98
        $region78: #{tpu_custom_call.1} parent=67 // pred_check_branch
          %501 = sbr.rel (%p499) target = $region80
        $region79: #{tpu_custom_call.1} parent=67 // pred_region
          %502 = dma.done [#allocation6], 16
        $region80: #{tpu_custom_call.1} parent=67 // pred_fallthru
          _
        // Predicated region
        $region81: #{tpu_custom_call.1} parent=67 // pred_check
          %p503 = pneg %p119
        $region82: #{tpu_custom_call.1} parent=67 // pred_check_branch
          %505 = sbr.rel (%p503) target = $region84
        $region83: #{tpu_custom_call.1} parent=67 // pred_region
          %506 = dma.done [#allocation9], 256
        $region84: #{tpu_custom_call.1} parent=67 // pred_fallthru
          _
        // Predicated region
        $region85: #{tpu_custom_call.1} parent=67 // pred_check
          %p507 = pneg %p140
        $region86: #{tpu_custom_call.1} parent=67 // pred_check_branch
          %509 = sbr.rel (%p507) target = $region88
        $region87: #{tpu_custom_call.1} parent=67 // pred_region
          %510 = dma.done [#allocation9], 256
        $region88: #{tpu_custom_call.1} parent=67 // pred_fallthru
          _
        // Predicated region
        $region89: #{tpu_custom_call.1} parent=67 // pred_check
          %p511 = pneg %p161
        $region90: #{tpu_custom_call.1} parent=67 // pred_check_branch
          %513 = sbr.rel (%p511) target = $region92
        $region91: #{tpu_custom_call.1} parent=67 // pred_region
          %514 = dma.done [#allocation12], 16
        $region92: #{tpu_custom_call.1} parent=67 // pred_fallthru
          _
        // Predicated region
        $region93: #{tpu_custom_call.1} parent=67 // pred_check
          %p515 = pneg %p182
        $region94: #{tpu_custom_call.1} parent=67 // pred_check_branch
          %517 = sbr.rel (%p515) target = $region96
        $region95: #{tpu_custom_call.1} parent=67 // pred_region
          %518 = dma.done [#allocation12], 16
        $region96: #{tpu_custom_call.1} parent=67 // pred_fallthru
          _
        // Predicated region
        $region97: #{tpu_custom_call.1} parent=67 // pred_check
          %p519 = pneg %p203
        $region98: #{tpu_custom_call.1} parent=67 // pred_check_branch
          %521 = sbr.rel (%p519) target = $region100
        $region99: #{tpu_custom_call.1} parent=67 // pred_region
          %522 = dma.done [#allocation15], 16
        $region100: #{tpu_custom_call.1} parent=67 // pred_fallthru
          _
        // Predicated region
        $region101: #{tpu_custom_call.1} parent=67 // pred_check
          %p523 = pneg %p224
        $region102: #{tpu_custom_call.1} parent=67 // pred_check_branch
          %525 = sbr.rel (%p523) target = $region104
        $region103: #{tpu_custom_call.1} parent=67 // pred_region
          %526 = dma.done [#allocation15], 256
        $region104: #{tpu_custom_call.1} parent=67 // pred_fallthru
          _
        // Predicated region
        $region105: #{tpu_custom_call.1} parent=67 // pred_check
          %p527 = pneg %p245
        $region106: #{tpu_custom_call.1} parent=67 // pred_check_branch
          %529 = sbr.rel (%p527) target = $region108
        $region107: #{tpu_custom_call.1} parent=67 // pred_region
          %530 = dma.done [#allocation18], 16
        $region108: #{tpu_custom_call.1} parent=67 // pred_fallthru
          _
        // Predicated region
        $region109: #{tpu_custom_call.1} parent=67 // pred_check
          %p531 = pneg %p266
        $region110: #{tpu_custom_call.1} parent=67 // pred_check_branch
          %533 = sbr.rel (%p531) target = $region112
        $region111: #{tpu_custom_call.1} parent=67 // pred_region
          %534 = dma.done [#allocation18], 512
        $region112: #{tpu_custom_call.1} parent=67 // pred_fallthru
          _
        // Predicated region
        $region113: #{tpu_custom_call.1} parent=67 // pred_check
          %p535 = pneg %p287
        $region114: #{tpu_custom_call.1} parent=67 // pred_check_branch
          %537 = sbr.rel (%p535) target = $region116
        $region115: #{tpu_custom_call.1} parent=67 // pred_region
          %538 = dma.done [#allocation21], 16
        $region116: #{tpu_custom_call.1} parent=67 // pred_fallthru
          _
        %s539 = sand.u32 %s43, 1
        %s540 = scalar_lea.sflag [#allocation3], %s539
        %s541 = sand.u32 %s43, 1
        %s542 = smul.addr %s541, 8
        %s543 = scalar_lea.vmem [#allocation2], %s542
        %p544 = pneg %p56
        %p545 = pneg %p53
        %p546 = pneg %p77
        %p547 = pneg %p74
        %p548 = pneg %p98
        %p549 = pneg %p95
        %p550 = pneg %p119
        %p551 = pneg %p116
        %p552 = pneg %p140
        %p553 = pneg %p137
        %p554 = pneg %p161
        %p555 = pneg %p158
        %p556 = pneg %p182
        %p557 = pneg %p179
        %p558 = pneg %p203
        %p559 = pneg %p200
        %p560 = pneg %p224
        %p561 = pneg %p221
        %p562 = pneg %p245
        %p563 = pneg %p242
        %p564 = pneg %p266
        %p565 = pneg %p263
        %p566 = pneg %p287
        %p567 = pneg %p284
        %p568 = pneg %p313
        %p569 = pneg %p310
        %s570 = sand.u32 %s300, 1
        %s571 = scalar_lea.sflag [#allocation4], %s570
        %s572 = sand.u32 %s300, 1
        %s573 = smul.addr %s572, 8
        %s574 = scalar_lea.vmem [#allocation22], %s573
        %v576 = vld [vmem:[%s490] sm:$0xff]
        %v577 = vld [vmem:[#allocation5] sm:$0x1]
        %v578 = vld [vmem:[#allocation7] sm:$0x1]
        %vm579 = vcmask 261120
        %v580 = vsel %vm579, %v576, 0.0
        %581 = vadd.xlane.f32.xlu0 %v580
        %v582 = vpop.xlane.xlu0 %581
        %v583 = vrcp.pop 32.0
        %v584 = vmul.f32 %v582, %v583
        %v585 = vsub.f32 %v576, %v584
        %v586 = vmul.f32 %v585, %v585
        %v587 = vsel %vm579, %v586, 0.0
        %588 = vadd.xlane.f32.xlu0 %v587
        %v589 = vpop.xlane.xlu0 %588
        %v590 = vmul.f32 %v589, %v583
        %v591 = vadd.f32 %v590, 1e-05
        %v592 = vrsqrt.pop %v591
        %v593 = vmul.f32 %v585, %v592
        %v595 = vlaneseq
        %v596 = vshrl.u32 %v595, 7
        %v597 = vsub.s32 0, %v596
        %v598 = vrot.slane %v577, %v597
        %v600 = vmul.f32 %v593, %v598
        %v602 = vlaneseq
        %v603 = vshrl.u32 %v602, 7
        %v604 = vsub.s32 0, %v603
        %v605 = vrot.slane %v578, %v604
        %v607 = vadd.f32 %v600, %v605
        %v608 = vpack.c.bf16 %v607, %v607
        %v609 = vld [vmem:[#allocation8] sm:$0xf]
        %v610 = vld [vmem:[#allocation8 + $0x4] sm:$0xf]
        %v611 = vld [vmem:[#allocation8 + $0x8] sm:$0xf]
        %v612 = vld [vmem:[#allocation8 + $0xc] sm:$0xf]
        %v617 = vunpack.c.l.b16 %v609
        %v618 = vunpack.c.l.b16 %v610
        %v619 = vunpack.c.l.b16 %v611
        %v620 = vunpack.c.l.b16 %v612
        %v621 = vpack.c.b16 %v618, %v617
        %v622 = vpack.c.b16 %v620, %v619
        %v626 = vsel %vm579, %v608, 0
        %628 = vmatprep.subr.bf16.mxu0 0
        %629 = vmatpush1.bf16.msra.mxu0 %v621
        %630 = vmatprep.subr.bf16.mxu0 0
        %631 = vmatpush1.bf16.msra.mxu0 %v622
        %632 = vmatprep.subr.bf16.mxu0 0
        %633 = vmatpush1.bf16.msra.mxu0 0
        %634 = vmatprep.subr.bf16.mxu0 0
        %635 = vmatpush1.bf16.msra.mxu0 0
        %636 = vmatprep.subr.bf16.mxu0 0
        %637 = vmatpush1.bf16.msra.mxu0 0
        %638 = vmatprep.subr.bf16.mxu0 0
        %639 = vmatpush1.bf16.msra.mxu0 0
        %640 = vmatprep.subr.bf16.mxu0 0
        %641 = vmatpush1.bf16.msra.mxu0 0
        %642 = vmatprep.subr.bf16.mxu0 0
        %643 = vmatpush1.bf16.msra.mxu0 0
        %644 = vmatprep.subr.bf16.mxu0 0
        %645 = vmatpush1.bf16.msra.mxu0 0
        %646 = vmatprep.subr.bf16.mxu0 0
        %647 = vmatpush1.bf16.msra.mxu0 0
        %648 = vmatprep.subr.bf16.mxu0 0
        %649 = vmatpush1.bf16.msra.mxu0 0
        %650 = vmatprep.subr.bf16.mxu0 0
        %651 = vmatpush1.bf16.msra.mxu0 0
        %652 = vmatprep.subr.bf16.mxu0 0
        %653 = vmatpush1.bf16.msra.mxu0 0
        %654 = vmatprep.subr.bf16.mxu0 0
        %655 = vmatpush1.bf16.msra.mxu0 0
        %656 = vmatprep.subr.bf16.mxu0 0
        %657 = vmatpush1.bf16.msra.mxu0 0
        %658 = vmatprep.subr.bf16.mxu0 0
        %659 = vmatpush1.bf16.msra.mxu0 0
        %660 = vmatprep.mubr.bf16.mxu0 0
        %661 = vmatmul.mubr.bf16.gmra.mrb[0].mxu0 %v626
        %v662 = vpop.f32.mrb[0].mxu0
        %v663 = vadd.f32 0.0, %v662
        %v664 = vpop.f32.mrb[0].mxu0
        %v665 = vpop.f32.mrb[0].mxu0
        %v666 = vpop.f32.mrb[0].mxu0
        %667 = vdwg.mxu0
        %v668 = vpack.c.bf16 %v663, %v663
        %670 = vrot.lane.b32.xlu0 %v668, 120
        %v671 = vpop.permute.xlu0 %670
        %672 = vrot.lane.b32.xlu0 %v668, 112
        %v673 = vpop.permute.xlu0 %672
        %674 = vrot.lane.b32.xlu0 %v668, 104
        %v675 = vpop.permute.xlu0 %674
        %676 = vrot.lane.b32.xlu0 %v668, 96
        %v677 = vpop.permute.xlu0 %676
        %vm678 = vcmask 64512
        %v680 = vsel %vm678, %v668, 0
        %v683 = vsel %vm678, %v677, 0
        %685 = vmatprep.subr.bf16.mxu0 0
        %686 = vmatpush1.bf16.xpose.msra.mxu0 %v683
        %687 = vmatprep.subr.bf16.mxu0 0
        %688 = vmatpush1.bf16.xpose.msra.mxu0 0
        %689 = vmatprep.subr.bf16.mxu0 0
        %690 = vmatpush1.bf16.xpose.msra.mxu0 0
        %691 = vmatprep.subr.bf16.mxu0 0
        %692 = vmatpush1.bf16.xpose.msra.mxu0 0
        %693 = vmatprep.subr.bf16.mxu0 0
        %694 = vmatpush1.bf16.xpose.msra.mxu0 0
        %695 = vmatprep.subr.bf16.mxu0 0
        %696 = vmatpush1.bf16.xpose.msra.mxu0 0
        %697 = vmatprep.subr.bf16.mxu0 0
        %698 = vmatpush1.bf16.xpose.msra.mxu0 0
        %699 = vmatprep.subr.bf16.mxu0 0
        %700 = vmatpush1.bf16.xpose.msra.mxu0 0
        %701 = vmatprep.subr.bf16.mxu0 0
        %702 = vmatpush1.bf16.xpose.msra.mxu0 0
        %703 = vmatprep.subr.bf16.mxu0 0
        %704 = vmatpush1.bf16.xpose.msra.mxu0 0
        %705 = vmatprep.subr.bf16.mxu0 0
        %706 = vmatpush1.bf16.xpose.msra.mxu0 0
        %707 = vmatprep.subr.bf16.mxu0 0
        %708 = vmatpush1.bf16.xpose.msra.mxu0 0
        %709 = vmatprep.subr.bf16.mxu0 0
        %710 = vmatpush1.bf16.xpose.msra.mxu0 0
        %711 = vmatprep.subr.bf16.mxu0 0
        %712 = vmatpush1.bf16.xpose.msra.mxu0 0
        %713 = vmatprep.subr.bf16.mxu0 0
        %714 = vmatpush1.bf16.xpose.msra.mxu0 0
        %715 = vmatprep.subr.bf16.mxu0 0
        %716 = vmatpush1.bf16.xpose.msra.mxu0 0
        %717 = vmatprep.mubr.bf16.mxu0 0
        %718 = vmatmul.mubr.bf16.gmra.mrb[0].mxu0 %v680
        %v719 = vpop.f32.mrb[0].mxu0
        %v720 = vadd.f32 0.0, %v719
        %v721 = vpop.f32.mrb[0].mxu0
        %v722 = vpop.f32.mrb[0].mxu0
        %v723 = vpop.f32.mrb[0].mxu0
        %724 = vdwg.mxu0
        %725 = vrot.lane.b32.xlu0 %v671, 96
        %v726 = vpop.permute.xlu0 %725
        %v728 = vsel %vm678, %v671, 0
        %v731 = vsel %vm678, %v726, 0
        %733 = vmatprep.subr.bf16.mxu0 0
        %734 = vmatpush1.bf16.xpose.msra.mxu0 %v731
        %735 = vmatprep.subr.bf16.mxu0 0
        %736 = vmatpush1.bf16.xpose.msra.mxu0 0
        %737 = vmatprep.subr.bf16.mxu0 0
        %738 = vmatpush1.bf16.xpose.msra.mxu0 0
        %739 = vmatprep.subr.bf16.mxu0 0
        %740 = vmatpush1.bf16.xpose.msra.mxu0 0
        %741 = vmatprep.subr.bf16.mxu0 0
        %742 = vmatpush1.bf16.xpose.msra.mxu0 0
        %743 = vmatprep.subr.bf16.mxu0 0
        %744 = vmatpush1.bf16.xpose.msra.mxu0 0
        %745 = vmatprep.subr.bf16.mxu0 0
        %746 = vmatpush1.bf16.xpose.msra.mxu0 0
        %747 = vmatprep.subr.bf16.mxu0 0
        %748 = vmatpush1.bf16.xpose.msra.mxu0 0
        %749 = vmatprep.subr.bf16.mxu0 0
        %750 = vmatpush1.bf16.xpose.msra.mxu0 0
        %751 = vmatprep.subr.bf16.mxu0 0
        %752 = vmatpush1.bf16.xpose.msra.mxu0 0
        %753 = vmatprep.subr.bf16.mxu0 0
        %754 = vmatpush1.bf16.xpose.msra.mxu0 0
        %755 = vmatprep.subr.bf16.mxu0 0
        %756 = vmatpush1.bf16.xpose.msra.mxu0 0
        %757 = vmatprep.subr.bf16.mxu0 0
        %758 = vmatpush1.bf16.xpose.msra.mxu0 0
        %759 = vmatprep.subr.bf16.mxu0 0
        %760 = vmatpush1.bf16.xpose.msra.mxu0 0
        %761 = vmatprep.subr.bf16.mxu0 0
        %762 = vmatpush1.bf16.xpose.msra.mxu0 0
        %763 = vmatprep.subr.bf16.mxu0 0
        %764 = vmatpush1.bf16.xpose.msra.mxu0 0
        %765 = vmatprep.mubr.bf16.mxu0 0
        %766 = vmatmul.mubr.bf16.gmra.mrb[0].mxu0 %v728
        %v767 = vpop.f32.mrb[0].mxu0
        %v768 = vadd.f32 0.0, %v767
        %v769 = vpop.f32.mrb[0].mxu0
        %v770 = vpop.f32.mrb[0].mxu0
        %v771 = vpop.f32.mrb[0].mxu0
        %772 = vdwg.mxu0
        %773 = vrot.lane.b32.xlu0 %v673, 96
        %v774 = vpop.permute.xlu0 %773
        %v776 = vsel %vm678, %v673, 0
        %v779 = vsel %vm678, %v774, 0
        %781 = vmatprep.subr.bf16.mxu0 0
        %782 = vmatpush1.bf16.xpose.msra.mxu0 %v779
        %783 = vmatprep.subr.bf16.mxu0 0
        %784 = vmatpush1.bf16.xpose.msra.mxu0 0
        %785 = vmatprep.subr.bf16.mxu0 0
        %786 = vmatpush1.bf16.xpose.msra.mxu0 0
        %787 = vmatprep.subr.bf16.mxu0 0
        %788 = vmatpush1.bf16.xpose.msra.mxu0 0
        %789 = vmatprep.subr.bf16.mxu0 0
        %790 = vmatpush1.bf16.xpose.msra.mxu0 0
        %791 = vmatprep.subr.bf16.mxu0 0
        %792 = vmatpush1.bf16.xpose.msra.mxu0 0
        %793 = vmatprep.subr.bf16.mxu0 0
        %794 = vmatpush1.bf16.xpose.msra.mxu0 0
        %795 = vmatprep.subr.bf16.mxu0 0
        %796 = vmatpush1.bf16.xpose.msra.mxu0 0
        %797 = vmatprep.subr.bf16.mxu0 0
        %798 = vmatpush1.bf16.xpose.msra.mxu0 0
        %799 = vmatprep.subr.bf16.mxu0 0
        %800 = vmatpush1.bf16.xpose.msra.mxu0 0
        %801 = vmatprep.subr.bf16.mxu0 0
        %802 = vmatpush1.bf16.xpose.msra.mxu0 0
        %803 = vmatprep.subr.bf16.mxu0 0
        %804 = vmatpush1.bf16.xpose.msra.mxu0 0
        %805 = vmatprep.subr.bf16.mxu0 0
        %806 = vmatpush1.bf16.xpose.msra.mxu0 0
        %807 = vmatprep.subr.bf16.mxu0 0
        %808 = vmatpush1.bf16.xpose.msra.mxu0 0
        %809 = vmatprep.subr.bf16.mxu0 0
        %810 = vmatpush1.bf16.xpose.msra.mxu0 0
        %811 = vmatprep.subr.bf16.mxu0 0
        %812 = vmatpush1.bf16.xpose.msra.mxu0 0
        %813 = vmatprep.mubr.bf16.mxu0 0
        %814 = vmatmul.mubr.bf16.gmra.mrb[0].mxu0 %v776
        %v815 = vpop.f32.mrb[0].mxu0
        %v816 = vadd.f32 0.0, %v815
        %v817 = vpop.f32.mrb[0].mxu0
        %v818 = vpop.f32.mrb[0].mxu0
        %v819 = vpop.f32.mrb[0].mxu0
        %820 = vdwg.mxu0
        %821 = vrot.lane.b32.xlu0 %v675, 96
        %v822 = vpop.permute.xlu0 %821
        %v824 = vsel %vm678, %v675, 0
        %v827 = vsel %vm678, %v822, 0
        %829 = vmatprep.subr.bf16.mxu0 0
        %830 = vmatpush1.bf16.xpose.msra.mxu0 %v827
        %831 = vmatprep.subr.bf16.mxu0 0
        %832 = vmatpush1.bf16.xpose.msra.mxu0 0
        %833 = vmatprep.subr.bf16.mxu0 0
        %834 = vmatpush1.bf16.xpose.msra.mxu0 0
        %835 = vmatprep.subr.bf16.mxu0 0
        %836 = vmatpush1.bf16.xpose.msra.mxu0 0
        %837 = vmatprep.subr.bf16.mxu0 0
        %838 = vmatpush1.bf16.xpose.msra.mxu0 0
        %839 = vmatprep.subr.bf16.mxu0 0
        %840 = vmatpush1.bf16.xpose.msra.mxu0 0
        %841 = vmatprep.subr.bf16.mxu0 0
        %842 = vmatpush1.bf16.xpose.msra.mxu0 0
        %843 = vmatprep.subr.bf16.mxu0 0
        %844 = vmatpush1.bf16.xpose.msra.mxu0 0
        %845 = vmatprep.subr.bf16.mxu0 0
        %846 = vmatpush1.bf16.xpose.msra.mxu0 0
        %847 = vmatprep.subr.bf16.mxu0 0
        %848 = vmatpush1.bf16.xpose.msra.mxu0 0
        %849 = vmatprep.subr.bf16.mxu0 0
        %850 = vmatpush1.bf16.xpose.msra.mxu0 0
        %851 = vmatprep.subr.bf16.mxu0 0
        %852 = vmatpush1.bf16.xpose.msra.mxu0 0
        %853 = vmatprep.subr.bf16.mxu0 0
        %854 = vmatpush1.bf16.xpose.msra.mxu0 0
        %855 = vmatprep.subr.bf16.mxu0 0
        %856 = vmatpush1.bf16.xpose.msra.mxu0 0
        %857 = vmatprep.subr.bf16.mxu0 0
        %858 = vmatpush1.bf16.xpose.msra.mxu0 0
        %859 = vmatprep.subr.bf16.mxu0 0
        %860 = vmatpush1.bf16.xpose.msra.mxu0 0
        %861 = vmatprep.mubr.bf16.mxu0 0
        %862 = vmatmul.mubr.bf16.gmra.mrb[0].mxu0 %v824
        %v863 = vpop.f32.mrb[0].mxu0
        %v864 = vadd.f32 0.0, %v863
        %v865 = vpop.f32.mrb[0].mxu0
        %v866 = vpop.f32.mrb[0].mxu0
        %v867 = vpop.f32.mrb[0].mxu0
        %868 = vdwg.mxu0
        %v869 = vsel %vm678, %v720, -inf
        %870 = vmax.xlane.f32.xlu0 %v869
        %v871 = vpop.xlane.xlu0 %870
        %v872 = vsel %vm678, %v768, -inf
        %873 = vmax.xlane.f32.xlu0 %v872
        %v874 = vpop.xlane.xlu0 %873
        %v875 = vsel %vm678, %v816, -inf
        %876 = vmax.xlane.f32.xlu0 %v875
        %v877 = vpop.xlane.xlu0 %876
        %v878 = vsel %vm678, %v864, -inf
        %879 = vmax.xlane.f32.xlu0 %v878
        %v880 = vpop.xlane.xlu0 %879
        %v881 = vsub.f32 %v720, %v871
        %v882 = vsub.f32 %v768, %v874
        %v883 = vsub.f32 %v816, %v877
        %v884 = vsub.f32 %v864, %v880
        %v885 = vmul.f32 %v881, 1.442695
        %v886 = vpow.pop %v885
        %v887 = vmul.f32 %v882, 1.442695
        %v888 = vpow.pop %v887
        %v889 = vmul.f32 %v883, 1.442695
        %v890 = vpow.pop %v889
        %v891 = vmul.f32 %v884, 1.442695
        %v892 = vpow.pop %v891
        %v893 = vsel %vm678, %v886, 0.0
        %894 = vadd.xlane.f32.xlu0 %v893
        %v895 = vpop.xlane.xlu0 %894
        %v896 = vsel %vm678, %v888, 0.0
        %897 = vadd.xlane.f32.xlu0 %v896
        %v898 = vpop.xlane.xlu0 %897
        %v899 = vsel %vm678, %v890, 0.0
        %900 = vadd.xlane.f32.xlu0 %v899
        %v901 = vpop.xlane.xlu0 %900
        %v902 = vsel %vm678, %v892, 0.0
        %903 = vadd.xlane.f32.xlu0 %v902
        %v904 = vpop.xlane.xlu0 %903
        %v905 = vrcp.pop %v895
        %v906 = vrcp.pop %v898
        %v907 = vrcp.pop %v901
        %v908 = vrcp.pop %v904
        %v909 = vmul.f32 %v886, %v905
        %v910 = vmul.f32 %v888, %v906
        %v911 = vmul.f32 %v890, %v907
        %v912 = vmul.f32 %v892, %v908
        %v913 = vpack.c.bf16 %v909, %v909
        %v914 = vpack.c.bf16 %v910, %v910
        %v915 = vpack.c.bf16 %v911, %v911
        %v916 = vpack.c.bf16 %v912, %v912
        %917 = vrot.lane.b32.xlu0 %v668, 64
        %v918 = vpop.permute.xlu0 %917
        %v920 = vsel %vm678, %v913, 0
        %vm922 = vcmask 1043456
        %v924 = vsel %vm922, %v918, 0
        %926 = vmatprep.subr.bf16.mxu0 0
        %927 = vmatpush1.bf16.msra.mxu0 %v924
        %928 = vmatprep.subr.bf16.mxu0 0
        %929 = vmatpush1.bf16.msra.mxu0 0
        %930 = vmatprep.subr.bf16.mxu0 0
        %931 = vmatpush1.bf16.msra.mxu0 0
        %932 = vmatprep.subr.bf16.mxu0 0
        %933 = vmatpush1.bf16.msra.mxu0 0
        %934 = vmatprep.subr.bf16.mxu0 0
        %935 = vmatpush1.bf16.msra.mxu0 0
        %936 = vmatprep.subr.bf16.mxu0 0
        %937 = vmatpush1.bf16.msra.mxu0 0
        %938 = vmatprep.subr.bf16.mxu0 0
        %939 = vmatpush1.bf16.msra.mxu0 0
        %940 = vmatprep.subr.bf16.mxu0 0
        %941 = vmatpush1.bf16.msra.mxu0 0
        %942 = vmatprep.subr.bf16.mxu0 0
        %943 = vmatpush1.bf16.msra.mxu0 0
        %944 = vmatprep.subr.bf16.mxu0 0
        %945 = vmatpush1.bf16.msra.mxu0 0
        %946 = vmatprep.subr.bf16.mxu0 0
        %947 = vmatpush1.bf16.msra.mxu0 0
        %948 = vmatprep.subr.bf16.mxu0 0
        %949 = vmatpush1.bf16.msra.mxu0 0
        %950 = vmatprep.subr.bf16.mxu0 0
        %951 = vmatpush1.bf16.msra.mxu0 0
        %952 = vmatprep.subr.bf16.mxu0 0
        %953 = vmatpush1.bf16.msra.mxu0 0
        %954 = vmatprep.subr.bf16.mxu0 0
        %955 = vmatpush1.bf16.msra.mxu0 0
        %956 = vmatprep.subr.bf16.mxu0 0
        %957 = vmatpush1.bf16.msra.mxu0 0
        %958 = vmatprep.mubr.bf16.mxu0 0
        %959 = vmatmul.mubr.bf16.gmra.mrb[0].mxu0 %v920
        %v960 = vpop.f32.mrb[0].mxu0
        %v961 = vadd.f32 0.0, %v960
        %v962 = vpop.f32.mrb[0].mxu0
        %v963 = vpop.f32.mrb[0].mxu0
        %v964 = vpop.f32.mrb[0].mxu0
        %965 = vdwg.mxu0
        %966 = vrot.lane.b32.xlu0 %v671, 64
        %v967 = vpop.permute.xlu0 %966
        %v969 = vsel %vm678, %v914, 0
        %v972 = vsel %vm922, %v967, 0
        %974 = vmatprep.subr.bf16.mxu0 0
        %975 = vmatpush1.bf16.msra.mxu0 %v972
        %976 = vmatprep.subr.bf16.mxu0 0
        %977 = vmatpush1.bf16.msra.mxu0 0
        %978 = vmatprep.subr.bf16.mxu0 0
        %979 = vmatpush1.bf16.msra.mxu0 0
        %980 = vmatprep.subr.bf16.mxu0 0
        %981 = vmatpush1.bf16.msra.mxu0 0
        %982 = vmatprep.subr.bf16.mxu0 0
        %983 = vmatpush1.bf16.msra.mxu0 0
        %984 = vmatprep.subr.bf16.mxu0 0
        %985 = vmatpush1.bf16.msra.mxu0 0
        %986 = vmatprep.subr.bf16.mxu0 0
        %987 = vmatpush1.bf16.msra.mxu0 0
        %988 = vmatprep.subr.bf16.mxu0 0
        %989 = vmatpush1.bf16.msra.mxu0 0
        %990 = vmatprep.subr.bf16.mxu0 0
        %991 = vmatpush1.bf16.msra.mxu0 0
        %992 = vmatprep.subr.bf16.mxu0 0
        %993 = vmatpush1.bf16.msra.mxu0 0
        %994 = vmatprep.subr.bf16.mxu0 0
        %995 = vmatpush1.bf16.msra.mxu0 0
        %996 = vmatprep.subr.bf16.mxu0 0
        %997 = vmatpush1.bf16.msra.mxu0 0
        %998 = vmatprep.subr.bf16.mxu0 0
        %999 = vmatpush1.bf16.msra.mxu0 0
        %1000 = vmatprep.subr.bf16.mxu0 0
        %1001 = vmatpush1.bf16.msra.mxu0 0
        %1002 = vmatprep.subr.bf16.mxu0 0
        %1003 = vmatpush1.bf16.msra.mxu0 0
        %1004 = vmatprep.subr.bf16.mxu0 0
        %1005 = vmatpush1.bf16.msra.mxu0 0
        %1006 = vmatprep.mubr.bf16.mxu0 0
        %1007 = vmatmul.mubr.bf16.gmra.mrb[0].mxu0 %v969
        %v1008 = vpop.f32.mrb[0].mxu0
        %v1009 = vadd.f32 0.0, %v1008
        %v1010 = vpop.f32.mrb[0].mxu0
        %v1011 = vpop.f32.mrb[0].mxu0
        %v1012 = vpop.f32.mrb[0].mxu0
        %1013 = vdwg.mxu0
        %1014 = vrot.lane.b32.xlu0 %v673, 64
        %v1015 = vpop.permute.xlu0 %1014
        %v1017 = vsel %vm678, %v915, 0
        %v1020 = vsel %vm922, %v1015, 0
        %1022 = vmatprep.subr.bf16.mxu0 0
        %1023 = vmatpush1.bf16.msra.mxu0 %v1020
        %1024 = vmatprep.subr.bf16.mxu0 0
        %1025 = vmatpush1.bf16.msra.mxu0 0
        %1026 = vmatprep.subr.bf16.mxu0 0
        %1027 = vmatpush1.bf16.msra.mxu0 0
        %1028 = vmatprep.subr.bf16.mxu0 0
        %1029 = vmatpush1.bf16.msra.mxu0 0
        %1030 = vmatprep.subr.bf16.mxu0 0
        %1031 = vmatpush1.bf16.msra.mxu0 0
        %1032 = vmatprep.subr.bf16.mxu0 0
        %1033 = vmatpush1.bf16.msra.mxu0 0
        %1034 = vmatprep.subr.bf16.mxu0 0
        %1035 = vmatpush1.bf16.msra.mxu0 0
        %1036 = vmatprep.subr.bf16.mxu0 0
        %1037 = vmatpush1.bf16.msra.mxu0 0
        %1038 = vmatprep.subr.bf16.mxu0 0
        %1039 = vmatpush1.bf16.msra.mxu0 0
        %1040 = vmatprep.subr.bf16.mxu0 0
        %1041 = vmatpush1.bf16.msra.mxu0 0
        %1042 = vmatprep.subr.bf16.mxu0 0
        %1043 = vmatpush1.bf16.msra.mxu0 0
        %1044 = vmatprep.subr.bf16.mxu0 0
        %1045 = vmatpush1.bf16.msra.mxu0 0
        %1046 = vmatprep.subr.bf16.mxu0 0
        %1047 = vmatpush1.bf16.msra.mxu0 0
        %1048 = vmatprep.subr.bf16.mxu0 0
        %1049 = vmatpush1.bf16.msra.mxu0 0
        %1050 = vmatprep.subr.bf16.mxu0 0
        %1051 = vmatpush1.bf16.msra.mxu0 0
        %1052 = vmatprep.subr.bf16.mxu0 0
        %1053 = vmatpush1.bf16.msra.mxu0 0
        %1054 = vmatprep.mubr.bf16.mxu0 0
        %1055 = vmatmul.mubr.bf16.gmra.mrb[0].mxu0 %v1017
        %v1056 = vpop.f32.mrb[0].mxu0
        %v1057 = vadd.f32 0.0, %v1056
        %v1058 = vpop.f32.mrb[0].mxu0
        %v1059 = vpop.f32.mrb[0].mxu0
        %v1060 = vpop.f32.mrb[0].mxu0
        %1061 = vdwg.mxu0
        %1062 = vrot.lane.b32.xlu0 %v675, 64
        %v1063 = vpop.permute.xlu0 %1062
        %v1065 = vsel %vm678, %v916, 0
        %v1068 = vsel %vm922, %v1063, 0
        %1070 = vmatprep.subr.bf16.mxu0 0
        %1071 = vmatpush1.bf16.msra.mxu0 %v1068
        %1072 = vmatprep.subr.bf16.mxu0 0
        %1073 = vmatpush1.bf16.msra.mxu0 0
        %1074 = vmatprep.subr.bf16.mxu0 0
        %1075 = vmatpush1.bf16.msra.mxu0 0
        %1076 = vmatprep.subr.bf16.mxu0 0
        %1077 = vmatpush1.bf16.msra.mxu0 0
        %1078 = vmatprep.subr.bf16.mxu0 0
        %1079 = vmatpush1.bf16.msra.mxu0 0
        %1080 = vmatprep.subr.bf16.mxu0 0
        %1081 = vmatpush1.bf16.msra.mxu0 0
        %1082 = vmatprep.subr.bf16.mxu0 0
        %1083 = vmatpush1.bf16.msra.mxu0 0
        %1084 = vmatprep.subr.bf16.mxu0 0
        %1085 = vmatpush1.bf16.msra.mxu0 0
        %1086 = vmatprep.subr.bf16.mxu0 0
        %1087 = vmatpush1.bf16.msra.mxu0 0
        %1088 = vmatprep.subr.bf16.mxu0 0
        %1089 = vmatpush1.bf16.msra.mxu0 0
        %1090 = vmatprep.subr.bf16.mxu0 0
        %1091 = vmatpush1.bf16.msra.mxu0 0
        %1092 = vmatprep.subr.bf16.mxu0 0
        %1093 = vmatpush1.bf16.msra.mxu0 0
        %1094 = vmatprep.subr.bf16.mxu0 0
        %1095 = vmatpush1.bf16.msra.mxu0 0
        %1096 = vmatprep.subr.bf16.mxu0 0
        %1097 = vmatpush1.bf16.msra.mxu0 0
        %1098 = vmatprep.subr.bf16.mxu0 0
        %1099 = vmatpush1.bf16.msra.mxu0 0
        %1100 = vmatprep.subr.bf16.mxu0 0
        %1101 = vmatpush1.bf16.msra.mxu0 0
        %1102 = vmatprep.mubr.bf16.mxu0 0
        %1103 = vmatmul.mubr.bf16.gmra.mrb[0].mxu0 %v1065
        %v1104 = vpop.f32.mrb[0].mxu0
        %v1105 = vadd.f32 0.0, %v1104
        %v1106 = vpop.f32.mrb[0].mxu0
        %v1107 = vpop.f32.mrb[0].mxu0
        %v1108 = vpop.f32.mrb[0].mxu0
        %1109 = vdwg.mxu0
        %v1110 = vpack.c.bf16 %v961, %v961
        %v1111 = vpack.c.bf16 %v1009, %v1009
        %v1112 = vpack.c.bf16 %v1057, %v1057
        %v1113 = vpack.c.bf16 %v1105, %v1105
        %1115 = vrot.lane.b32.xlu0 %v1111, 8
        %v1116 = vpop.permute.xlu0 %1115
        %1118 = vrot.lane.b32.xlu0 %v1112, 16
        %v1119 = vpop.permute.xlu0 %1118
        %1121 = vrot.lane.b32.xlu0 %v1113, 24
        %v1122 = vpop.permute.xlu0 %1121
        %v1125 = vsel %vm678, %v1110, %v1116
        %vm1126 = vcmask 130048
        %v1128 = vsel %vm1126, %v1125, %v1119
        %vm1129 = vcmask 195584
        %v1131 = vsel %vm1129, %v1128, %v1122
        %v1132 = vld [vmem:[#allocation10] sm:$0xf]
        %v1133 = vld [vmem:[#allocation10 + $0x4] sm:$0xf]
        %v1134 = vld [vmem:[#allocation10 + $0x8] sm:$0xf]
        %v1135 = vld [vmem:[#allocation10 + $0xc] sm:$0xf]
        %v1140 = vunpack.c.l.b16 %v1132
        %v1141 = vunpack.c.l.b16 %v1133
        %v1142 = vunpack.c.l.b16 %v1134
        %v1143 = vunpack.c.l.b16 %v1135
        %v1144 = vpack.c.b16 %v1141, %v1140
        %v1145 = vpack.c.b16 %v1143, %v1142
        %v1148 = vsel %vm579, %v1131, 0
        %1150 = vmatprep.subr.bf16.mxu0 0
        %1151 = vmatpush1.bf16.msra.mxu0 %v1144
        %1152 = vmatprep.subr.bf16.mxu0 0
        %1153 = vmatpush1.bf16.msra.mxu0 %v1145
        %1154 = vmatprep.subr.bf16.mxu0 0
        %1155 = vmatpush1.bf16.msra.mxu0 0
        %1156 = vmatprep.subr.bf16.mxu0 0
        %1157 = vmatpush1.bf16.msra.mxu0 0
        %1158 = vmatprep.subr.bf16.mxu0 0
        %1159 = vmatpush1.bf16.msra.mxu0 0
        %1160 = vmatprep.subr.bf16.mxu0 0
        %1161 = vmatpush1.bf16.msra.mxu0 0
        %1162 = vmatprep.subr.bf16.mxu0 0
        %1163 = vmatpush1.bf16.msra.mxu0 0
        %1164 = vmatprep.subr.bf16.mxu0 0
        %1165 = vmatpush1.bf16.msra.mxu0 0
        %1166 = vmatprep.subr.bf16.mxu0 0
        %1167 = vmatpush1.bf16.msra.mxu0 0
        %1168 = vmatprep.subr.bf16.mxu0 0
        %1169 = vmatpush1.bf16.msra.mxu0 0
        %1170 = vmatprep.subr.bf16.mxu0 0
        %1171 = vmatpush1.bf16.msra.mxu0 0
        %1172 = vmatprep.subr.bf16.mxu0 0
        %1173 = vmatpush1.bf16.msra.mxu0 0
        %1174 = vmatprep.subr.bf16.mxu0 0
        %1175 = vmatpush1.bf16.msra.mxu0 0
        %1176 = vmatprep.subr.bf16.mxu0 0
        %1177 = vmatpush1.bf16.msra.mxu0 0
        %1178 = vmatprep.subr.bf16.mxu0 0
        %1179 = vmatpush1.bf16.msra.mxu0 0
        %1180 = vmatprep.subr.bf16.mxu0 0
        %1181 = vmatpush1.bf16.msra.mxu0 0
        %1182 = vmatprep.mubr.bf16.mxu0 0
        %1183 = vmatmul.mubr.bf16.gmra.mrb[0].mxu0 %v1148
        %v1184 = vpop.f32.mrb[0].mxu0
        %v1185 = vadd.f32 0.0, %v1184
        %v1186 = vpop.f32.mrb[0].mxu0
        %v1187 = vpop.f32.mrb[0].mxu0
        %v1188 = vpop.f32.mrb[0].mxu0
        %1189 = vdwg.mxu0
        %v1190 = vadd.f32 %v576, %v1185
        %v1191 = vld [vmem:[#allocation11] sm:$0x1]
        %v1193 = vlaneseq
        %v1194 = vshrl.u32 %v1193, 7
        %v1195 = vsub.s32 0, %v1194
        %v1196 = vrot.slane %v1191, %v1195
        %v1198 = vadd.f32 %v1190, %v1196
        %v1199 = vld [vmem:[#allocation13] sm:$0x1]
        %v1200 = vld [vmem:[#allocation14] sm:$0x1]
        %v1201 = vsel %vm579, %v1198, 0.0
        %1202 = vadd.xlane.f32.xlu0 %v1201
        %v1203 = vpop.xlane.xlu0 %1202
        %v1204 = vmul.f32 %v1203, %v583
        %v1205 = vsub.f32 %v1198, %v1204
        %v1206 = vmul.f32 %v1205, %v1205
        %v1207 = vsel %vm579, %v1206, 0.0
        %1208 = vadd.xlane.f32.xlu0 %v1207
        %v1209 = vpop.xlane.xlu0 %1208
        %v1210 = vmul.f32 %v1209, %v583
        %v1211 = vadd.f32 %v1210, 1e-05
        %v1212 = vrsqrt.pop %v1211
        %v1213 = vmul.f32 %v1205, %v1212
        %v1215 = vlaneseq
        %v1216 = vshrl.u32 %v1215, 7
        %v1217 = vsub.s32 0, %v1216
        %v1218 = vrot.slane %v1199, %v1217
        %v1220 = vmul.f32 %v1213, %v1218
        %v1222 = vlaneseq
        %v1223 = vshrl.u32 %v1222, 7
        %v1224 = vsub.s32 0, %v1223
        %v1225 = vrot.slane %v1200, %v1224
        %v1227 = vadd.f32 %v1220, %v1225
        %v1228 = vpack.c.bf16 %v1227, %v1227
        %v1229 = vld [vmem:[#allocation16] sm:$0xf]
        %v1230 = vld [vmem:[#allocation16 + $0x4] sm:$0xf]
        %v1231 = vld [vmem:[#allocation16 + $0x8] sm:$0xf]
        %v1232 = vld [vmem:[#allocation16 + $0xc] sm:$0xf]
        %v1233 = vld [vmem:[#allocation17] sm:$0x1]
        %v1235 = vlaneseq
        %v1236 = vshrl.u32 %v1235, 7
        %v1237 = vsub.s32 0, %v1236
        %v1238 = vrot.slane %v1233, %v1237
        %v1244 = vunpack.c.l.b16 %v1229
        %v1245 = vunpack.c.l.b16 %v1230
        %v1246 = vunpack.c.l.b16 %v1231
        %v1247 = vunpack.c.l.b16 %v1232
        %v1248 = vpack.c.b16 %v1245, %v1244
        %v1249 = vpack.c.b16 %v1247, %v1246
        %v1253 = vsel %vm579, %v1228, 0
        %1255 = vmatprep.subr.bf16.mxu0 0
        %1256 = vmatpush1.bf16.msra.mxu0 %v1248
        %1257 = vmatprep.subr.bf16.mxu0 0
        %1258 = vmatpush1.bf16.msra.mxu0 %v1249
        %1259 = vmatprep.subr.bf16.mxu0 0
        %1260 = vmatpush1.bf16.msra.mxu0 0
        %1261 = vmatprep.subr.bf16.mxu0 0
        %1262 = vmatpush1.bf16.msra.mxu0 0
        %1263 = vmatprep.subr.bf16.mxu0 0
        %1264 = vmatpush1.bf16.msra.mxu0 0
        %1265 = vmatprep.subr.bf16.mxu0 0
        %1266 = vmatpush1.bf16.msra.mxu0 0
        %1267 = vmatprep.subr.bf16.mxu0 0
        %1268 = vmatpush1.bf16.msra.mxu0 0
        %1269 = vmatprep.subr.bf16.mxu0 0
        %1270 = vmatpush1.bf16.msra.mxu0 0
        %1271 = vmatprep.subr.bf16.mxu0 0
        %1272 = vmatpush1.bf16.msra.mxu0 0
        %1273 = vmatprep.subr.bf16.mxu0 0
        %1274 = vmatpush1.bf16.msra.mxu0 0
        %1275 = vmatprep.subr.bf16.mxu0 0
        %1276 = vmatpush1.bf16.msra.mxu0 0
        %1277 = vmatprep.subr.bf16.mxu0 0
        %1278 = vmatpush1.bf16.msra.mxu0 0
        %1279 = vmatprep.subr.bf16.mxu0 0
        %1280 = vmatpush1.bf16.msra.mxu0 0
        %1281 = vmatprep.subr.bf16.mxu0 0
        %1282 = vmatpush1.bf16.msra.mxu0 0
        %1283 = vmatprep.subr.bf16.mxu0 0
        %1284 = vmatpush1.bf16.msra.mxu0 0
        %1285 = vmatprep.subr.bf16.mxu0 0
        %1286 = vmatpush1.bf16.msra.mxu0 0
        %1287 = vmatprep.mubr.bf16.mxu0 0
        %1288 = vmatmul.mubr.bf16.gmra.mrb[0].mxu0 %v1253
        %v1289 = vpop.f32.mrb[0].mxu0
        %v1290 = vadd.f32 %v1238, %v1289
        %v1291 = vpop.f32.mrb[0].mxu0
        %v1292 = vpop.f32.mrb[0].mxu0
        %v1293 = vpop.f32.mrb[0].mxu0
        %1294 = vdwg.mxu0
        %v1295 = vmul.f32 %v1290, 0.5
        %v1296 = vmul.f32 %v1290, 0.70710677
        %v1297 = verf.f32.pop %v1296
        %v1298 = vadd.f32 %v1297, 1.0
        %v1299 = vmul.f32 %v1295, %v1298
        %v1300 = vpack.c.bf16 %v1299, %v1299
        %v1301 = vld [vmem:[#allocation19] sm:$0xf]
        %v1302 = vld [vmem:[#allocation19 + $0x4] sm:$0xf]
        %v1303 = vld [vmem:[#allocation19 + $0x8] sm:$0xf]
        %v1304 = vld [vmem:[#allocation19 + $0xc] sm:$0xf]
        %v1305 = vld [vmem:[#allocation19 + $0x10] sm:$0xf]
        %v1306 = vld [vmem:[#allocation19 + $0x14] sm:$0xf]
        %v1307 = vld [vmem:[#allocation19 + $0x18] sm:$0xf]
        %v1308 = vld [vmem:[#allocation19 + $0x1c] sm:$0xf]
        %v1309 = vld [vmem:[#allocation20] sm:$0x1]
        %v1311 = vlaneseq
        %v1312 = vshrl.u32 %v1311, 7
        %v1313 = vsub.s32 0, %v1312
        %v1314 = vrot.slane %v1309, %v1313
        %v1324 = vunpack.c.l.b16 %v1301
        %v1325 = vunpack.c.l.b16 %v1302
        %v1326 = vunpack.c.l.b16 %v1303
        %v1327 = vunpack.c.l.b16 %v1304
        %v1328 = vunpack.c.l.b16 %v1305
        %v1329 = vunpack.c.l.b16 %v1306
        %v1330 = vunpack.c.l.b16 %v1307
        %v1331 = vunpack.c.l.b16 %v1308
        %v1332 = vpack.c.b16 %v1325, %v1324
        %v1333 = vpack.c.b16 %v1327, %v1326
        %v1334 = vpack.c.b16 %v1329, %v1328
        %v1335 = vpack.c.b16 %v1331, %v1330
        %vm1340 = vcmask 523264
        %v1342 = vsel %vm1340, %v1300, 0
        %1344 = vmatprep.subr.bf16.mxu0 0
        %1345 = vmatpush1.bf16.msra.mxu0 %v1332
        %1346 = vmatprep.subr.bf16.mxu0 0
        %1347 = vmatpush1.bf16.msra.mxu0 %v1333
        %1348 = vmatprep.subr.bf16.mxu0 0
        %1349 = vmatpush1.bf16.msra.mxu0 %v1334
        %1350 = vmatprep.subr.bf16.mxu0 0
        %1351 = vmatpush1.bf16.msra.mxu0 %v1335
        %1352 = vmatprep.subr.bf16.mxu0 0
        %1353 = vmatpush1.bf16.msra.mxu0 0
        %1354 = vmatprep.subr.bf16.mxu0 0
        %1355 = vmatpush1.bf16.msra.mxu0 0
        %1356 = vmatprep.subr.bf16.mxu0 0
        %1357 = vmatpush1.bf16.msra.mxu0 0
        %1358 = vmatprep.subr.bf16.mxu0 0
        %1359 = vmatpush1.bf16.msra.mxu0 0
        %1360 = vmatprep.subr.bf16.mxu0 0
        %1361 = vmatpush1.bf16.msra.mxu0 0
        %1362 = vmatprep.subr.bf16.mxu0 0
        %1363 = vmatpush1.bf16.msra.mxu0 0
        %1364 = vmatprep.subr.bf16.mxu0 0
        %1365 = vmatpush1.bf16.msra.mxu0 0
        %1366 = vmatprep.subr.bf16.mxu0 0
        %1367 = vmatpush1.bf16.msra.mxu0 0
        %1368 = vmatprep.subr.bf16.mxu0 0
        %1369 = vmatpush1.bf16.msra.mxu0 0
        %1370 = vmatprep.subr.bf16.mxu0 0
        %1371 = vmatpush1.bf16.msra.mxu0 0
        %1372 = vmatprep.subr.bf16.mxu0 0
        %1373 = vmatpush1.bf16.msra.mxu0 0
        %1374 = vmatprep.subr.bf16.mxu0 0
        %1375 = vmatpush1.bf16.msra.mxu0 0
        %1376 = vmatprep.mubr.bf16.mxu0 0
        %1377 = vmatmul.mubr.bf16.gmra.mrb[0].mxu0 %v1342
        %v1378 = vpop.f32.mrb[0].mxu0
        %v1379 = vadd.f32 %v1314, %v1378
        %v1380 = vpop.f32.mrb[0].mxu0
        %v1381 = vpop.f32.mrb[0].mxu0
        %v1382 = vpop.f32.mrb[0].mxu0
        %1383 = vdwg.mxu0
        %v1384 = vadd.f32 %v1198, %v1379
        %1385 = vst.msk [vmem:[%s574] sm:$0xff] %vm579, %v1384
        %s1386 = sand.u32 %s300, 1
        %s1387 = scalar_lea.sflag [#allocation4], %s1386
        %s1388 = sand.u32 %s300, 1
        %s1389 = smul.addr %s1388, 8
        %s1390 = scalar_lea.vmem [#allocation22], %s1389
        // Predicated region
        $region117: #{tpu_custom_call.1} parent=67 // pred_check
          %p1391 = pneg %p310
        $region118: #{tpu_custom_call.1} parent=67 // pred_check_branch
          %1393 = sbr.rel (%p1391) target = $region120
        $region119: #{tpu_custom_call.1} parent=67 // pred_region
          %s1395 = ssub.s32 128, 128
          %1396 = vsyncadd %s1387, %s1395
          %s1397 = smul.addr %s35, 128
          %s1398 = scalar_lea.hbm %s12, %s1397
          %s1400 = sshll.u32 %s1390, 4
          %s1401 = int_to_ptr.vmem [resolvable:$true] %s1400
          %1403 = dma.vmem_to_hbm [thread:$0]  %s1401, 128, %s1398, %s1387
        $region120: #{tpu_custom_call.1} parent=67 // pred_fallthru
          _
      $region68: #{tpu_custom_call.1} parent=5 // pred_fallthru
        _
      %p1404 = scmp.le.s32.totalorder 2, %s30
      // Predicated region
      $region121: #{tpu_custom_call.1} parent=5 // pred_check
        %p1405 = pneg %p1404
      $region122: #{tpu_custom_call.1} parent=5 // pred_check_branch
        %1407 = sbr.rel (%p1405) target = $region124
      $region123: #{tpu_custom_call.1} parent=5 // pred_region
        %s1408 = ssub.s32 %s30, 2
        // Predicated region
        $region125: #{tpu_custom_call.1} parent=123 // pred_check
          %p1409 = pneg %p316
        $region126: #{tpu_custom_call.1} parent=123 // pred_check_branch
          %1411 = sbr.rel (%p1409) target = $region128
        $region127: #{tpu_custom_call.1} parent=123 // pred_region
          %s1412 = sand.u32 %s301, 1
          %s1413 = scalar_lea.sflag [#allocation4], %s1412
          %s1414 = sand.u32 %s301, 1
          %s1415 = smul.addr %s1414, 8
          %s1416 = scalar_lea.vmem [#allocation22], %s1415
          %1417 = dma.done %s1413, 128
        $region128: #{tpu_custom_call.1} parent=123 // pred_fallthru
          _
      $region124: #{tpu_custom_call.1} parent=5 // pred_fallthru
        _
    $region6: #{tpu_custom_call.1} parent=1 // loop_footer
      %s34 = sadd.s32 1, %s30
    $region7: #{tpu_custom_call.1} parent=1 // loop_footer_branch
      %29 = sbr.rel target = $region3
    $region8: #{tpu_custom_call.1} parent=1 // loop_exit
      _
    %1418 = vsyncpa [#allocation3], 1
    %s1419 = scalar_lea.sflag [#allocation3], 1
    %1420 = vsyncpa %s1419, 1
    %1421 = vsyncpa [#allocation6], 1
    %1422 = vsyncpa [#allocation9], 1
    %1423 = vsyncpa [#allocation12], 1
    %1424 = vsyncpa [#allocation15], 1
    %1425 = vsyncpa [#allocation18], 1
    %1426 = vsyncpa [#allocation21], 1
    %1427 = vsyncpa [#allocation4], 1
    %s1428 = scalar_lea.sflag [#allocation4], 1
    %1429 = vsyncpa %s1428, 1

// kernel: tpu_custom_call.1
$region0: #{tpu_custom_call.1}
  #allocation0 [shape = 'u32[]', space=smem, size = 0x4, offset = 0x4, fixed_abs, tag = 'smem constant byte address 0x4 - core index']
  #allocation1 [shape = 'u32[144,128]{1,0:T(1,128)}', space=vmem, size = 0x12000, scoped, tag = 'internal scratch']
  %s0 = inlined_call_operand.hbm [shape: f32[16,32], index: 0, kind: input, shape index: {}]
  %s1 = inlined_call_operand.hbm [shape: f32[1,32], index: 1, kind: input, shape index: {}]
  %s2 = inlined_call_operand.hbm [shape: f32[1,32], index: 2, kind: input, shape index: {}]
  %s3 = inlined_call_operand.hbm [shape: bf16[32,96], index: 3, kind: input, shape index: {}]
  %s4 = inlined_call_operand.hbm [shape: bf16[32,32], index: 4, kind: input, shape index: {}]
  %s5 = inlined_call_operand.hbm [shape: f32[1,32], index: 5, kind: input, shape index: {}]
  %s6 = inlined_call_operand.hbm [shape: f32[1,32], index: 6, kind: input, shape index: {}]
  %s7 = inlined_call_operand.hbm [shape: f32[1,32], index: 7, kind: input, shape index: {}]
  %s8 = inlined_call_operand.hbm [shape: bf16[32,64], index: 8, kind: input, shape index: {}]
  %s9 = inlined_call_operand.hbm [shape: f32[1,64], index: 9, kind: input, shape index: {}]
  %s10 = inlined_call_operand.hbm [shape: bf16[64,32], index: 10, kind: input, shape index: {}]
  %s11 = inlined_call_operand.hbm [shape: f32[1,32], index: 11, kind: input, shape index: {}]
  %s12 = inlined_call_operand.hbm [shape: f32[16,32], index: 12, kind: output, shape index: {}]
  %s13 = sld [smem:[#allocation0]]
  $region129: #{tpu_custom_call.1} parent=0
    _
  %s15 = ssub.s32 1, %s13
  %s16 = scalar_select 0, %s15, %s13
  $region1: #{tpu_custom_call.1} parent=0
    #allocation2 [shape = 'u8[8192]{0}', space=vmem, size = 0x2000, scoped, tag = 'input window, operand 0']
    #allocation3 [shape = 's32[2]{0}', space=sflag, size = 0x8, scoped, tag = 'scoped memory for tpu_custom_call.1']
    #allocation4 [shape = 's32[2]{0}', space=sflag, size = 0x8, scoped, tag = 'scoped memory for tpu_custom_call.1']
    #allocation5 [shape = 'u8[512]{0}', space=vmem, size = 0x400, scoped, tag = 'input window, operand 1, single buffered']
    #allocation6 [shape = 's32[1]{0}', space=sflag, size = 0x4, scoped, tag = 'scoped memory for tpu_custom_call.1']
    #allocation7 [shape = 'u8[512]{0}', space=vmem, size = 0x400, scoped, tag = 'input window, operand 2, single buffered']
    #allocation8 [shape = 'u8[8192]{0}', space=vmem, size = 0x2000, scoped, tag = 'input window, operand 3, single buffered']
    #allocation9 [shape = 's32[1]{0}', space=sflag, size = 0x4, scoped, tag = 'scoped memory for tpu_custom_call.1']
    #allocation10 [shape = 'u8[8192]{0}', space=vmem, size = 0x2000, scoped, tag = 'input window, operand 4, single buffered']
    #allocation11 [shape = 'u8[512]{0}', space=vmem, size = 0x400, scoped, tag = 'input window, operand 5, single buffered']
    #allocation12 [shape = 's32[1]{0}', space=sflag, size = 0x4, scoped, tag = 'scoped memory for tpu_custom_call.1']
    #allocation13 [shape = 'u8[512]{0}', space=vmem, size = 0x400, scoped, tag = 'input window, operand 6, single buffered']
    #allocation14 [shape = 'u8[512]{0}', space=vmem, size = 0x400, scoped, tag = 'input window, operand 7, single buffered']
    #allocation15 [shape = 's32[1]{0}', space=sflag, size = 0x4, scoped, tag = 'scoped memory for tpu_custom_call.1']
    #allocation16 [shape = 'u8[8192]{0}', space=vmem, size = 0x2000, scoped, tag = 'input window, operand 8, single buffered']
    #allocation17 [shape = 'u8[512]{0}', space=vmem, size = 0x400, scoped, tag = 'input window, operand 9, single buffered']
    #allocation18 [shape = 's32[1]{0}', space=sflag, size = 0x4, scoped, tag = 'scoped memory for tpu_custom_call.1']
    #allocation19 [shape = 'u8[16384]{0}', space=vmem, size = 0x4000, scoped, tag = 'input window, operand 10, single buffered']
    #allocation20 [shape = 'u8[512]{0}', space=vmem, size = 0x400, scoped, tag = 'input window, operand 11, single buffered']
    #allocation21 [shape = 's32[1]{0}', space=sflag, size = 0x4, scoped, tag = 'scoped memory for tpu_custom_call.1']
    #allocation22 [shape = 'u8[8192]{0}', space=vmem, size = 0x2000, scoped, tag = 'output window, operand 0']
    %17 = vsyncpa [#allocation3], 0
    %s18 = scalar_lea.sflag [#allocation3], 1
    %19 = vsyncpa %s18, 0
    %20 = vsyncpa [#allocation6], 0
    %21 = vsyncpa [#allocation9], 0
    %22 = vsyncpa [#allocation12], 0
    %23 = vsyncpa [#allocation15], 0
    %24 = vsyncpa [#allocation18], 0
    %25 = vsyncpa [#allocation21], 0
    %26 = vsyncpa [#allocation4], 0
    %s27 = scalar_lea.sflag [#allocation4], 1
    %28 = vsyncpa %s27, 0
    loop: start=0, step=1, limit=4
    $region2: #{tpu_custom_call.1} parent=1 // loop_pre_header
      _
    $region3: #{tpu_custom_call.1} parent=1 // loop_header
      %s30 = sphi 0, %s34
      %p31 = scmp.ge.s32.totalorder %s30, 4
      %s40 = sphi 0, %s42
      %s43 = sphi 0, %s40
      %s44 = sphi 0, %s43
      %s60 = sphi 0, %s44
      %s64 = sphi 0, %s64
      %s66 = sphi 0, %s64
      %s67 = sphi 0, %s66
      %s81 = sphi 0, %s67
      %s85 = sphi 0, %s85
      %s87 = sphi 0, %s85
      %s88 = sphi 0, %s87
      %s102 = sphi 0, %s88
      %s106 = sphi 0, %s106
      %s108 = sphi 0, %s106
      %s109 = sphi 0, %s108
      %s123 = sphi 0, %s109
      %s127 = sphi 0, %s127
      %s129 = sphi 0, %s127
      %s130 = sphi 0, %s129
      %s144 = sphi 0, %s130
      %s148 = sphi 0, %s148
      %s150 = sphi 0, %s148
      %s151 = sphi 0, %s150
      %s165 = sphi 0, %s151
      %s169 = sphi 0, %s169
      %s171 = sphi 0, %s169
      %s172 = sphi 0, %s171
      %s186 = sphi 0, %s172
      %s190 = sphi 0, %s190
      %s192 = sphi 0, %s190
      %s193 = sphi 0, %s192
      %s207 = sphi 0, %s193
      %s211 = sphi 0, %s211
      %s213 = sphi 0, %s211
      %s214 = sphi 0, %s213
      %s228 = sphi 0, %s214
      %s232 = sphi 0, %s232
      %s234 = sphi 0, %s232
      %s235 = sphi 0, %s234
      %s249 = sphi 0, %s235
      %s253 = sphi 0, %s253
      %s255 = sphi 0, %s253
      %s256 = sphi 0, %s255
      %s270 = sphi 0, %s256
      %s274 = sphi 0, %s274
      %s276 = sphi 0, %s274
      %s277 = sphi 0, %s276
      %s291 = sphi 0, %s277
      %s297 = sphi 0, %s299
      %s300 = sphi 0, %s297
      %s301 = sphi 0, %s300
      %s317 = sphi 0, %s301
    $region4: #{tpu_custom_call.1} parent=1 // loop_header_branch
      %33 = sbr.rel (%p31) target = $region8
    $region5: #{tpu_custom_call.1} parent=1 // loop_body
      %s35 = ssub.s32 %s30, 1
      %s36 = ssub.s32 %s30, 2
      %s37 = sadd.s32 %s30, 1
      %s38 = ssub.s32 %s30, %s37
      %p39 = scmp.eq.s32.totalorder %s38, 0
      %s41 = sadd.s32 %s40, 1
      %s42 = scalar_select %p39, %s40, %s41
      %p45 = pneg %p39
      %p46 = scmp.eq.s32.totalorder %s30, 1
      %p47 = por %p45, %p46
      %p48 = scmp.ne.s32.totalorder %s40, %s43
      %p49 = scmp.eq.s32.totalorder %s30, 0
      %p50 = por %p48, %p49
      %p51 = scmp.ne.s32.totalorder %s40, %s43
      %p52 = scmp.eq.s32.totalorder %s35, 1
      %p53 = por %p51, %p52
      %p54 = scmp.ne.s32.totalorder %s43, %s44
      %p55 = scmp.eq.s32.totalorder %s35, 0
      %p56 = por %p54, %p55
      %p57 = scmp.ne.s32.totalorder %s43, %s44
      %p58 = scmp.eq.s32.totalorder %s36, 1
      %p59 = por %p57, %p58
      %p61 = scmp.ne.s32.totalorder %s44, %s60
      %p62 = scmp.eq.s32.totalorder %s36, 0
      %p63 = por %p61, %p62
      %s65 = sadd.s32 %s64, 1
      %p68 = scmp.eq.s32.totalorder %s30, 1
      %p69 = scmp.ne.s32.totalorder %s64, %s66
      %p70 = scmp.eq.s32.totalorder %s30, 0
      %p71 = por %p69, %p70
      %p72 = scmp.ne.s32.totalorder %s64, %s66
      %p73 = scmp.eq.s32.totalorder %s35, 1
      %p74 = por %p72, %p73
      %p75 = scmp.ne.s32.totalorder %s66, %s67
      %p76 = scmp.eq.s32.totalorder %s35, 0
      %p77 = por %p75, %p76
      %p78 = scmp.ne.s32.totalorder %s66, %s67
      %p79 = scmp.eq.s32.totalorder %s36, 1
      %p80 = por %p78, %p79
      %p82 = scmp.ne.s32.totalorder %s67, %s81
      %p83 = scmp.eq.s32.totalorder %s36, 0
      %p84 = por %p82, %p83
      %s86 = sadd.s32 %s85, 1
      %p89 = scmp.eq.s32.totalorder %s30, 1
      %p90 = scmp.ne.s32.totalorder %s85, %s87
      %p91 = scmp.eq.s32.totalorder %s30, 0
      %p92 = por %p90, %p91
      %p93 = scmp.ne.s32.totalorder %s85, %s87
      %p94 = scmp.eq.s32.totalorder %s35, 1
      %p95 = por %p93, %p94
      %p96 = scmp.ne.s32.totalorder %s87, %s88
      %p97 = scmp.eq.s32.totalorder %s35, 0
      %p98 = por %p96, %p97
      %p99 = scmp.ne.s32.totalorder %s87, %s88
      %p100 = scmp.eq.s32.totalorder %s36, 1
      %p101 = por %p99, %p100
      %p103 = scmp.ne.s32.totalorder %s88, %s102
      %p104 = scmp.eq.s32.totalorder %s36, 0
      %p105 = por %p103, %p104
      %s107 = sadd.s32 %s106, 1
      %p110 = scmp.eq.s32.totalorder %s30, 1
      %p111 = scmp.ne.s32.totalorder %s106, %s108
      %p112 = scmp.eq.s32.totalorder %s30, 0
      %p113 = por %p111, %p112
      %p114 = scmp.ne.s32.totalorder %s106, %s108
      %p115 = scmp.eq.s32.totalorder %s35, 1
      %p116 = por %p114, %p115
      %p117 = scmp.ne.s32.totalorder %s108, %s109
      %p118 = scmp.eq.s32.totalorder %s35, 0
      %p119 = por %p117, %p118
      %p120 = scmp.ne.s32.totalorder %s108, %s109
      %p121 = scmp.eq.s32.totalorder %s36, 1
      %p122 = por %p120, %p121
      %p124 = scmp.ne.s32.totalorder %s109, %s123
      %p125 = scmp.eq.s32.totalorder %s36, 0
      %p126 = por %p124, %p125
      %s128 = sadd.s32 %s127, 1
      %p131 = scmp.eq.s32.totalorder %s30, 1
      %p132 = scmp.ne.s32.totalorder %s127, %s129
      %p133 = scmp.eq.s32.totalorder %s30, 0
      %p134 = por %p132, %p133
      %p135 = scmp.ne.s32.totalorder %s127, %s129
      %p136 = scmp.eq.s32.totalorder %s35, 1
      %p137 = por %p135, %p136
      %p138 = scmp.ne.s32.totalorder %s129, %s130
      %p139 = scmp.eq.s32.totalorder %s35, 0
      %p140 = por %p138, %p139
      %p141 = scmp.ne.s32.totalorder %s129, %s130
      %p142 = scmp.eq.s32.totalorder %s36, 1
      %p143 = por %p141, %p142
      %p145 = scmp.ne.s32.totalorder %s130, %s144
      %p146 = scmp.eq.s32.totalorder %s36, 0
      %p147 = por %p145, %p146
      %s149 = sadd.s32 %s148, 1
      %p152 = scmp.eq.s32.totalorder %s30, 1
      %p153 = scmp.ne.s32.totalorder %s148, %s150
      %p154 = scmp.eq.s32.totalorder %s30, 0
      %p155 = por %p153, %p154
      %p156 = scmp.ne.s32.totalorder %s148, %s150
      %p157 = scmp.eq.s32.totalorder %s35, 1
      %p158 = por %p156, %p157
      %p159 = scmp.ne.s32.totalorder %s150, %s151
      %p160 = scmp.eq.s32.totalorder %s35, 0
      %p161 = por %p159, %p160
      %p162 = scmp.ne.s32.totalorder %s150, %s151
      %p163 = scmp.eq.s32.totalorder %s36, 1
      %p164 = por %p162, %p163
      %p166 = scmp.ne.s32.totalorder %s151, %s165
      %p167 = scmp.eq.s32.totalorder %s36, 0
      %p168 = por %p166, %p167
      %s170 = sadd.s32 %s169, 1
      %p173 = scmp.eq.s32.totalorder %s30, 1
      %p174 = scmp.ne.s32.totalorder %s169, %s171
      %p175 = scmp.eq.s32.totalorder %s30, 0
      %p176 = por %p174, %p175
      %p177 = scmp.ne.s32.totalorder %s169, %s171
      %p178 = scmp.eq.s32.totalorder %s35, 1
      %p179 = por %p177, %p178
      %p180 = scmp.ne.s32.totalorder %s171, %s172
      %p181 = scmp.eq.s32.totalorder %s35, 0
      %p182 = por %p180, %p181
      %p183 = scmp.ne.s32.totalorder %s171, %s172
      %p184 = scmp.eq.s32.totalorder %s36, 1
      %p185 = por %p183, %p184
      %p187 = scmp.ne.s32.totalorder %s172, %s186
      %p188 = scmp.eq.s32.totalorder %s36, 0
      %p189 = por %p187, %p188
      %s191 = sadd.s32 %s190, 1
      %p194 = scmp.eq.s32.totalorder %s30, 1
      %p195 = scmp.ne.s32.totalorder %s190, %s192
      %p196 = scmp.eq.s32.totalorder %s30, 0
      %p197 = por %p195, %p196
      %p198 = scmp.ne.s32.totalorder %s190, %s192
      %p199 = scmp.eq.s32.totalorder %s35, 1
      %p200 = por %p198, %p199
      %p201 = scmp.ne.s32.totalorder %s192, %s193
      %p202 = scmp.eq.s32.totalorder %s35, 0
      %p203 = por %p201, %p202
      %p204 = scmp.ne.s32.totalorder %s192, %s193
      %p205 = scmp.eq.s32.totalorder %s36, 1
      %p206 = por %p204, %p205
      %p208 = scmp.ne.s32.totalorder %s193, %s207
      %p209 = scmp.eq.s32.totalorder %s36, 0
      %p210 = por %p208, %p209
      %s212 = sadd.s32 %s211, 1
      %p215 = scmp.eq.s32.totalorder %s30, 1
      %p216 = scmp.ne.s32.totalorder %s211, %s213
      %p217 = scmp.eq.s32.totalorder %s30, 0
      %p218 = por %p216, %p217
      %p219 = scmp.ne.s32.totalorder %s211, %s213
      %p220 = scmp.eq.s32.totalorder %s35, 1
      %p221 = por %p219, %p220
      %p222 = scmp.ne.s32.totalorder %s213, %s214
      %p223 = scmp.eq.s32.totalorder %s35, 0
      %p224 = por %p222, %p223
      %p225 = scmp.ne.s32.totalorder %s213, %s214
      %p226 = scmp.eq.s32.totalorder %s36, 1
      %p227 = por %p225, %p226
      %p229 = scmp.ne.s32.totalorder %s214, %s228
      %p230 = scmp.eq.s32.totalorder %s36, 0
      %p231 = por %p229, %p230
      %s233 = sadd.s32 %s232, 1
      %p236 = scmp.eq.s32.totalorder %s30, 1
      %p237 = scmp.ne.s32.totalorder %s232, %s234
      %p238 = scmp.eq.s32.totalorder %s30, 0
      %p239 = por %p237, %p238
      %p240 = scmp.ne.s32.totalorder %s232, %s234
      %p241 = scmp.eq.s32.totalorder %s35, 1
      %p242 = por %p240, %p241
      %p243 = scmp.ne.s32.totalorder %s234, %s235
      %p244 = scmp.eq.s32.totalorder %s35, 0
      %p245 = por %p243, %p244
      %p246 = scmp.ne.s32.totalorder %s234, %s235
      %p247 = scmp.eq.s32.totalorder %s36, 1
      %p248 = por %p246, %p247
      %p250 = scmp.ne.s32.totalorder %s235, %s249
      %p251 = scmp.eq.s32.totalorder %s36, 0
      %p252 = por %p250, %p251
      %s254 = sadd.s32 %s253, 1
      %p257 = scmp.eq.s32.totalorder %s30, 1
      %p258 = scmp.ne.s32.totalorder %s253, %s255
      %p259 = scmp.eq.s32.totalorder %s30, 0
      %p260 = por %p258, %p259
      %p261 = scmp.ne.s32.totalorder %s253, %s255
      %p262 = scmp.eq.s32.totalorder %s35, 1
      %p263 = por %p261, %p262
      %p264 = scmp.ne.s32.totalorder %s255, %s256
      %p265 = scmp.eq.s32.totalorder %s35, 0
      %p266 = por %p264, %p265
      %p267 = scmp.ne.s32.totalorder %s255, %s256
      %p268 = scmp.eq.s32.totalorder %s36, 1
      %p269 = por %p267, %p268
      %p271 = scmp.ne.s32.totalorder %s256, %s270
      %p272 = scmp.eq.s32.totalorder %s36, 0
      %p273 = por %p271, %p272
      %s275 = sadd.s32 %s274, 1
      %p278 = scmp.eq.s32.totalorder %s30, 1
      %p279 = scmp.ne.s32.totalorder %s274, %s276
      %p280 = scmp.eq.s32.totalorder %s30, 0
      %p281 = por %p279, %p280
      %p282 = scmp.ne.s32.totalorder %s274, %s276
      %p283 = scmp.eq.s32.totalorder %s35, 1
      %p284 = por %p282, %p283
      %p285 = scmp.ne.s32.totalorder %s276, %s277
      %p286 = scmp.eq.s32.totalorder %s35, 0
      %p287 = por %p285, %p286
      %p288 = scmp.ne.s32.totalorder %s276, %s277
      %p289 = scmp.eq.s32.totalorder %s36, 1
      %p290 = por %p288, %p289
      %p292 = scmp.ne.s32.totalorder %s277, %s291
      %p293 = scmp.eq.s32.totalorder %s36, 0
      %p294 = por %p292, %p293
      %s295 = ssub.s32 %s30, %s37
      %p296 = scmp.eq.s32.totalorder %s295, 0
      %s298 = sadd.s32 %s297, 1
      %s299 = scalar_select %p296, %s297, %s298
      %p302 = pneg %p296
      %p303 = scmp.eq.s32.totalorder %s30, 1
      %p304 = por %p302, %p303
      %p305 = scmp.ne.s32.totalorder %s297, %s300
      %p306 = scmp.eq.s32.totalorder %s30, 0
      %p307 = por %p305, %p306
      %p308 = scmp.ne.s32.totalorder %s297, %s300
      %p309 = scmp.eq.s32.totalorder %s35, 1
      %p310 = por %p308, %p309
      %p311 = scmp.ne.s32.totalorder %s300, %s301
      %p312 = scmp.eq.s32.totalorder %s35, 0
      %p313 = por %p311, %p312
      %p314 = scmp.ne.s32.totalorder %s300, %s301
      %p315 = scmp.eq.s32.totalorder %s36, 1
      %p316 = por %p314, %p315
      %p318 = scmp.ne.s32.totalorder %s301, %s317
      %p319 = scmp.eq.s32.totalorder %s36, 0
      %p320 = por %p318, %p319
      %p321 = scmp.le.s32.totalorder 1, %s30
      %p322 = scmp.lt.s32.totalorder %s30, 3
      %p323 = pnand %p321, %p322
      %p324 = pneg %p323
      // Predicated region
      $region9: #{tpu_custom_call.1} parent=5 // pred_check
        _
      $region10: #{tpu_custom_call.1} parent=5 // pred_check_branch
        %326 = sbr.rel (%p323) target = $region12
      $region11: #{tpu_custom_call.1} parent=5 // pred_region
        %s327 = ssub.s32 %s30, 1
        // Predicated region
        $region13: #{tpu_custom_call.1} parent=11 // pred_check
          %p328 = pneg %p77
        $region14: #{tpu_custom_call.1} parent=11 // pred_check_branch
          %330 = sbr.rel (%p328) target = $region16
        $region15: #{tpu_custom_call.1} parent=11 // pred_region
          %s332 = ssub.s32 16, 16
          %333 = vsyncadd [#allocation6], %s332
          %s335 = sshll.u32 [#allocation5], 4
          %s336 = int_to_ptr.vmem [resolvable:$true] %s335
          %338 = dma.hbm_to_vmem [thread:$0]  %s1, 16, %s336, [#allocation6]
        $region16: #{tpu_custom_call.1} parent=11 // pred_fallthru
          _
        // Predicated region
        $region17: #{tpu_custom_call.1} parent=11 // pred_check
          %p339 = pneg %p98
        $region18: #{tpu_custom_call.1} parent=11 // pred_check_branch
          %341 = sbr.rel (%p339) target = $region20
        $region19: #{tpu_custom_call.1} parent=11 // pred_region
          %s343 = ssub.s32 16, 16
          %344 = vsyncadd [#allocation6], %s343
          %s346 = sshll.u32 [#allocation7], 4
          %s347 = int_to_ptr.vmem [resolvable:$true] %s346
          %349 = dma.hbm_to_vmem [thread:$0]  %s2, 16, %s347, [#allocation6]
        $region20: #{tpu_custom_call.1} parent=11 // pred_fallthru
          _
        // Predicated region
        $region21: #{tpu_custom_call.1} parent=11 // pred_check
          %p350 = pneg %p119
        $region22: #{tpu_custom_call.1} parent=11 // pred_check_branch
          %352 = sbr.rel (%p350) target = $region24
        $region23: #{tpu_custom_call.1} parent=11 // pred_region
          %s354 = ssub.s32 256, 256
          %355 = vsyncadd [#allocation9], %s354
          %s356 = sshll.u32 [#allocation8], 4
          %s357 = int_to_ptr.vmem [resolvable:$true] %s356
          %362 = dma.hbm_to_vmem [thread:$0]  %s3, 256, %s357, [#allocation9], 64, 64, 4
        $region24: #{tpu_custom_call.1} parent=11 // pred_fallthru
          _
        // Predicated region
        $region25: #{tpu_custom_call.1} parent=11 // pred_check
          %p363 = pneg %p140
        $region26: #{tpu_custom_call.1} parent=11 // pred_check_branch
          %365 = sbr.rel (%p363) target = $region28
        $region27: #{tpu_custom_call.1} parent=11 // pred_region
          %s367 = ssub.s32 256, 256
          %368 = vsyncadd [#allocation9], %s367
          %s369 = sshll.u32 [#allocation10], 4
          %s370 = int_to_ptr.vmem [resolvable:$true] %s369
          %375 = dma.hbm_to_vmem [thread:$0]  %s4, 256, %s370, [#allocation9], 64, 64, 4
        $region28: #{tpu_custom_call.1} parent=11 // pred_fallthru
          _
        // Predicated region
        $region29: #{tpu_custom_call.1} parent=11 // pred_check
          %p376 = pneg %p161
        $region30: #{tpu_custom_call.1} parent=11 // pred_check_branch
          %378 = sbr.rel (%p376) target = $region32
        $region31: #{tpu_custom_call.1} parent=11 // pred_region
          %s380 = ssub.s32 16, 16
          %381 = vsyncadd [#allocation12], %s380
          %s383 = sshll.u32 [#allocation11], 4
          %s384 = int_to_ptr.vmem [resolvable:$true] %s383
          %386 = dma.hbm_to_vmem [thread:$0]  %s5, 16, %s384, [#allocation12]
        $region32: #{tpu_custom_call.1} parent=11 // pred_fallthru
          _
        // Predicated region
        $region33: #{tpu_custom_call.1} parent=11 // pred_check
          %p387 = pneg %p182
        $region34: #{tpu_custom_call.1} parent=11 // pred_check_branch
          %389 = sbr.rel (%p387) target = $region36
        $region35: #{tpu_custom_call.1} parent=11 // pred_region
          %s391 = ssub.s32 16, 16
          %392 = vsyncadd [#allocation12], %s391
          %s394 = sshll.u32 [#allocation13], 4
          %s395 = int_to_ptr.vmem [resolvable:$true] %s394
          %397 = dma.hbm_to_vmem [thread:$0]  %s6, 16, %s395, [#allocation12]
        $region36: #{tpu_custom_call.1} parent=11 // pred_fallthru
          _
        // Predicated region
        $region37: #{tpu_custom_call.1} parent=11 // pred_check
          %p398 = pneg %p203
        $region38: #{tpu_custom_call.1} parent=11 // pred_check_branch
          %400 = sbr.rel (%p398) target = $region40
        $region39: #{tpu_custom_call.1} parent=11 // pred_region
          %s402 = ssub.s32 16, 16
          %403 = vsyncadd [#allocation15], %s402
          %s405 = sshll.u32 [#allocation14], 4
          %s406 = int_to_ptr.vmem [resolvable:$true] %s405
          %408 = dma.hbm_to_vmem [thread:$0]  %s7, 16, %s406, [#allocation15]
        $region40: #{tpu_custom_call.1} parent=11 // pred_fallthru
          _
        // Predicated region
        $region41: #{tpu_custom_call.1} parent=11 // pred_check
          %p409 = pneg %p224
        $region42: #{tpu_custom_call.1} parent=11 // pred_check_branch
          %411 = sbr.rel (%p409) target = $region44
        $region43: #{tpu_custom_call.1} parent=11 // pred_region
          %s413 = ssub.s32 256, 256
          %414 = vsyncadd [#allocation15], %s413
          %s415 = sshll.u32 [#allocation16], 4
          %s416 = int_to_ptr.vmem [resolvable:$true] %s415
          %421 = dma.hbm_to_vmem [thread:$0]  %s8, 256, %s416, [#allocation15], 64, 64, 4
        $region44: #{tpu_custom_call.1} parent=11 // pred_fallthru
          _
        // Predicated region
        $region45: #{tpu_custom_call.1} parent=11 // pred_check
          %p422 = pneg %p245
        $region46: #{tpu_custom_call.1} parent=11 // pred_check_branch
          %424 = sbr.rel (%p422) target = $region48
        $region47: #{tpu_custom_call.1} parent=11 // pred_region
          %s426 = ssub.s32 16, 16
          %427 = vsyncadd [#allocation18], %s426
          %s429 = sshll.u32 [#allocation17], 4
          %s430 = int_to_ptr.vmem [resolvable:$true] %s429
          %432 = dma.hbm_to_vmem [thread:$0]  %s9, 16, %s430, [#allocation18]
        $region48: #{tpu_custom_call.1} parent=11 // pred_fallthru
          _
        // Predicated region
        $region49: #{tpu_custom_call.1} parent=11 // pred_check
          %p433 = pneg %p266
        $region50: #{tpu_custom_call.1} parent=11 // pred_check_branch
          %435 = sbr.rel (%p433) target = $region52
        $region51: #{tpu_custom_call.1} parent=11 // pred_region
          %s437 = ssub.s32 512, 512
          %438 = vsyncadd [#allocation18], %s437
          %s439 = sshll.u32 [#allocation19], 4
          %s440 = int_to_ptr.vmem [resolvable:$true] %s439
          %445 = dma.hbm_to_vmem [thread:$0]  %s10, 512, %s440, [#allocation18], 64, 64, 4
        $region52: #{tpu_custom_call.1} parent=11 // pred_fallthru
          _
        // Predicated region
        $region53: #{tpu_custom_call.1} parent=11 // pred_check
          %p446 = pneg %p287
        $region54: #{tpu_custom_call.1} parent=11 // pred_check_branch
          %448 = sbr.rel (%p446) target = $region56
        $region55: #{tpu_custom_call.1} parent=11 // pred_region
          %s450 = ssub.s32 16, 16
          %451 = vsyncadd [#allocation21], %s450
          %s453 = sshll.u32 [#allocation20], 4
          %s454 = int_to_ptr.vmem [resolvable:$true] %s453
          %456 = dma.hbm_to_vmem [thread:$0]  %s11, 16, %s454, [#allocation21]
        $region56: #{tpu_custom_call.1} parent=11 // pred_fallthru
          _
      $region12: #{tpu_custom_call.1} parent=5 // pred_fallthru
        _
      %p457 = scmp.lt.s32.totalorder %s30, 2
      // Predicated region
      $region57: #{tpu_custom_call.1} parent=5 // pred_check
        %p458 = pneg %p457
      $region58: #{tpu_custom_call.1} parent=5 // pred_check_branch
        %460 = sbr.rel (%p458) target = $region60
      $region59: #{tpu_custom_call.1} parent=5 // pred_region
        // Predicated region
        $region61: #{tpu_custom_call.1} parent=59 // pred_check
          %p461 = pneg %p50
        $region62: #{tpu_custom_call.1} parent=59 // pred_check_branch
          %463 = sbr.rel (%p461) target = $region64
        $region63: #{tpu_custom_call.1} parent=59 // pred_region
          %s464 = sand.u32 %s40, 1
          %s465 = scalar_lea.sflag [#allocation3], %s464
          %s466 = sand.u32 %s40, 1
          %s467 = smul.addr %s466, 8
          %s468 = scalar_lea.vmem [#allocation2], %s467
          %s470 = ssub.s32 128, 128
          %471 = vsyncadd %s465, %s470
          %s472 = smul.addr %s30, 128
          %s473 = scalar_lea.hbm %s0, %s472
          %s475 = sshll.u32 %s468, 4
          %s476 = int_to_ptr.vmem [resolvable:$true] %s475
          %478 = dma.hbm_to_vmem [thread:$0]  %s473, 128, %s476, %s465
        $region64: #{tpu_custom_call.1} parent=59 // pred_fallthru
          _
      $region60: #{tpu_custom_call.1} parent=5 // pred_fallthru
        _
      %p479 = scmp.le.s32.totalorder 1, %s30
      %p480 = scmp.lt.s32.totalorder %s30, 3
      %p481 = pnand %p479, %p480
      %p482 = pneg %p481
      // Predicated region
      $region65: #{tpu_custom_call.1} parent=5 // pred_check
        _
      $region66: #{tpu_custom_call.1} parent=5 // pred_check_branch
        %484 = sbr.rel (%p481) target = $region68
      $region67: #{tpu_custom_call.1} parent=5 // pred_region
        %s485 = ssub.s32 %s30, 1
        %s486 = sand.u32 %s43, 1
        %s487 = scalar_lea.sflag [#allocation3], %s486
        %s488 = sand.u32 %s43, 1
        %s489 = smul.addr %s488, 8
        %s490 = scalar_lea.vmem [#allocation2], %s489
        // Predicated region
        $region69: #{tpu_custom_call.1} parent=67 // pred_check
          %p491 = pneg %p56
        $region70: #{tpu_custom_call.1} parent=67 // pred_check_branch
          %493 = sbr.rel (%p491) target = $region72
        $region71: #{tpu_custom_call.1} parent=67 // pred_region
          %494 = dma.done %s487, 128
        $region72: #{tpu_custom_call.1} parent=67 // pred_fallthru
          _
        // Predicated region
        $region73: #{tpu_custom_call.1} parent=67 // pred_check
          %p495 = pneg %p77
        $region74: #{tpu_custom_call.1} parent=67 // pred_check_branch
          %497 = sbr.rel (%p495) target = $region76
        $region75: #{tpu_custom_call.1} parent=67 // pred_region
          %498 = dma.done [#allocation6], 16
        $region76: #{tpu_custom_call.1} parent=67 // pred_fallthru
          _
        // Predicated region
        $region77: #{tpu_custom_call.1} parent=67 // pred_check
          %p499 = pneg %p98
        $region78: #{tpu_custom_call.1} parent=67 // pred_check_branch
          %501 = sbr.rel (%p499) target = $region80
        $region79: #{tpu_custom_call.1} parent=67 // pred_region
          %502 = dma.done [#allocation6], 16
        $region80: #{tpu_custom_call.1} parent=67 // pred_fallthru
          _
        // Predicated region
        $region81: #{tpu_custom_call.1} parent=67 // pred_check
          %p503 = pneg %p119
        $region82: #{tpu_custom_call.1} parent=67 // pred_check_branch
          %505 = sbr.rel (%p503) target = $region84
        $region83: #{tpu_custom_call.1} parent=67 // pred_region
          %506 = dma.done [#allocation9], 256
        $region84: #{tpu_custom_call.1} parent=67 // pred_fallthru
          _
        // Predicated region
        $region85: #{tpu_custom_call.1} parent=67 // pred_check
          %p507 = pneg %p140
        $region86: #{tpu_custom_call.1} parent=67 // pred_check_branch
          %509 = sbr.rel (%p507) target = $region88
        $region87: #{tpu_custom_call.1} parent=67 // pred_region
          %510 = dma.done [#allocation9], 256
        $region88: #{tpu_custom_call.1} parent=67 // pred_fallthru
          _
        // Predicated region
        $region89: #{tpu_custom_call.1} parent=67 // pred_check
          %p511 = pneg %p161
        $region90: #{tpu_custom_call.1} parent=67 // pred_check_branch
          %513 = sbr.rel (%p511) target = $region92
        $region91: #{tpu_custom_call.1} parent=67 // pred_region
          %514 = dma.done [#allocation12], 16
        $region92: #{tpu_custom_call.1} parent=67 // pred_fallthru
          _
        // Predicated region
        $region93: #{tpu_custom_call.1} parent=67 // pred_check
          %p515 = pneg %p182
        $region94: #{tpu_custom_call.1} parent=67 // pred_check_branch
          %517 = sbr.rel (%p515) target = $region96
        $region95: #{tpu_custom_call.1} parent=67 // pred_region
          %518 = dma.done [#allocation12], 16
        $region96: #{tpu_custom_call.1} parent=67 // pred_fallthru
          _
        // Predicated region
        $region97: #{tpu_custom_call.1} parent=67 // pred_check
          %p519 = pneg %p203
        $region98: #{tpu_custom_call.1} parent=67 // pred_check_branch
          %521 = sbr.rel (%p519) target = $region100
        $region99: #{tpu_custom_call.1} parent=67 // pred_region
          %522 = dma.done [#allocation15], 16
        $region100: #{tpu_custom_call.1} parent=67 // pred_fallthru
          _
        // Predicated region
        $region101: #{tpu_custom_call.1} parent=67 // pred_check
          %p523 = pneg %p224
        $region102: #{tpu_custom_call.1} parent=67 // pred_check_branch
          %525 = sbr.rel (%p523) target = $region104
        $region103: #{tpu_custom_call.1} parent=67 // pred_region
          %526 = dma.done [#allocation15], 256
        $region104: #{tpu_custom_call.1} parent=67 // pred_fallthru
          _
        // Predicated region
        $region105: #{tpu_custom_call.1} parent=67 // pred_check
          %p527 = pneg %p245
        $region106: #{tpu_custom_call.1} parent=67 // pred_check_branch
          %529 = sbr.rel (%p527) target = $region108
        $region107: #{tpu_custom_call.1} parent=67 // pred_region
          %530 = dma.done [#allocation18], 16
        $region108: #{tpu_custom_call.1} parent=67 // pred_fallthru
          _
        // Predicated region
        $region109: #{tpu_custom_call.1} parent=67 // pred_check
          %p531 = pneg %p266
        $region110: #{tpu_custom_call.1} parent=67 // pred_check_branch
          %533 = sbr.rel (%p531) target = $region112
        $region111: #{tpu_custom_call.1} parent=67 // pred_region
          %534 = dma.done [#allocation18], 512
        $region112: #{tpu_custom_call.1} parent=67 // pred_fallthru
          _
        // Predicated region
        $region113: #{tpu_custom_call.1} parent=67 // pred_check
          %p535 = pneg %p287
        $region114: #{tpu_custom_call.1} parent=67 // pred_check_branch
          %537 = sbr.rel (%p535) target = $region116
        $region115: #{tpu_custom_call.1} parent=67 // pred_region
          %538 = dma.done [#allocation21], 16
        $region116: #{tpu_custom_call.1} parent=67 // pred_fallthru
          _
        %s539 = sand.u32 %s43, 1
        %s540 = scalar_lea.sflag [#allocation3], %s539
        %s541 = sand.u32 %s43, 1
        %s542 = smul.addr %s541, 8
        %s543 = scalar_lea.vmem [#allocation2], %s542
        %p544 = pneg %p56
        %p545 = pneg %p53
        %p546 = pneg %p77
        %p547 = pneg %p74
        %p548 = pneg %p98
        %p549 = pneg %p95
        %p550 = pneg %p119
        %p551 = pneg %p116
        %p552 = pneg %p140
        %p553 = pneg %p137
        %p554 = pneg %p161
        %p555 = pneg %p158
        %p556 = pneg %p182
        %p557 = pneg %p179
        %p558 = pneg %p203
        %p559 = pneg %p200
        %p560 = pneg %p224
        %p561 = pneg %p221
        %p562 = pneg %p245
        %p563 = pneg %p242
        %p564 = pneg %p266
        %p565 = pneg %p263
        %p566 = pneg %p287
        %p567 = pneg %p284
        %p568 = pneg %p313
        %p569 = pneg %p310
        %s570 = sand.u32 %s300, 1
        %s571 = scalar_lea.sflag [#allocation4], %s570
        %s572 = sand.u32 %s300, 1
        %s573 = smul.addr %s572, 8
        %s574 = scalar_lea.vmem [#allocation22], %s573
        %v576 = vld [vmem:[%s490] sm:$0xff]
        %v577 = vld [vmem:[#allocation5] sm:$0x1]
        %v578 = vld [vmem:[#allocation7] sm:$0x1]
        %vm579 = vcmask 261120
        %v580 = vsel %vm579, %v576, 0.0
        %581 = vadd.xlane.f32.xlu0 %v580
        %v582 = vpop.xlane.xlu0 %581
        %v583 = vrcp.pop 32.0
        %v584 = vmul.f32 %v582, %v583
        %v585 = vsub.f32 %v576, %v584
        %v586 = vmul.f32 %v585, %v585
        %v587 = vsel %vm579, %v586, 0.0
        %588 = vadd.xlane.f32.xlu0 %v587
        %v589 = vpop.xlane.xlu0 %588
        %v590 = vmul.f32 %v589, %v583
        %v591 = vadd.f32 %v590, 1e-05
        %v592 = vrsqrt.pop %v591
        %v593 = vmul.f32 %v585, %v592
        %v595 = vlaneseq
        %v596 = vshrl.u32 %v595, 7
        %v597 = vsub.s32 0, %v596
        %v598 = vrot.slane %v577, %v597
        %v600 = vmul.f32 %v593, %v598
        %v602 = vlaneseq
        %v603 = vshrl.u32 %v602, 7
        %v604 = vsub.s32 0, %v603
        %v605 = vrot.slane %v578, %v604
        %v607 = vadd.f32 %v600, %v605
        %v608 = vpack.c.bf16 %v607, %v607
        %v609 = vld [vmem:[#allocation8] sm:$0xf]
        %v610 = vld [vmem:[#allocation8 + $0x4] sm:$0xf]
        %v611 = vld [vmem:[#allocation8 + $0x8] sm:$0xf]
        %v612 = vld [vmem:[#allocation8 + $0xc] sm:$0xf]
        %v617 = vunpack.c.l.b16 %v609
        %v618 = vunpack.c.l.b16 %v610
        %v619 = vunpack.c.l.b16 %v611
        %v620 = vunpack.c.l.b16 %v612
        %v621 = vpack.c.b16 %v618, %v617
        %v622 = vpack.c.b16 %v620, %v619
        %v626 = vsel %vm579, %v608, 0
        %628 = vmatprep.subr.bf16.mxu0 0
        %629 = vmatpush1.bf16.msra.mxu0 %v621
        %630 = vmatprep.subr.bf16.mxu0 0
        %631 = vmatpush1.bf16.msra.mxu0 %v622
        %632 = vmatprep.subr.bf16.mxu0 0
        %633 = vmatpush1.bf16.msra.mxu0 0
        %634 = vmatprep.subr.bf16.mxu0 0
        %635 = vmatpush1.bf16.msra.mxu0 0
        %636 = vmatprep.subr.bf16.mxu0 0
        %637 = vmatpush1.bf16.msra.mxu0 0
        %638 = vmatprep.subr.bf16.mxu0 0
        %639 = vmatpush1.bf16.msra.mxu0 0
        %640 = vmatprep.subr.bf16.mxu0 0
        %641 = vmatpush1.bf16.msra.mxu0 0
        %642 = vmatprep.subr.bf16.mxu0 0
        %643 = vmatpush1.bf16.msra.mxu0 0
        %644 = vmatprep.subr.bf16.mxu0 0
        %645 = vmatpush1.bf16.msra.mxu0 0
        %646 = vmatprep.subr.bf16.mxu0 0
        %647 = vmatpush1.bf16.msra.mxu0 0
        %648 = vmatprep.subr.bf16.mxu0 0
        %649 = vmatpush1.bf16.msra.mxu0 0
        %650 = vmatprep.subr.bf16.mxu0 0
        %651 = vmatpush1.bf16.msra.mxu0 0
        %652 = vmatprep.subr.bf16.mxu0 0
        %653 = vmatpush1.bf16.msra.mxu0 0
        %654 = vmatprep.subr.bf16.mxu0 0
        %655 = vmatpush1.bf16.msra.mxu0 0
        %656 = vmatprep.subr.bf16.mxu0 0
        %657 = vmatpush1.bf16.msra.mxu0 0
        %658 = vmatprep.subr.bf16.mxu0 0
        %659 = vmatpush1.bf16.msra.mxu0 0
        %660 = vmatprep.mubr.bf16.mxu0 0
        %661 = vmatmul.mubr.bf16.gmra.mrb[0].mxu0 %v626
        %v662 = vpop.f32.mrb[0].mxu0
        %v663 = vadd.f32 0.0, %v662
        %v664 = vpop.f32.mrb[0].mxu0
        %v665 = vpop.f32.mrb[0].mxu0
        %v666 = vpop.f32.mrb[0].mxu0
        %667 = vdwg.mxu0
        %v668 = vpack.c.bf16 %v663, %v663
        %670 = vrot.lane.b32.xlu0 %v668, 120
        %v671 = vpop.permute.xlu0 %670
        %672 = vrot.lane.b32.xlu0 %v668, 112
        %v673 = vpop.permute.xlu0 %672
        %674 = vrot.lane.b32.xlu0 %v668, 104
        %v675 = vpop.permute.xlu0 %674
        %676 = vrot.lane.b32.xlu0 %v668, 96
        %v677 = vpop.permute.xlu0 %676
        %vm678 = vcmask 64512
        %v680 = vsel %vm678, %v668, 0
        %v683 = vsel %vm678, %v677, 0
        %685 = vmatprep.subr.bf16.mxu0 0
        %686 = vmatpush1.bf16.xpose.msra.mxu0 %v683
        %687 = vmatprep.subr.bf16.mxu0 0
        %688 = vmatpush1.bf16.xpose.msra.mxu0 0
        %689 = vmatprep.subr.bf16.mxu0 0
        %690 = vmatpush1.bf16.xpose.msra.mxu0 0
        %691 = vmatprep.subr.bf16.mxu0 0
        %692 = vmatpush1.bf16.xpose.msra.mxu0 0
        %693 = vmatprep.subr.bf16.mxu0 0
        %694 = vmatpush1.bf16.xpose.msra.mxu0 0
        %695 = vmatprep.subr.bf16.mxu0 0
        %696 = vmatpush1.bf16.xpose.msra.mxu0 0
        %697 = vmatprep.subr.bf16.mxu0 0
        %698 = vmatpush1.bf16.xpose.msra.mxu0 0
        %699 = vmatprep.subr.bf16.mxu0 0
        %700 = vmatpush1.bf16.xpose.msra.mxu0 0
        %701 = vmatprep.subr.bf16.mxu0 0
        %702 = vmatpush1.bf16.xpose.msra.mxu0 0
        %703 = vmatprep.subr.bf16.mxu0 0
        %704 = vmatpush1.bf16.xpose.msra.mxu0 0
        %705 = vmatprep.subr.bf16.mxu0 0
        %706 = vmatpush1.bf16.xpose.msra.mxu0 0
        %707 = vmatprep.subr.bf16.mxu0 0
        %708 = vmatpush1.bf16.xpose.msra.mxu0 0
        %709 = vmatprep.subr.bf16.mxu0 0
        %710 = vmatpush1.bf16.xpose.msra.mxu0 0
        %711 = vmatprep.subr.bf16.mxu0 0
        %712 = vmatpush1.bf16.xpose.msra.mxu0 0
        %713 = vmatprep.subr.bf16.mxu0 0
        %714 = vmatpush1.bf16.xpose.msra.mxu0 0
        %715 = vmatprep.subr.bf16.mxu0 0
        %716 = vmatpush1.bf16.xpose.msra.mxu0 0
        %717 = vmatprep.mubr.bf16.mxu0 0
        %718 = vmatmul.mubr.bf16.gmra.mrb[0].mxu0 %v680
        %v719 = vpop.f32.mrb[0].mxu0
        %v720 = vadd.f32 0.0, %v719
        %v721 = vpop.f32.mrb[0].mxu0
        %v722 = vpop.f32.mrb[0].mxu0
        %v723 = vpop.f32.mrb[0].mxu0
        %724 = vdwg.mxu0
        %725 = vrot.lane.b32.xlu0 %v671, 96
        %v726 = vpop.permute.xlu0 %725
        %v728 = vsel %vm678, %v671, 0
        %v731 = vsel %vm678, %v726, 0
        %733 = vmatprep.subr.bf16.mxu0 0
        %734 = vmatpush1.bf16.xpose.msra.mxu0 %v731
        %735 = vmatprep.subr.bf16.mxu0 0
        %736 = vmatpush1.bf16.xpose.msra.mxu0 0
        %737 = vmatprep.subr.bf16.mxu0 0
        %738 = vmatpush1.bf16.xpose.msra.mxu0 0
        %739 = vmatprep.subr.bf16.mxu0 0
        %740 = vmatpush1.bf16.xpose.msra.mxu0 0
        %741 = vmatprep.subr.bf16.mxu0 0
        %742 = vmatpush1.bf16.xpose.msra.mxu0 0
        %743 = vmatprep.subr.bf16.mxu0 0
        %744 = vmatpush1.bf16.xpose.msra.mxu0 0
        %745 = vmatprep.subr.bf16.mxu0 0
        %746 = vmatpush1.bf16.xpose.msra.mxu0 0
        %747 = vmatprep.subr.bf16.mxu0 0
        %748 = vmatpush1.bf16.xpose.msra.mxu0 0
        %749 = vmatprep.subr.bf16.mxu0 0
        %750 = vmatpush1.bf16.xpose.msra.mxu0 0
        %751 = vmatprep.subr.bf16.mxu0 0
        %752 = vmatpush1.bf16.xpose.msra.mxu0 0
        %753 = vmatprep.subr.bf16.mxu0 0
        %754 = vmatpush1.bf16.xpose.msra.mxu0 0
        %755 = vmatprep.subr.bf16.mxu0 0
        %756 = vmatpush1.bf16.xpose.msra.mxu0 0
        %757 = vmatprep.subr.bf16.mxu0 0
        %758 = vmatpush1.bf16.xpose.msra.mxu0 0
        %759 = vmatprep.subr.bf16.mxu0 0
        %760 = vmatpush1.bf16.xpose.msra.mxu0 0
        %761 = vmatprep.subr.bf16.mxu0 0
        %762 = vmatpush1.bf16.xpose.msra.mxu0 0
        %763 = vmatprep.subr.bf16.mxu0 0
        %764 = vmatpush1.bf16.xpose.msra.mxu0 0
        %765 = vmatprep.mubr.bf16.mxu0 0
        %766 = vmatmul.mubr.bf16.gmra.mrb[0].mxu0 %v728
        %v767 = vpop.f32.mrb[0].mxu0
        %v768 = vadd.f32 0.0, %v767
        %v769 = vpop.f32.mrb[0].mxu0
        %v770 = vpop.f32.mrb[0].mxu0
        %v771 = vpop.f32.mrb[0].mxu0
        %772 = vdwg.mxu0
        %773 = vrot.lane.b32.xlu0 %v673, 96
        %v774 = vpop.permute.xlu0 %773
        %v776 = vsel %vm678, %v673, 0
        %v779 = vsel %vm678, %v774, 0
        %781 = vmatprep.subr.bf16.mxu0 0
        %782 = vmatpush1.bf16.xpose.msra.mxu0 %v779
        %783 = vmatprep.subr.bf16.mxu0 0
        %784 = vmatpush1.bf16.xpose.msra.mxu0 0
        %785 = vmatprep.subr.bf16.mxu0 0
        %786 = vmatpush1.bf16.xpose.msra.mxu0 0
        %787 = vmatprep.subr.bf16.mxu0 0
        %788 = vmatpush1.bf16.xpose.msra.mxu0 0
        %789 = vmatprep.subr.bf16.mxu0 0
        %790 = vmatpush1.bf16.xpose.msra.mxu0 0
        %791 = vmatprep.subr.bf16.mxu0 0
        %792 = vmatpush1.bf16.xpose.msra.mxu0 0
        %793 = vmatprep.subr.bf16.mxu0 0
        %794 = vmatpush1.bf16.xpose.msra.mxu0 0
        %795 = vmatprep.subr.bf16.mxu0 0
        %796 = vmatpush1.bf16.xpose.msra.mxu0 0
        %797 = vmatprep.subr.bf16.mxu0 0
        %798 = vmatpush1.bf16.xpose.msra.mxu0 0
        %799 = vmatprep.subr.bf16.mxu0 0
        %800 = vmatpush1.bf16.xpose.msra.mxu0 0
        %801 = vmatprep.subr.bf16.mxu0 0
        %802 = vmatpush1.bf16.xpose.msra.mxu0 0
        %803 = vmatprep.subr.bf16.mxu0 0
        %804 = vmatpush1.bf16.xpose.msra.mxu0 0
        %805 = vmatprep.subr.bf16.mxu0 0
        %806 = vmatpush1.bf16.xpose.msra.mxu0 0
        %807 = vmatprep.subr.bf16.mxu0 0
        %808 = vmatpush1.bf16.xpose.msra.mxu0 0
        %809 = vmatprep.subr.bf16.mxu0 0
        %810 = vmatpush1.bf16.xpose.msra.mxu0 0
        %811 = vmatprep.subr.bf16.mxu0 0
        %812 = vmatpush1.bf16.xpose.msra.mxu0 0
        %813 = vmatprep.mubr.bf16.mxu0 0
        %814 = vmatmul.mubr.bf16.gmra.mrb[0].mxu0 %v776
        %v815 = vpop.f32.mrb[0].mxu0
        %v816 = vadd.f32 0.0, %v815
        %v817 = vpop.f32.mrb[0].mxu0
        %v818 = vpop.f32.mrb[0].mxu0
        %v819 = vpop.f32.mrb[0].mxu0
        %820 = vdwg.mxu0
        %821 = vrot.lane.b32.xlu0 %v675, 96
        %v822 = vpop.permute.xlu0 %821
        %v824 = vsel %vm678, %v675, 0
        %v827 = vsel %vm678, %v822, 0
        %829 = vmatprep.subr.bf16.mxu0 0
        %830 = vmatpush1.bf16.xpose.msra.mxu0 %v827
        %831 = vmatprep.subr.bf16.mxu0 0
        %832 = vmatpush1.bf16.xpose.msra.mxu0 0
        %833 = vmatprep.subr.bf16.mxu0 0
        %834 = vmatpush1.bf16.xpose.msra.mxu0 0
        %835 = vmatprep.subr.bf16.mxu0 0
        %836 = vmatpush1.bf16.xpose.msra.mxu0 0
        %837 = vmatprep.subr.bf16.mxu0 0
        %838 = vmatpush1.bf16.xpose.msra.mxu0 0
        %839 = vmatprep.subr.bf16.mxu0 0
        %840 = vmatpush1.bf16.xpose.msra.mxu0 0
        %841 = vmatprep.subr.bf16.mxu0 0
        %842 = vmatpush1.bf16.xpose.msra.mxu0 0
        %843 = vmatprep.subr.bf16.mxu0 0
        %844 = vmatpush1.bf16.xpose.msra.mxu0 0
        %845 = vmatprep.subr.bf16.mxu0 0
        %846 = vmatpush1.bf16.xpose.msra.mxu0 0
        %847 = vmatprep.subr.bf16.mxu0 0
        %848 = vmatpush1.bf16.xpose.msra.mxu0 0
        %849 = vmatprep.subr.bf16.mxu0 0
        %850 = vmatpush1.bf16.xpose.msra.mxu0 0
        %851 = vmatprep.subr.bf16.mxu0 0
        %852 = vmatpush1.bf16.xpose.msra.mxu0 0
        %853 = vmatprep.subr.bf16.mxu0 0
        %854 = vmatpush1.bf16.xpose.msra.mxu0 0
        %855 = vmatprep.subr.bf16.mxu0 0
        %856 = vmatpush1.bf16.xpose.msra.mxu0 0
        %857 = vmatprep.subr.bf16.mxu0 0
        %858 = vmatpush1.bf16.xpose.msra.mxu0 0
        %859 = vmatprep.subr.bf16.mxu0 0
        %860 = vmatpush1.bf16.xpose.msra.mxu0 0
        %861 = vmatprep.mubr.bf16.mxu0 0
        %862 = vmatmul.mubr.bf16.gmra.mrb[0].mxu0 %v824
        %v863 = vpop.f32.mrb[0].mxu0
        %v864 = vadd.f32 0.0, %v863
        %v865 = vpop.f32.mrb[0].mxu0
        %v866 = vpop.f32.mrb[0].mxu0
        %v867 = vpop.f32.mrb[0].mxu0
        %868 = vdwg.mxu0
        %v869 = vsel %vm678, %v720, -inf
        %870 = vmax.xlane.f32.xlu0 %v869
        %v871 = vpop.xlane.xlu0 %870
        %v872 = vsel %vm678, %v768, -inf
        %873 = vmax.xlane.f32.xlu0 %v872
        %v874 = vpop.xlane.xlu0 %873
        %v875 = vsel %vm678, %v816, -inf
        %876 = vmax.xlane.f32.xlu0 %v875
        %v877 = vpop.xlane.xlu0 %876
        %v878 = vsel %vm678, %v864, -inf
        %879 = vmax.xlane.f32.xlu0 %v878
        %v880 = vpop.xlane.xlu0 %879
        %v881 = vsub.f32 %v720, %v871
        %v882 = vsub.f32 %v768, %v874
        %v883 = vsub.f32 %v816, %v877
        %v884 = vsub.f32 %v864, %v880
        %v885 = vmul.f32 %v881, 1.442695
        %v886 = vpow.pop %v885
        %v887 = vmul.f32 %v882, 1.442695
        %v888 = vpow.pop %v887
        %v889 = vmul.f32 %v883, 1.442695
        %v890 = vpow.pop %v889
        %v891 = vmul.f32 %v884, 1.442695
        %v892 = vpow.pop %v891
        %v893 = vsel %vm678, %v886, 0.0
        %894 = vadd.xlane.f32.xlu0 %v893
        %v895 = vpop.xlane.xlu0 %894
        %v896 = vsel %vm678, %v888, 0.0
        %897 = vadd.xlane.f32.xlu0 %v896
        %v898 = vpop.xlane.xlu0 %897
        %v899 = vsel %vm678, %v890, 0.0
        %900 = vadd.xlane.f32.xlu0 %v899
        %v901 = vpop.xlane.xlu0 %900
        %v902 = vsel %vm678, %v892, 0.0
        %903 = vadd.xlane.f32.xlu0 %v902
        %v904 = vpop.xlane.xlu0 %903
        %v905 = vrcp.pop %v895
        %v906 = vrcp.pop %v898
        %v907 = vrcp.pop %v901
        %v908 = vrcp.pop %v904
        %v909 = vmul.f32 %v886, %v905
        %v910 = vmul.f32 %v888, %v906
        %v911 = vmul.f32 %v890, %v907
        %v912 = vmul.f32 %v892, %v908
        %v913 = vpack.c.bf16 %v909, %v909
        %v914 = vpack.c.bf16 %v910, %v910
        %v915 = vpack.c.bf16 %v911, %v911
        %v916 = vpack.c.bf16 %v912, %v912
        %917 = vrot.lane.b32.xlu0 %v668, 64
        %v918 = vpop.permute.xlu0 %917
        %v920 = vsel %vm678, %v913, 0
        %vm922 = vcmask 1043456
        %v924 = vsel %vm922, %v918, 0
        %926 = vmatprep.subr.bf16.mxu0 0
        %927 = vmatpush1.bf16.msra.mxu0 %v924
        %928 = vmatprep.subr.bf16.mxu0 0
        %929 = vmatpush1.bf16.msra.mxu0 0
        %930 = vmatprep.subr.bf16.mxu0 0
        %931 = vmatpush1.bf16.msra.mxu0 0
        %932 = vmatprep.subr.bf16.mxu0 0
        %933 = vmatpush1.bf16.msra.mxu0 0
        %934 = vmatprep.subr.bf16.mxu0 0
        %935 = vmatpush1.bf16.msra.mxu0 0
        %936 = vmatprep.subr.bf16.mxu0 0
        %937 = vmatpush1.bf16.msra.mxu0 0
        %938 = vmatprep.subr.bf16.mxu0 0
        %939 = vmatpush1.bf16.msra.mxu0 0
        %940 = vmatprep.subr.bf16.mxu0 0
        %941 = vmatpush1.bf16.msra.mxu0 0
        %942 = vmatprep.subr.bf16.mxu0 0
        %943 = vmatpush1.bf16.msra.mxu0 0
        %944 = vmatprep.subr.bf16.mxu0 0
        %945 = vmatpush1.bf16.msra.mxu0 0
        %946 = vmatprep.subr.bf16.mxu0 0
        %947 = vmatpush1.bf16.msra.mxu0 0
        %948 = vmatprep.subr.bf16.mxu0 0
        %949 = vmatpush1.bf16.msra.mxu0 0
        %950 = vmatprep.subr.bf16.mxu0 0
        %951 = vmatpush1.bf16.msra.mxu0 0
        %952 = vmatprep.subr.bf16.mxu0 0
        %953 = vmatpush1.bf16.msra.mxu0 0
        %954 = vmatprep.subr.bf16.mxu0 0
        %955 = vmatpush1.bf16.msra.mxu0 0
        %956 = vmatprep.subr.bf16.mxu0 0
        %957 = vmatpush1.bf16.msra.mxu0 0
        %958 = vmatprep.mubr.bf16.mxu0 0
        %959 = vmatmul.mubr.bf16.gmra.mrb[0].mxu0 %v920
        %v960 = vpop.f32.mrb[0].mxu0
        %v961 = vadd.f32 0.0, %v960
        %v962 = vpop.f32.mrb[0].mxu0
        %v963 = vpop.f32.mrb[0].mxu0
        %v964 = vpop.f32.mrb[0].mxu0
        %965 = vdwg.mxu0
        %966 = vrot.lane.b32.xlu0 %v671, 64
        %v967 = vpop.permute.xlu0 %966
        %v969 = vsel %vm678, %v914, 0
        %v972 = vsel %vm922, %v967, 0
        %974 = vmatprep.subr.bf16.mxu0 0
        %975 = vmatpush1.bf16.msra.mxu0 %v972
        %976 = vmatprep.subr.bf16.mxu0 0
        %977 = vmatpush1.bf16.msra.mxu0 0
        %978 = vmatprep.subr.bf16.mxu0 0
        %979 = vmatpush1.bf16.msra.mxu0 0
        %980 = vmatprep.subr.bf16.mxu0 0
        %981 = vmatpush1.bf16.msra.mxu0 0
        %982 = vmatprep.subr.bf16.mxu0 0
        %983 = vmatpush1.bf16.msra.mxu0 0
        %984 = vmatprep.subr.bf16.mxu0 0
        %985 = vmatpush1.bf16.msra.mxu0 0
        %986 = vmatprep.subr.bf16.mxu0 0
        %987 = vmatpush1.bf16.msra.mxu0 0
        %988 = vmatprep.subr.bf16.mxu0 0
        %989 = vmatpush1.bf16.msra.mxu0 0
        %990 = vmatprep.subr.bf16.mxu0 0
        %991 = vmatpush1.bf16.msra.mxu0 0
        %992 = vmatprep.subr.bf16.mxu0 0
        %993 = vmatpush1.bf16.msra.mxu0 0
        %994 = vmatprep.subr.bf16.mxu0 0
        %995 = vmatpush1.bf16.msra.mxu0 0
        %996 = vmatprep.subr.bf16.mxu0 0
        %997 = vmatpush1.bf16.msra.mxu0 0
        %998 = vmatprep.subr.bf16.mxu0 0
        %999 = vmatpush1.bf16.msra.mxu0 0
        %1000 = vmatprep.subr.bf16.mxu0 0
        %1001 = vmatpush1.bf16.msra.mxu0 0
        %1002 = vmatprep.subr.bf16.mxu0 0
        %1003 = vmatpush1.bf16.msra.mxu0 0
        %1004 = vmatprep.subr.bf16.mxu0 0
        %1005 = vmatpush1.bf16.msra.mxu0 0
        %1006 = vmatprep.mubr.bf16.mxu0 0
        %1007 = vmatmul.mubr.bf16.gmra.mrb[0].mxu0 %v969
        %v1008 = vpop.f32.mrb[0].mxu0
        %v1009 = vadd.f32 0.0, %v1008
        %v1010 = vpop.f32.mrb[0].mxu0
        %v1011 = vpop.f32.mrb[0].mxu0
        %v1012 = vpop.f32.mrb[0].mxu0
        %1013 = vdwg.mxu0
        %1014 = vrot.lane.b32.xlu0 %v673, 64
        %v1015 = vpop.permute.xlu0 %1014
        %v1017 = vsel %vm678, %v915, 0
        %v1020 = vsel %vm922, %v1015, 0
        %1022 = vmatprep.subr.bf16.mxu0 0
        %1023 = vmatpush1.bf16.msra.mxu0 %v1020
        %1024 = vmatprep.subr.bf16.mxu0 0
        %1025 = vmatpush1.bf16.msra.mxu0 0
        %1026 = vmatprep.subr.bf16.mxu0 0
        %1027 = vmatpush1.bf16.msra.mxu0 0
        %1028 = vmatprep.subr.bf16.mxu0 0
        %1029 = vmatpush1.bf16.msra.mxu0 0
        %1030 = vmatprep.subr.bf16.mxu0 0
        %1031 = vmatpush1.bf16.msra.mxu0 0
        %1032 = vmatprep.subr.bf16.mxu0 0
        %1033 = vmatpush1.bf16.msra.mxu0 0
        %1034 = vmatprep.subr.bf16.mxu0 0
        %1035 = vmatpush1.bf16.msra.mxu0 0
        %1036 = vmatprep.subr.bf16.mxu0 0
        %1037 = vmatpush1.bf16.msra.mxu0 0
        %1038 = vmatprep.subr.bf16.mxu0 0
        %1039 = vmatpush1.bf16.msra.mxu0 0
        %1040 = vmatprep.subr.bf16.mxu0 0
        %1041 = vmatpush1.bf16.msra.mxu0 0
        %1042 = vmatprep.subr.bf16.mxu0 0
        %1043 = vmatpush1.bf16.msra.mxu0 0
        %1044 = vmatprep.subr.bf16.mxu0 0
        %1045 = vmatpush1.bf16.msra.mxu0 0
        %1046 = vmatprep.subr.bf16.mxu0 0
        %1047 = vmatpush1.bf16.msra.mxu0 0
        %1048 = vmatprep.subr.bf16.mxu0 0
        %1049 = vmatpush1.bf16.msra.mxu0 0
        %1050 = vmatprep.subr.bf16.mxu0 0
        %1051 = vmatpush1.bf16.msra.mxu0 0
        %1052 = vmatprep.subr.bf16.mxu0 0
        %1053 = vmatpush1.bf16.msra.mxu0 0
        %1054 = vmatprep.mubr.bf16.mxu0 0
        %1055 = vmatmul.mubr.bf16.gmra.mrb[0].mxu0 %v1017
        %v1056 = vpop.f32.mrb[0].mxu0
        %v1057 = vadd.f32 0.0, %v1056
        %v1058 = vpop.f32.mrb[0].mxu0
        %v1059 = vpop.f32.mrb[0].mxu0
        %v1060 = vpop.f32.mrb[0].mxu0
        %1061 = vdwg.mxu0
        %1062 = vrot.lane.b32.xlu0 %v675, 64
        %v1063 = vpop.permute.xlu0 %1062
        %v1065 = vsel %vm678, %v916, 0
        %v1068 = vsel %vm922, %v1063, 0
        %1070 = vmatprep.subr.bf16.mxu0 0
        %1071 = vmatpush1.bf16.msra.mxu0 %v1068
        %1072 = vmatprep.subr.bf16.mxu0 0
        %1073 = vmatpush1.bf16.msra.mxu0 0
        %1074 = vmatprep.subr.bf16.mxu0 0
        %1075 = vmatpush1.bf16.msra.mxu0 0
        %1076 = vmatprep.subr.bf16.mxu0 0
        %1077 = vmatpush1.bf16.msra.mxu0 0
        %1078 = vmatprep.subr.bf16.mxu0 0
        %1079 = vmatpush1.bf16.msra.mxu0 0
        %1080 = vmatprep.subr.bf16.mxu0 0
        %1081 = vmatpush1.bf16.msra.mxu0 0
        %1082 = vmatprep.subr.bf16.mxu0 0
        %1083 = vmatpush1.bf16.msra.mxu0 0
        %1084 = vmatprep.subr.bf16.mxu0 0
        %1085 = vmatpush1.bf16.msra.mxu0 0
        %1086 = vmatprep.subr.bf16.mxu0 0
        %1087 = vmatpush1.bf16.msra.mxu0 0
        %1088 = vmatprep.subr.bf16.mxu0 0
        %1089 = vmatpush1.bf16.msra.mxu0 0
        %1090 = vmatprep.subr.bf16.mxu0 0
        %1091 = vmatpush1.bf16.msra.mxu0 0
        %1092 = vmatprep.subr.bf16.mxu0 0
        %1093 = vmatpush1.bf16.msra.mxu0 0
        %1094 = vmatprep.subr.bf16.mxu0 0
        %1095 = vmatpush1.bf16.msra.mxu0 0
        %1096 = vmatprep.subr.bf16.mxu0 0
        %1097 = vmatpush1.bf16.msra.mxu0 0
        %1098 = vmatprep.subr.bf16.mxu0 0
        %1099 = vmatpush1.bf16.msra.mxu0 0
        %1100 = vmatprep.subr.bf16.mxu0 0
        %1101 = vmatpush1.bf16.msra.mxu0 0
        %1102 = vmatprep.mubr.bf16.mxu0 0
        %1103 = vmatmul.mubr.bf16.gmra.mrb[0].mxu0 %v1065
        %v1104 = vpop.f32.mrb[0].mxu0
        %v1105 = vadd.f32 0.0, %v1104
        %v1106 = vpop.f32.mrb[0].mxu0
        %v1107 = vpop.f32.mrb[0].mxu0
        %v1108 = vpop.f32.mrb[0].mxu0
        %1109 = vdwg.mxu0
        %v1110 = vpack.c.bf16 %v961, %v961
        %v1111 = vpack.c.bf16 %v1009, %v1009
        %v1112 = vpack.c.bf16 %v1057, %v1057
        %v1113 = vpack.c.bf16 %v1105, %v1105
        %1115 = vrot.lane.b32.xlu0 %v1111, 8
        %v1116 = vpop.permute.xlu0 %1115
        %1118 = vrot.lane.b32.xlu0 %v1112, 16
        %v1119 = vpop.permute.xlu0 %1118
        %1121 = vrot.lane.b32.xlu0 %v1113, 24
        %v1122 = vpop.permute.xlu0 %1121
        %v1125 = vsel %vm678, %v1110, %v1116
        %vm1126 = vcmask 130048
        %v1128 = vsel %vm1126, %v1125, %v1119
        %vm1129 = vcmask 195584
        %v1131 = vsel %vm1129, %v1128, %v1122
        %v1132 = vld [vmem:[#allocation10] sm:$0xf]
        %v1133 = vld [vmem:[#allocation10 + $0x4] sm:$0xf]
        %v1134 = vld [vmem:[#allocation10 + $0x8] sm:$0xf]
        %v1135 = vld [vmem:[#allocation10 + $0xc] sm:$0xf]
        %v1140 = vunpack.c.l.b16 %v1132
        %v1141 = vunpack.c.l.b16 %v1133
        %v1142 = vunpack.c.l.b16 %v1134
        %v1143 = vunpack.c.l.b16 %v1135
        %v1144 = vpack.c.b16 %v1141, %v1140
        %v1145 = vpack.c.b16 %v1143, %v1142
        %v1148 = vsel %vm579, %v1131, 0
        %1150 = vmatprep.subr.bf16.mxu0 0
        %1151 = vmatpush1.bf16.msra.mxu0 %v1144
        %1152 = vmatprep.subr.bf16.mxu0 0
        %1153 = vmatpush1.bf16.msra.mxu0 %v1145
        %1154 = vmatprep.subr.bf16.mxu0 0
        %1155 = vmatpush1.bf16.msra.mxu0 0
        %1156 = vmatprep.subr.bf16.mxu0 0
        %1157 = vmatpush1.bf16.msra.mxu0 0
        %1158 = vmatprep.subr.bf16.mxu0 0
        %1159 = vmatpush1.bf16.msra.mxu0 0
        %1160 = vmatprep.subr.bf16.mxu0 0
        %1161 = vmatpush1.bf16.msra.mxu0 0
        %1162 = vmatprep.subr.bf16.mxu0 0
        %1163 = vmatpush1.bf16.msra.mxu0 0
        %1164 = vmatprep.subr.bf16.mxu0 0
        %1165 = vmatpush1.bf16.msra.mxu0 0
        %1166 = vmatprep.subr.bf16.mxu0 0
        %1167 = vmatpush1.bf16.msra.mxu0 0
        %1168 = vmatprep.subr.bf16.mxu0 0
        %1169 = vmatpush1.bf16.msra.mxu0 0
        %1170 = vmatprep.subr.bf16.mxu0 0
        %1171 = vmatpush1.bf16.msra.mxu0 0
        %1172 = vmatprep.subr.bf16.mxu0 0
        %1173 = vmatpush1.bf16.msra.mxu0 0
        %1174 = vmatprep.subr.bf16.mxu0 0
        %1175 = vmatpush1.bf16.msra.mxu0 0
        %1176 = vmatprep.subr.bf16.mxu0 0
        %1177 = vmatpush1.bf16.msra.mxu0 0
        %1178 = vmatprep.subr.bf16.mxu0 0
        %1179 = vmatpush1.bf16.msra.mxu0 0
        %1180 = vmatprep.subr.bf16.mxu0 0
        %1181 = vmatpush1.bf16.msra.mxu0 0
        %1182 = vmatprep.mubr.bf16.mxu0 0
        %1183 = vmatmul.mubr.bf16.gmra.mrb[0].mxu0 %v1148
        %v1184 = vpop.f32.mrb[0].mxu0
        %v1185 = vadd.f32 0.0, %v1184
        %v1186 = vpop.f32.mrb[0].mxu0
        %v1187 = vpop.f32.mrb[0].mxu0
        %v1188 = vpop.f32.mrb[0].mxu0
        %1189 = vdwg.mxu0
        %v1190 = vadd.f32 %v576, %v1185
        %v1191 = vld [vmem:[#allocation11] sm:$0x1]
        %v1193 = vlaneseq
        %v1194 = vshrl.u32 %v1193, 7
        %v1195 = vsub.s32 0, %v1194
        %v1196 = vrot.slane %v1191, %v1195
        %v1198 = vadd.f32 %v1190, %v1196
        %v1199 = vld [vmem:[#allocation13] sm:$0x1]
        %v1200 = vld [vmem:[#allocation14] sm:$0x1]
        %v1201 = vsel %vm579, %v1198, 0.0
        %1202 = vadd.xlane.f32.xlu0 %v1201
        %v1203 = vpop.xlane.xlu0 %1202
        %v1204 = vmul.f32 %v1203, %v583
        %v1205 = vsub.f32 %v1198, %v1204
        %v1206 = vmul.f32 %v1205, %v1205
        %v1207 = vsel %vm579, %v1206, 0.0
        %1208 = vadd.xlane.f32.xlu0 %v1207
        %v1209 = vpop.xlane.xlu0 %1208
        %v1210 = vmul.f32 %v1209, %v583
        %v1211 = vadd.f32 %v1210, 1e-05
        %v1212 = vrsqrt.pop %v1211
        %v1213 = vmul.f32 %v1205, %v1212
        %v1215 = vlaneseq
        %v1216 = vshrl.u32 %v1215, 7
        %v1217 = vsub.s32 0, %v1216
        %v1218 = vrot.slane %v1199, %v1217
        %v1220 = vmul.f32 %v1213, %v1218
        %v1222 = vlaneseq
        %v1223 = vshrl.u32 %v1222, 7
        %v1224 = vsub.s32 0, %v1223
        %v1225 = vrot.slane %v1200, %v1224
        %v1227 = vadd.f32 %v1220, %v1225
        %v1228 = vpack.c.bf16 %v1227, %v1227
        %v1229 = vld [vmem:[#allocation16] sm:$0xf]
        %v1230 = vld [vmem:[#allocation16 + $0x4] sm:$0xf]
        %v1231 = vld [vmem:[#allocation16 + $0x8] sm:$0xf]
        %v1232 = vld [vmem:[#allocation16 + $0xc] sm:$0xf]
        %v1233 = vld [vmem:[#allocation17] sm:$0x1]
        %v1235 = vlaneseq
        %v1236 = vshrl.u32 %v1235, 7
        %v1237 = vsub.s32 0, %v1236
        %v1238 = vrot.slane %v1233, %v1237
        %v1244 = vunpack.c.l.b16 %v1229
        %v1245 = vunpack.c.l.b16 %v1230
        %v1246 = vunpack.c.l.b16 %v1231
        %v1247 = vunpack.c.l.b16 %v1232
        %v1248 = vpack.c.b16 %v1245, %v1244
        %v1249 = vpack.c.b16 %v1247, %v1246
        %v1253 = vsel %vm579, %v1228, 0
        %1255 = vmatprep.subr.bf16.mxu0 0
        %1256 = vmatpush1.bf16.msra.mxu0 %v1248
        %1257 = vmatprep.subr.bf16.mxu0 0
        %1258 = vmatpush1.bf16.msra.mxu0 %v1249
        %1259 = vmatprep.subr.bf16.mxu0 0
        %1260 = vmatpush1.bf16.msra.mxu0 0
        %1261 = vmatprep.subr.bf16.mxu0 0
        %1262 = vmatpush1.bf16.msra.mxu0 0
        %1263 = vmatprep.subr.bf16.mxu0 0
        %1264 = vmatpush1.bf16.msra.mxu0 0
        %1265 = vmatprep.subr.bf16.mxu0 0
        %1266 = vmatpush1.bf16.msra.mxu0 0
        %1267 = vmatprep.subr.bf16.mxu0 0
        %1268 = vmatpush1.bf16.msra.mxu0 0
        %1269 = vmatprep.subr.bf16.mxu0 0
        %1270 = vmatpush1.bf16.msra.mxu0 0
        %1271 = vmatprep.subr.bf16.mxu0 0
        %1272 = vmatpush1.bf16.msra.mxu0 0
        %1273 = vmatprep.subr.bf16.mxu0 0
        %1274 = vmatpush1.bf16.msra.mxu0 0
        %1275 = vmatprep.subr.bf16.mxu0 0
        %1276 = vmatpush1.bf16.msra.mxu0 0
        %1277 = vmatprep.subr.bf16.mxu0 0
        %1278 = vmatpush1.bf16.msra.mxu0 0
        %1279 = vmatprep.subr.bf16.mxu0 0
        %1280 = vmatpush1.bf16.msra.mxu0 0
        %1281 = vmatprep.subr.bf16.mxu0 0
        %1282 = vmatpush1.bf16.msra.mxu0 0
        %1283 = vmatprep.subr.bf16.mxu0 0
        %1284 = vmatpush1.bf16.msra.mxu0 0
        %1285 = vmatprep.subr.bf16.mxu0 0
        %1286 = vmatpush1.bf16.msra.mxu0 0
        %1287 = vmatprep.mubr.bf16.mxu0 0
        %1288 = vmatmul.mubr.bf16.gmra.mrb[0].mxu0 %v1253
        %v1289 = vpop.f32.mrb[0].mxu0
        %v1290 = vadd.f32 %v1238, %v1289
        %v1291 = vpop.f32.mrb[0].mxu0
        %v1292 = vpop.f32.mrb[0].mxu0
        %v1293 = vpop.f32.mrb[0].mxu0
        %1294 = vdwg.mxu0
        %v1295 = vmul.f32 %v1290, 0.5
        %v1296 = vmul.f32 %v1290, 0.70710677
        %v1297 = verf.f32.pop %v1296
        %v1298 = vadd.f32 %v1297, 1.0
        %v1299 = vmul.f32 %v1295, %v1298
        %v1300 = vpack.c.bf16 %v1299, %v1299
        %v1301 = vld [vmem:[#allocation19] sm:$0xf]
        %v1302 = vld [vmem:[#allocation19 + $0x4] sm:$0xf]
        %v1303 = vld [vmem:[#allocation19 + $0x8] sm:$0xf]
        %v1304 = vld [vmem:[#allocation19 + $0xc] sm:$0xf]
        %v1305 = vld [vmem:[#allocation19 + $0x10] sm:$0xf]
        %v1306 = vld [vmem:[#allocation19 + $0x14] sm:$0xf]
        %v1307 = vld [vmem:[#allocation19 + $0x18] sm:$0xf]
        %v1308 = vld [vmem:[#allocation19 + $0x1c] sm:$0xf]
        %v1309 = vld [vmem:[#allocation20] sm:$0x1]
        %v1311 = vlaneseq
        %v1312 = vshrl.u32 %v1311, 7
        %v1313 = vsub.s32 0, %v1312
        %v1314 = vrot.slane %v1309, %v1313
        %v1324 = vunpack.c.l.b16 %v1301
        %v1325 = vunpack.c.l.b16 %v1302
        %v1326 = vunpack.c.l.b16 %v1303
        %v1327 = vunpack.c.l.b16 %v1304
        %v1328 = vunpack.c.l.b16 %v1305
        %v1329 = vunpack.c.l.b16 %v1306
        %v1330 = vunpack.c.l.b16 %v1307
        %v1331 = vunpack.c.l.b16 %v1308
        %v1332 = vpack.c.b16 %v1325, %v1324
        %v1333 = vpack.c.b16 %v1327, %v1326
        %v1334 = vpack.c.b16 %v1329, %v1328
        %v1335 = vpack.c.b16 %v1331, %v1330
        %vm1340 = vcmask 523264
        %v1342 = vsel %vm1340, %v1300, 0
        %1344 = vmatprep.subr.bf16.mxu0 0
        %1345 = vmatpush1.bf16.msra.mxu0 %v1332
        %1346 = vmatprep.subr.bf16.mxu0 0
        %1347 = vmatpush1.bf16.msra.mxu0 %v1333
        %1348 = vmatprep.subr.bf16.mxu0 0
        %1349 = vmatpush1.bf16.msra.mxu0 %v1334
        %1350 = vmatprep.subr.bf16.mxu0 0
        %1351 = vmatpush1.bf16.msra.mxu0 %v1335
        %1352 = vmatprep.subr.bf16.mxu0 0
        %1353 = vmatpush1.bf16.msra.mxu0 0
        %1354 = vmatprep.subr.bf16.mxu0 0
        %1355 = vmatpush1.bf16.msra.mxu0 0
        %1356 = vmatprep.subr.bf16.mxu0 0
        %1357 = vmatpush1.bf16.msra.mxu0 0
        %1358 = vmatprep.subr.bf16.mxu0 0
        %1359 = vmatpush1.bf16.msra.mxu0 0
        %1360 = vmatprep.subr.bf16.mxu0 0
        %1361 = vmatpush1.bf16.msra.mxu0 0
        %1362 = vmatprep.subr.bf16.mxu0 0
        %1363 = vmatpush1.bf16.msra.mxu0 0
        %1364 = vmatprep.subr.bf16.mxu0 0
        %1365 = vmatpush1.bf16.msra.mxu0 0
        %1366 = vmatprep.subr.bf16.mxu0 0
        %1367 = vmatpush1.bf16.msra.mxu0 0
        %1368 = vmatprep.subr.bf16.mxu0 0
        %1369 = vmatpush1.bf16.msra.mxu0 0
        %1370 = vmatprep.subr.bf16.mxu0 0
        %1371 = vmatpush1.bf16.msra.mxu0 0
        %1372 = vmatprep.subr.bf16.mxu0 0
        %1373 = vmatpush1.bf16.msra.mxu0 0
        %1374 = vmatprep.subr.bf16.mxu0 0
        %1375 = vmatpush1.bf16.msra.mxu0 0
        %1376 = vmatprep.mubr.bf16.mxu0 0
        %1377 = vmatmul.mubr.bf16.gmra.mrb[0].mxu0 %v1342
        %v1378 = vpop.f32.mrb[0].mxu0
        %v1379 = vadd.f32 %v1314, %v1378
        %v1380 = vpop.f32.mrb[0].mxu0
        %v1381 = vpop.f32.mrb[0].mxu0
        %v1382 = vpop.f32.mrb[0].mxu0
        %1383 = vdwg.mxu0
        %v1384 = vadd.f32 %v1198, %v1379
        %1385 = vst.msk [vmem:[%s574] sm:$0xff] %vm579, %v1384
        %s1386 = sand.u32 %s300, 1
        %s1387 = scalar_lea.sflag [#allocation4], %s1386
        %s1388 = sand.u32 %s300, 1
        %s1389 = smul.addr %s1388, 8
        %s1390 = scalar_lea.vmem [#allocation22], %s1389
        // Predicated region
        $region117: #{tpu_custom_call.1} parent=67 // pred_check
          %p1391 = pneg %p310
        $region118: #{tpu_custom_call.1} parent=67 // pred_check_branch
          %1393 = sbr.rel (%p1391) target = $region120
        $region119: #{tpu_custom_call.1} parent=67 // pred_region
          %s1395 = ssub.s32 128, 128
          %1396 = vsyncadd %s1387, %s1395
          %s1397 = smul.addr %s35, 128
          %s1398 = scalar_lea.hbm %s12, %s1397
          %s1400 = sshll.u32 %s1390, 4
          %s1401 = int_to_ptr.vmem [resolvable:$true] %s1400
          %1403 = dma.vmem_to_hbm [thread:$0]  %s1401, 128, %s1398, %s1387
        $region120: #{tpu_custom_call.1} parent=67 // pred_fallthru
          _
      $region68: #{tpu_custom_call.1} parent=5 // pred_fallthru
        _
      %p1404 = scmp.le.s32.totalorder 2, %s30
      // Predicated region
      $region121: #{tpu_custom_call.1} parent=5 // pred_check
        %p1405 = pneg %p1404
      $region122: #{tpu_custom_call.1} parent=5 // pred_check_branch
        %1407 = sbr.rel (%p1405) target = $region124
      $region123: #{tpu_custom_call.1} parent=5 // pred_region
        %s1408 = ssub.s32 %s30, 2
        // Predicated region
        $region125: #{tpu_custom_call.1} parent=123 // pred_check
          %p1409 = pneg %p316
        $region126: #{tpu_custom_call.1} parent=123 // pred_check_branch
          %1411 = sbr.rel (%p1409) target = $region128
        $region127: #{tpu_custom_call.1} parent=123 // pred_region
          %s1412 = sand.u32 %s301, 1
          %s1413 = scalar_lea.sflag [#allocation4], %s1412
          %s1414 = sand.u32 %s301, 1
          %s1415 = smul.addr %s1414, 8
          %s1416 = scalar_lea.vmem [#allocation22], %s1415
          %1417 = dma.done %s1413, 128
        $region128: #{tpu_custom_call.1} parent=123 // pred_fallthru
          _
      $region124: #{tpu_custom_call.1} parent=5 // pred_fallthru
        _
    $region6: #{tpu_custom_call.1} parent=1 // loop_footer
      %s34 = sadd.s32 1, %s30
    $region7: #{tpu_custom_call.1} parent=1 // loop_footer_branch
      %29 = sbr.rel target = $region3
    $region8: #{tpu_custom_call.1} parent=1 // loop_exit
      _
    %1418 = vsyncpa [#allocation3], 1
    %s1419 = scalar_lea.sflag [#allocation3], 1
    %1420 = vsyncpa %s1419, 1
    %1421 = vsyncpa [#allocation6], 1
    %1422 = vsyncpa [#allocation9], 1
    %1423 = vsyncpa [#allocation12], 1
    %1424 = vsyncpa [#allocation15], 1
    %1425 = vsyncpa [#allocation18], 1
    %1426 = vsyncpa [#allocation21], 1
    %1427 = vsyncpa [#allocation4], 1
    %s1428 = scalar_lea.sflag [#allocation4], 1
    %1429 = vsyncpa %s1428, 1

</llo_original>
